<compile_context>
chip_gen: v7x
topology: tpu7x:2x2x1
jax: 0.10.0
libtpu: 0.0.40
codegen_flags: <defaults>
</compile_context>

<pallas_src>
import math
from functools import partial

import jax
import jax.numpy as jnp
from jax.experimental import pallas as pl
from jax.experimental.pallas import tpu as pltpu


def _h_swish(x):
    return x * (jnp.clip(x + 3.0, 0.0, 6.0) * (1.0 / 6.0))


# ----------------------------------------------------------------------------- kernel
def block_with_cnn_kernel(x_ref, ln_g_ref, ln_b_ref, wqkv_t_ref, wproj_t_ref, bproj_ref,
                          w1t_ref, s1_ref, sh1_ref, wdw_ref, s2_ref, sh2_ref,
                          f1wt_ref, f1b_ref, f2wt_ref, f2b_ref,
                          w3t_ref, s3_ref, sh3_ref,
                          o_ref, *, num_heads, scale, P):
    x = x_ref[0]                                     # (N, C) fp32
    N, C = x.shape
    hd = C // num_heads
    HD = w1t_ref.shape[1]
    HW = P * P

    # ---------------- LayerNorm(eps=1e-6) ----------------
    mu = jnp.mean(x, axis=-1, keepdims=True)
    xc = x - mu
    var = jnp.mean(xc * xc, axis=-1, keepdims=True)
    xn = xc * jax.lax.rsqrt(var + 1e-6) * ln_g_ref[0] + ln_b_ref[0]

    # ---------------- attention: one lane-dense qkv matmul, heads in-register ----------------
    qkv = jnp.dot(xn, wqkv_t_ref[...], preferred_element_type=jnp.float32)   # (N, 3C)
    attn_proj = jnp.zeros((N, C), jnp.float32)
    for h in range(num_heads):
        lo, hi = h * hd, (h + 1) * hd
        q = qkv[:, lo:hi]                            # (N, hd)
        k = qkv[:, C + lo:C + hi]
        v = qkv[:, 2 * C + lo:2 * C + hi]
        s = jnp.dot(q, k.T, preferred_element_type=jnp.float32) * scale      # (N, N)
        s = s - jnp.max(s, axis=-1, keepdims=True)
        e = jnp.exp(s)
        p_attn = e * pl.reciprocal(jnp.sum(e, axis=-1, keepdims=True), approx=True)
        o_h = jnp.dot(p_attn, v, preferred_element_type=jnp.float32)         # (N, hd)
        # head block of the output projection == concat-heads @ wproj.T
        attn_proj = attn_proj + jnp.dot(o_h, wproj_t_ref[lo:hi, :],
                                        preferred_element_type=jnp.float32)
    xa = attn_proj + bproj_ref[0] + x                # (N, C)  attention out + residual

    # ---------------- LocalityFeedForward on the P*P patch tokens (channels-last) ----------------
    tok = xa[1:, :]                                  # (HW, C)

    # 1x1 conv C->HD + BN + h_swish
    y = jnp.dot(tok, w1t_ref[...], preferred_element_type=jnp.float32)
    y = _h_swish(y * s1_ref[0] + sh1_ref[0])         # (HW, HD)

    # depthwise 3x3 (stride 1, zero pad 1): zero-shifted register copies, no scratch
    ys = y.reshape(P, P, HD)
    wdw = wdw_ref[...]                               # (9, HD), row = di*3+dj
    zrow = jnp.zeros((1, P, HD), jnp.float32)
    zcol = jnp.zeros((P, 1, HD), jnp.float32)
    acc = jnp.zeros((P, P, HD), jnp.float32)
    for oi in (-1, 0, 1):
        if oi == -1:
            t_r = jnp.concatenate([zrow, ys[:-1]], axis=0)      # t_r[i] = ys[i-1]
        elif oi == 1:
            t_r = jnp.concatenate([ys[1:], zrow], axis=0)       # t_r[i] = ys[i+1]
        else:
            t_r = ys
        for oj in (-1, 0, 1):
            if oj == -1:
                t = jnp.concatenate([zcol, t_r[:, :-1]], axis=1)
            elif oj == 1:
                t = jnp.concatenate([t_r[:, 1:], zcol], axis=1)
            else:
                t = t_r
            acc = acc + t * wdw[(oi + 1) * 3 + (oj + 1)]
    y = _h_swish(acc * s2_ref[0] + sh2_ref[0]).reshape(HW, HD)

    # SE module: global avg-pool -> fc1 -> ReLU -> fc2 -> h_sigmoid -> scale
    pooled = jnp.mean(y, axis=0, keepdims=True)      # (1, HD)
    se = jnp.dot(pooled, f1wt_ref[...], preferred_element_type=jnp.float32) + f1b_ref[0]
    se = jnp.maximum(se, 0.0)
    se = jnp.dot(se, f2wt_ref[...], preferred_element_type=jnp.float32) + f2b_ref[0]
    se = jnp.clip(se + 3.0, 0.0, 6.0) * (1.0 / 6.0)
    y = y * se

    # 1x1 conv HD->C + BN + residual with the patch tokens
    y = jnp.dot(y, w3t_ref[...], preferred_element_type=jnp.float32)
    y = y * s3_ref[0] + sh3_ref[0] + tok             # (HW, C)

    # cls token (row 0) passes straight through the attention result
    o_ref[0, 0:1, :] = xa[0:1, :].astype(o_ref.dtype)
    o_ref[0, 1:, :] = y.astype(o_ref.dtype)


# ----------------------------------------------------------------------------- wrappers
def prepare_params(p):
    """One-time host-side packing: hoists all transposes/reshapes out of the forward."""
    C = p['wproj'].shape[0]
    HD = p['w1'].shape[0]
    CR = p['f1w'].shape[0]
    return dict(
        ln_g=p['ln_g'].reshape(1, C), ln_b=p['ln_b'].reshape(1, C),
        wqkv_t=jnp.asarray(p['wqkv'].T),             # (C, 3C)
        wproj_t=jnp.asarray(p['wproj'].T),           # (C, C)
        bproj=p['bproj'].reshape(1, C),
        w1_t=jnp.asarray(p['w1'].T),                 # (C, HD)
        s1=p['s1'].reshape(1, HD), sh1=p['sh1'].reshape(1, HD),
        wdw=p['wdw'],                                # (9, HD)
        s2=p['s2'].reshape(1, HD), sh2=p['sh2'].reshape(1, HD),
        f1w_t=jnp.asarray(p['f1w'].T), f1b=p['f1b'].reshape(1, CR),
        f2w_t=jnp.asarray(p['f2w'].T), f2b=p['f2b'].reshape(1, HD),
        w3_t=jnp.asarray(p['w3'].T),                 # (HD, C)
        s3=p['s3'].reshape(1, C), sh3=p['sh3'].reshape(1, C),
    )


def block_with_cnn(x, pp, num_heads, P):
    B, N, C = x.shape
    hd = C // num_heads
    scale = hd ** (-0.5)

    def full(a):                                     # whole-array block, grid-invariant
        nd = a.ndim
        return pl.BlockSpec(a.shape, lambda b, _n=nd: (0,) * _n)

    weights = (pp['ln_g'], pp['ln_b'], pp['wqkv_t'], pp['wproj_t'], pp['bproj'],
               pp['w1_t'], pp['s1'], pp['sh1'], pp['wdw'], pp['s2'], pp['sh2'],
               pp['f1w_t'], pp['f1b'], pp['f2w_t'], pp['f2b'],
               pp['w3_t'], pp['s3'], pp['sh3'])

    # NOTE: at larger B, raise the batch block (e.g. (4, N, C)) so each grid step
    # amortizes the ~0.35us per-step overhead; working set is far below VMEM limits.
    return pl.pallas_call(
        partial(block_with_cnn_kernel, num_heads=num_heads, scale=scale, P=P),
        out_shape=jax.ShapeDtypeStruct((B, N, C), x.dtype),
        grid=(B,),
        in_specs=[pl.BlockSpec((1, N, C), lambda b: (b, 0, 0))]
                 + [full(w) for w in weights],
        out_specs=pl.BlockSpec((1, N, C), lambda b: (b, 0, 0)),
        compiler_params=pltpu.CompilerParams(
            dimension_semantics=("parallel",)),      # shard batch across v7x's 2 TCs
    )(x, *weights)


# ----------------------------------------------------------------------------- pure-JAX reference
def reference_forward(x, p, num_heads, P):
    B, N, C = x.shape
    hd = C // num_heads
    scale = hd ** (-0.5)
    mu = x.mean(-1, keepdims=True)
    var = ((x - mu) ** 2).mean(-1, keepdims=True)
    xn = (x - mu) / jnp.sqrt(var + 1e-6) * p['ln_g'] + p['ln_b']
    qkv = xn @ p['wqkv'].T
    qkv = qkv.reshape(B, N, 3, num_heads, hd).transpose(2, 0, 3, 1, 4)
    q, k, v = qkv[0], qkv[1], qkv[2]
    attn = jax.nn.softmax((q @ jnp.swapaxes(k, -2, -1)) * scale, axis=-1)
    a = (attn @ v).transpose(0, 2, 1, 3).reshape(B, N, C)
    x = a @ p['wproj'].T + p['bproj'] + x
    cls_tok, tok = x[:, :1, :], x[:, 1:, :]
    HD = p['w1'].shape[0]
    y = tok @ p['w1'].T
    y = _h_swish(y * p['s1'] + p['sh1'])
    ys = y.reshape(B, P, P, HD)
    yp = jnp.pad(ys, ((0, 0), (1, 1), (1, 1), (0, 0)))
    acc = jnp.zeros_like(ys)
    for di in range(3):
        for dj in range(3):
            acc = acc + yp[:, di:di + P, dj:dj + P, :] * p['wdw'][di * 3 + dj]
    y = _h_swish(acc * p['s2'] + p['sh2']).reshape(B, P * P, HD)
    pooled = y.mean(axis=1)
    se = jnp.maximum(pooled @ p['f1w'].T + p['f1b'], 0.0)
    se = se @ p['f2w'].T + p['f2b']
    se = jnp.clip(se + 3.0, 0.0, 6.0) / 6.0
    y = y * se[:, None, :]
    y = (y @ p['w3'].T) * p['s3'] + p['sh3']
    y = y + tok
    return jnp.concatenate([cls_tok, y], axis=1)


# ----------------------------------------------------------------------------- main
if __name__ == "__main__":
    B, C, NUM_HEADS, P = 2, 32, 4, 8
    N = 1 + P * P
    HD = int(C * 4.0)                                # hidden_dim of LocalityFeedForward
    CR = HD // 4                                     # SE reduction=4

    key = jax.random.PRNGKey(0)
    ks = jax.random.split(key, 24)
    nrm = lambda k, shape, s=1.0: (s * jax.random.normal(k, shape)).astype(jnp.float32)

    x = nrm(ks[0], (B, N, C), 0.5)

    # fold BatchNorm (inference: running_mean=0, running_var=1) into scale/shift
    def bn(kg, kb, n):
        g = 1.0 + nrm(kg, (n,), 0.05)
        b = nrm(kb, (n,), 0.05)
        return g / jnp.sqrt(1.0 + 1e-5), b

    s1, sh1 = bn(ks[9], ks[10], HD)
    s2, sh2 = bn(ks[11], ks[12], HD)
    s3, sh3 = bn(ks[13], ks[14], C)

    params = {
        'ln_g': 1.0 + nrm(ks[1], (C,), 0.02),
        'ln_b': nrm(ks[2], (C,), 0.02),
        'wqkv': nrm(ks[3], (3 * C, C), 1.0 / math.sqrt(C)),
        'wproj': nrm(ks[4], (C, C), 1.0 / math.sqrt(C)),
        'bproj': nrm(ks[5], (C,), 0.01),
        'w1': nrm(ks[6], (HD, C), 1.0 / math.sqrt(C)),       # 1x1 conv C->HD
        's1': s1, 'sh1': sh1,
        'wdw': nrm(ks[7], (9, HD), 1.0 / 3.0),               # depthwise 3x3 (tap, channel)
        's2': s2, 'sh2': sh2,
        'f1w': nrm(ks[15], (CR, HD), 1.0 / math.sqrt(HD)),   # SE fc1
        'f1b': nrm(ks[16], (CR,), 0.01),
        'f2w': nrm(ks[17], (HD, CR), 1.0 / math.sqrt(CR)),   # SE fc2
        'f2b': nrm(ks[18], (HD,), 0.01),
        'w3': nrm(ks[8], (C, HD), 1.0 / math.sqrt(HD)),      # 1x1 conv HD->C
        's3': s3, 'sh3': sh3,
    }

    pp = prepare_params(params)                      # one-time weight packing
    fwd = jax.jit(partial(block_with_cnn, num_heads=NUM_HEADS, P=P))

    out = jax.block_until_ready(fwd(x, pp))

    ref = reference_forward(x, params, NUM_HEADS, P)
    err = float(jnp.max(jnp.abs(out - ref)))
    # Tolerance covers the XLA default (reduced-precision) f32 matmul path used by the
    # reference vs the MXU kernel path; see note at the top of the file.
    if not (out.shape == (B, N, C) and err < 5e-2):
        raise SystemExit(f"mismatch: shape={out.shape} max_abs_err={err}")
    print("KERNEL_OK")
</pallas_src>

<mosaic_0001>
module attributes {stable_mosaic.version = 11 : i64} {
  func.func @block_with_cnn_kernel(%arg0: i32, %arg1: memref<1x65x32xf32, #tpu.memory_space<vmem>>, %arg2: memref<1x32xf32, #tpu.memory_space<vmem>>, %arg3: memref<1x32xf32, #tpu.memory_space<vmem>>, %arg4: memref<32x96xf32, #tpu.memory_space<vmem>>, %arg5: memref<32x32xf32, #tpu.memory_space<vmem>>, %arg6: memref<1x32xf32, #tpu.memory_space<vmem>>, %arg7: memref<32x128xf32, #tpu.memory_space<vmem>>, %arg8: memref<1x128xf32, #tpu.memory_space<vmem>>, %arg9: memref<1x128xf32, #tpu.memory_space<vmem>>, %arg10: memref<9x128xf32, #tpu.memory_space<vmem>>, %arg11: memref<1x128xf32, #tpu.memory_space<vmem>>, %arg12: memref<1x128xf32, #tpu.memory_space<vmem>>, %arg13: memref<128x32xf32, #tpu.memory_space<vmem>>, %arg14: memref<1x32xf32, #tpu.memory_space<vmem>>, %arg15: memref<32x128xf32, #tpu.memory_space<vmem>>, %arg16: memref<1x128xf32, #tpu.memory_space<vmem>>, %arg17: memref<128x32xf32, #tpu.memory_space<vmem>>, %arg18: memref<1x32xf32, #tpu.memory_space<vmem>>, %arg19: memref<1x32xf32, #tpu.memory_space<vmem>>, %arg20: memref<1x65x32xf32, #tpu.memory_space<vmem>>) attributes {dimension_semantics = [#tpu.dimension_semantics<parallel>], iteration_bounds = array<i64: 2>, scalar_prefetch = 0 : i64, scratch_operands = 0 : i64, tpu.core_type = #tpu.core_type<tc>, window_params = [{transform_indices = @transform_0, window_bounds = array<i64: 1, 65, 32>}, {pipeline_mode = #tpu.pipeline_mode<synchronous>, transform_indices = @transform_1, window_bounds = array<i64: 1, 32>}, {pipeline_mode = #tpu.pipeline_mode<synchronous>, transform_indices = @transform_2, window_bounds = array<i64: 1, 32>}, {pipeline_mode = #tpu.pipeline_mode<synchronous>, transform_indices = @transform_3, window_bounds = array<i64: 32, 96>}, {pipeline_mode = #tpu.pipeline_mode<synchronous>, transform_indices = @transform_4, window_bounds = array<i64: 32, 32>}, {pipeline_mode = #tpu.pipeline_mode<synchronous>, transform_indices = @transform_5, window_bounds = array<i64: 1, 32>}, {pipeline_mode = #tpu.pipeline_mode<synchronous>, transform_indices = @transform_6, window_bounds = array<i64: 32, 128>}, {pipeline_mode = #tpu.pipeline_mode<synchronous>, transform_indices = @transform_7, window_bounds = array<i64: 1, 128>}, {pipeline_mode = #tpu.pipeline_mode<synchronous>, transform_indices = @transform_8, window_bounds = array<i64: 1, 128>}, {pipeline_mode = #tpu.pipeline_mode<synchronous>, transform_indices = @transform_9, window_bounds = array<i64: 9, 128>}, {pipeline_mode = #tpu.pipeline_mode<synchronous>, transform_indices = @transform_10, window_bounds = array<i64: 1, 128>}, {pipeline_mode = #tpu.pipeline_mode<synchronous>, transform_indices = @transform_11, window_bounds = array<i64: 1, 128>}, {pipeline_mode = #tpu.pipeline_mode<synchronous>, transform_indices = @transform_12, window_bounds = array<i64: 128, 32>}, {pipeline_mode = #tpu.pipeline_mode<synchronous>, transform_indices = @transform_13, window_bounds = array<i64: 1, 32>}, {pipeline_mode = #tpu.pipeline_mode<synchronous>, transform_indices = @transform_14, window_bounds = array<i64: 32, 128>}, {pipeline_mode = #tpu.pipeline_mode<synchronous>, transform_indices = @transform_15, window_bounds = array<i64: 1, 128>}, {pipeline_mode = #tpu.pipeline_mode<synchronous>, transform_indices = @transform_16, window_bounds = array<i64: 128, 32>}, {pipeline_mode = #tpu.pipeline_mode<synchronous>, transform_indices = @transform_17, window_bounds = array<i64: 1, 32>}, {pipeline_mode = #tpu.pipeline_mode<synchronous>, transform_indices = @transform_18, window_bounds = array<i64: 1, 32>}, {transform_indices = @transform_19, window_bounds = array<i64: 1, 65, 32>}]} {
    %c0 = arith.constant 0 : index
    %c0_0 = arith.constant 0 : index
    %c0_1 = arith.constant 0 : index
    %0 = vector.load %arg1[%c0, %c0_0, %c0_1] : memref<1x65x32xf32, #tpu.memory_space<vmem>>, vector<1x65x32xf32>
    %1 = vector.shape_cast %0 : vector<1x65x32xf32> to vector<65x32xf32>
    %cst = arith.constant dense<0.000000e+00> : vector<65xf32>
    %2 = vector.multi_reduction <add>, %1, %cst [1] : vector<65x32xf32> to vector<65xf32>
    %3 = vector.shape_cast %2 : vector<65xf32> to vector<65x1xf32>
    %cst_2 = arith.constant 3.200000e+01 : f32
    %4 = vector.broadcast %cst_2 : f32 to vector<65x1xf32>
    %5 = arith.divf %3, %4 : vector<65x1xf32>
    %6 = vector.broadcast %5 : vector<65x1xf32> to vector<65x32xf32>
    %7 = arith.subf %1, %6 : vector<65x32xf32>
    %8 = arith.mulf %7, %7 : vector<65x32xf32>
    %cst_3 = arith.constant dense<0.000000e+00> : vector<65xf32>
    %9 = vector.multi_reduction <add>, %8, %cst_3 [1] : vector<65x32xf32> to vector<65xf32>
    %10 = vector.shape_cast %9 : vector<65xf32> to vector<65x1xf32>
    %cst_4 = arith.constant 3.200000e+01 : f32
    %11 = vector.broadcast %cst_4 : f32 to vector<65x1xf32>
    %12 = arith.divf %10, %11 : vector<65x1xf32>
    %cst_5 = arith.constant 9.99999997E-7 : f32
    %13 = vector.broadcast %cst_5 : f32 to vector<65x1xf32>
    %14 = arith.addf %12, %13 : vector<65x1xf32>
    %15 = math.rsqrt %14 : vector<65x1xf32>
    %16 = vector.broadcast %15 : vector<65x1xf32> to vector<65x32xf32>
    %17 = arith.mulf %7, %16 : vector<65x32xf32>
    %c0_6 = arith.constant 0 : index
    %c0_7 = arith.constant 0 : index
    %18 = vector.load %arg2[%c0_6, %c0_7] : memref<1x32xf32, #tpu.memory_space<vmem>>, vector<1x32xf32>
    %19 = vector.shape_cast %18 : vector<1x32xf32> to vector<32xf32>
    %20 = vector.shape_cast %19 : vector<32xf32> to vector<1x32xf32>
    %21 = vector.broadcast %20 : vector<1x32xf32> to vector<65x32xf32>
    %22 = arith.mulf %17, %21 : vector<65x32xf32>
    %c0_8 = arith.constant 0 : index
    %c0_9 = arith.constant 0 : index
    %23 = vector.load %arg3[%c0_8, %c0_9] : memref<1x32xf32, #tpu.memory_space<vmem>>, vector<1x32xf32>
    %24 = vector.shape_cast %23 : vector<1x32xf32> to vector<32xf32>
    %25 = vector.shape_cast %24 : vector<32xf32> to vector<1x32xf32>
    %26 = vector.broadcast %25 : vector<1x32xf32> to vector<65x32xf32>
    %27 = arith.addf %22, %26 : vector<65x32xf32>
    %c0_10 = arith.constant 0 : index
    %c0_11 = arith.constant 0 : index
    %28 = vector.load %arg4[%c0_10, %c0_11] : memref<32x96xf32, #tpu.memory_space<vmem>>, vector<32x96xf32>
    %cst_12 = arith.constant dense<0.000000e+00> : vector<65x96xf32>
    %29 = tpu.matmul %27, %28, %cst_12 {dimension_numbers = #tpu.dot_dimension_numbers<[1], [0], [0], [1], [0, 0, 1, 1], [], []>} : vector<65x32xf32>, vector<32x96xf32>, vector<65x96xf32> -> vector<65x96xf32>
    %cst_13 = arith.constant 0.000000e+00 : f32
    %30 = vector.broadcast %cst_13 : f32 to vector<65x32xf32>
    %31 = vector.extract_strided_slice %29 {offsets = [0, 0], sizes = [65, 8], strides = [1, 1]} : vector<65x96xf32> to vector<65x8xf32>
    %32 = vector.extract_strided_slice %29 {offsets = [0, 32], sizes = [65, 8], strides = [1, 1]} : vector<65x96xf32> to vector<65x8xf32>
    %33 = vector.extract_strided_slice %29 {offsets = [0, 64], sizes = [65, 8], strides = [1, 1]} : vector<65x96xf32> to vector<65x8xf32>
    %34 = tpu.transpose %32, [1, 0] : vector<65x8xf32> -> vector<8x65xf32>
    %cst_14 = arith.constant dense<0.000000e+00> : vector<65x65xf32>
    %35 = tpu.matmul %31, %34, %cst_14 {dimension_numbers = #tpu.dot_dimension_numbers<[1], [0], [0], [1], [0, 0, 1, 1], [], []>} : vector<65x8xf32>, vector<8x65xf32>, vector<65x65xf32> -> vector<65x65xf32>
    %cst_15 = arith.constant 0.353553385 : f32
    %36 = vector.broadcast %cst_15 : f32 to vector<65x65xf32>
    %37 = arith.mulf %35, %36 : vector<65x65xf32>
    %cst_16 = arith.constant dense<0xFF800000> : vector<65xf32>
    %38 = vector.multi_reduction <maximumf>, %37, %cst_16 [1] : vector<65x65xf32> to vector<65xf32>
    %39 = vector.shape_cast %38 : vector<65xf32> to vector<65x1xf32>
    %40 = vector.broadcast %39 : vector<65x1xf32> to vector<65x65xf32>
    %41 = arith.subf %37, %40 : vector<65x65xf32>
    %42 = math.exp %41 : vector<65x65xf32>
    %cst_17 = arith.constant dense<0.000000e+00> : vector<65xf32>
    %43 = vector.multi_reduction <add>, %42, %cst_17 [1] : vector<65x65xf32> to vector<65xf32>
    %44 = vector.shape_cast %43 : vector<65xf32> to vector<65x1xf32>
    %45 = tpu.reciprocal %44 {approx = true} : vector<65x1xf32> -> vector<65x1xf32>
    %46 = vector.broadcast %45 : vector<65x1xf32> to vector<65x65xf32>
    %47 = arith.mulf %42, %46 : vector<65x65xf32>
    %cst_18 = arith.constant dense<0.000000e+00> : vector<65x8xf32>
    %48 = tpu.matmul %47, %33, %cst_18 {dimension_numbers = #tpu.dot_dimension_numbers<[1], [0], [0], [1], [0, 0, 1, 1], [], []>} : vector<65x65xf32>, vector<65x8xf32>, vector<65x8xf32> -> vector<65x8xf32>
    %c0_19 = arith.constant 0 : index
    %c0_20 = arith.constant 0 : index
    %49 = vector.load %arg5[%c0_19, %c0_20] : memref<32x32xf32, #tpu.memory_space<vmem>>, vector<8x32xf32>
    %cst_21 = arith.constant dense<0.000000e+00> : vector<65x32xf32>
    %50 = tpu.matmul %48, %49, %cst_21 {dimension_numbers = #tpu.dot_dimension_numbers<[1], [0], [0], [1], [0, 0, 1, 1], [], []>} : vector<65x8xf32>, vector<8x32xf32>, vector<65x32xf32> -> vector<65x32xf32>
    %51 = arith.addf %30, %50 : vector<65x32xf32>
    %52 = vector.extract_strided_slice %29 {offsets = [0, 8], sizes = [65, 8], strides = [1, 1]} : vector<65x96xf32> to vector<65x8xf32>
    %53 = vector.extract_strided_slice %29 {offsets = [0, 40], sizes = [65, 8], strides = [1, 1]} : vector<65x96xf32> to vector<65x8xf32>
    %54 = vector.extract_strided_slice %29 {offsets = [0, 72], sizes = [65, 8], strides = [1, 1]} : vector<65x96xf32> to vector<65x8xf32>
    %55 = tpu.transpose %53, [1, 0] : vector<65x8xf32> -> vector<8x65xf32>
    %cst_22 = arith.constant dense<0.000000e+00> : vector<65x65xf32>
    %56 = tpu.matmul %52, %55, %cst_22 {dimension_numbers = #tpu.dot_dimension_numbers<[1], [0], [0], [1], [0, 0, 1, 1], [], []>} : vector<65x8xf32>, vector<8x65xf32>, vector<65x65xf32> -> vector<65x65xf32>
    %cst_23 = arith.constant 0.353553385 : f32
    %57 = vector.broadcast %cst_23 : f32 to vector<65x65xf32>
    %58 = arith.mulf %56, %57 : vector<65x65xf32>
    %cst_24 = arith.constant dense<0xFF800000> : vector<65xf32>
    %59 = vector.multi_reduction <maximumf>, %58, %cst_24 [1] : vector<65x65xf32> to vector<65xf32>
    %60 = vector.shape_cast %59 : vector<65xf32> to vector<65x1xf32>
    %61 = vector.broadcast %60 : vector<65x1xf32> to vector<65x65xf32>
    %62 = arith.subf %58, %61 : vector<65x65xf32>
    %63 = math.exp %62 : vector<65x65xf32>
    %cst_25 = arith.constant dense<0.000000e+00> : vector<65xf32>
    %64 = vector.multi_reduction <add>, %63, %cst_25 [1] : vector<65x65xf32> to vector<65xf32>
    %65 = vector.shape_cast %64 : vector<65xf32> to vector<65x1xf32>
    %66 = tpu.reciprocal %65 {approx = true} : vector<65x1xf32> -> vector<65x1xf32>
    %67 = vector.broadcast %66 : vector<65x1xf32> to vector<65x65xf32>
    %68 = arith.mulf %63, %67 : vector<65x65xf32>
    %cst_26 = arith.constant dense<0.000000e+00> : vector<65x8xf32>
    %69 = tpu.matmul %68, %54, %cst_26 {dimension_numbers = #tpu.dot_dimension_numbers<[1], [0], [0], [1], [0, 0, 1, 1], [], []>} : vector<65x65xf32>, vector<65x8xf32>, vector<65x8xf32> -> vector<65x8xf32>
    %c8 = arith.constant 8 : index
    %c0_27 = arith.constant 0 : index
    %70 = vector.load %arg5[%c8, %c0_27] : memref<32x32xf32, #tpu.memory_space<vmem>>, vector<8x32xf32>
    %cst_28 = arith.constant dense<0.000000e+00> : vector<65x32xf32>
    %71 = tpu.matmul %69, %70, %cst_28 {dimension_numbers = #tpu.dot_dimension_numbers<[1], [0], [0], [1], [0, 0, 1, 1], [], []>} : vector<65x8xf32>, vector<8x32xf32>, vector<65x32xf32> -> vector<65x32xf32>
    %72 = arith.addf %51, %71 : vector<65x32xf32>
    %73 = vector.extract_strided_slice %29 {offsets = [0, 16], sizes = [65, 8], strides = [1, 1]} : vector<65x96xf32> to vector<65x8xf32>
    %74 = vector.extract_strided_slice %29 {offsets = [0, 48], sizes = [65, 8], strides = [1, 1]} : vector<65x96xf32> to vector<65x8xf32>
    %75 = vector.extract_strided_slice %29 {offsets = [0, 80], sizes = [65, 8], strides = [1, 1]} : vector<65x96xf32> to vector<65x8xf32>
    %76 = tpu.transpose %74, [1, 0] : vector<65x8xf32> -> vector<8x65xf32>
    %cst_29 = arith.constant dense<0.000000e+00> : vector<65x65xf32>
    %77 = tpu.matmul %73, %76, %cst_29 {dimension_numbers = #tpu.dot_dimension_numbers<[1], [0], [0], [1], [0, 0, 1, 1], [], []>} : vector<65x8xf32>, vector<8x65xf32>, vector<65x65xf32> -> vector<65x65xf32>
    %cst_30 = arith.constant 0.353553385 : f32
    %78 = vector.broadcast %cst_30 : f32 to vector<65x65xf32>
    %79 = arith.mulf %77, %78 : vector<65x65xf32>
    %cst_31 = arith.constant dense<0xFF800000> : vector<65xf32>
    %80 = vector.multi_reduction <maximumf>, %79, %cst_31 [1] : vector<65x65xf32> to vector<65xf32>
    %81 = vector.shape_cast %80 : vector<65xf32> to vector<65x1xf32>
    %82 = vector.broadcast %81 : vector<65x1xf32> to vector<65x65xf32>
    %83 = arith.subf %79, %82 : vector<65x65xf32>
    %84 = math.exp %83 : vector<65x65xf32>
    %cst_32 = arith.constant dense<0.000000e+00> : vector<65xf32>
    %85 = vector.multi_reduction <add>, %84, %cst_32 [1] : vector<65x65xf32> to vector<65xf32>
    %86 = vector.shape_cast %85 : vector<65xf32> to vector<65x1xf32>
    %87 = tpu.reciprocal %86 {approx = true} : vector<65x1xf32> -> vector<65x1xf32>
    %88 = vector.broadcast %87 : vector<65x1xf32> to vector<65x65xf32>
    %89 = arith.mulf %84, %88 : vector<65x65xf32>
    %cst_33 = arith.constant dense<0.000000e+00> : vector<65x8xf32>
    %90 = tpu.matmul %89, %75, %cst_33 {dimension_numbers = #tpu.dot_dimension_numbers<[1], [0], [0], [1], [0, 0, 1, 1], [], []>} : vector<65x65xf32>, vector<65x8xf32>, vector<65x8xf32> -> vector<65x8xf32>
    %c16 = arith.constant 16 : index
    %c0_34 = arith.constant 0 : index
    %91 = vector.load %arg5[%c16, %c0_34] : memref<32x32xf32, #tpu.memory_space<vmem>>, vector<8x32xf32>
    %cst_35 = arith.constant dense<0.000000e+00> : vector<65x32xf32>
    %92 = tpu.matmul %90, %91, %cst_35 {dimension_numbers = #tpu.dot_dimension_numbers<[1], [0], [0], [1], [0, 0, 1, 1], [], []>} : vector<65x8xf32>, vector<8x32xf32>, vector<65x32xf32> -> vector<65x32xf32>
    %93 = arith.addf %72, %92 : vector<65x32xf32>
    %94 = vector.extract_strided_slice %29 {offsets = [0, 24], sizes = [65, 8], strides = [1, 1]} : vector<65x96xf32> to vector<65x8xf32>
    %95 = vector.extract_strided_slice %29 {offsets = [0, 56], sizes = [65, 8], strides = [1, 1]} : vector<65x96xf32> to vector<65x8xf32>
    %96 = vector.extract_strided_slice %29 {offsets = [0, 88], sizes = [65, 8], strides = [1, 1]} : vector<65x96xf32> to vector<65x8xf32>
    %97 = tpu.transpose %95, [1, 0] : vector<65x8xf32> -> vector<8x65xf32>
    %cst_36 = arith.constant dense<0.000000e+00> : vector<65x65xf32>
    %98 = tpu.matmul %94, %97, %cst_36 {dimension_numbers = #tpu.dot_dimension_numbers<[1], [0], [0], [1], [0, 0, 1, 1], [], []>} : vector<65x8xf32>, vector<8x65xf32>, vector<65x65xf32> -> vector<65x65xf32>
    %cst_37 = arith.constant 0.353553385 : f32
    %99 = vector.broadcast %cst_37 : f32 to vector<65x65xf32>
    %100 = arith.mulf %98, %99 : vector<65x65xf32>
    %cst_38 = arith.constant dense<0xFF800000> : vector<65xf32>
    %101 = vector.multi_reduction <maximumf>, %100, %cst_38 [1] : vector<65x65xf32> to vector<65xf32>
    %102 = vector.shape_cast %101 : vector<65xf32> to vector<65x1xf32>
    %103 = vector.broadcast %102 : vector<65x1xf32> to vector<65x65xf32>
    %104 = arith.subf %100, %103 : vector<65x65xf32>
    %105 = math.exp %104 : vector<65x65xf32>
    %cst_39 = arith.constant dense<0.000000e+00> : vector<65xf32>
    %106 = vector.multi_reduction <add>, %105, %cst_39 [1] : vector<65x65xf32> to vector<65xf32>
    %107 = vector.shape_cast %106 : vector<65xf32> to vector<65x1xf32>
    %108 = tpu.reciprocal %107 {approx = true} : vector<65x1xf32> -> vector<65x1xf32>
    %109 = vector.broadcast %108 : vector<65x1xf32> to vector<65x65xf32>
    %110 = arith.mulf %105, %109 : vector<65x65xf32>
    %cst_40 = arith.constant dense<0.000000e+00> : vector<65x8xf32>
    %111 = tpu.matmul %110, %96, %cst_40 {dimension_numbers = #tpu.dot_dimension_numbers<[1], [0], [0], [1], [0, 0, 1, 1], [], []>} : vector<65x65xf32>, vector<65x8xf32>, vector<65x8xf32> -> vector<65x8xf32>
    %c24 = arith.constant 24 : index
    %c0_41 = arith.constant 0 : index
    %112 = vector.load %arg5[%c24, %c0_41] : memref<32x32xf32, #tpu.memory_space<vmem>>, vector<8x32xf32>
    %cst_42 = arith.constant dense<0.000000e+00> : vector<65x32xf32>
    %113 = tpu.matmul %111, %112, %cst_42 {dimension_numbers = #tpu.dot_dimension_numbers<[1], [0], [0], [1], [0, 0, 1, 1], [], []>} : vector<65x8xf32>, vector<8x32xf32>, vector<65x32xf32> -> vector<65x32xf32>
    %114 = arith.addf %93, %113 : vector<65x32xf32>
    %c0_43 = arith.constant 0 : index
    %c0_44 = arith.constant 0 : index
    %115 = vector.load %arg6[%c0_43, %c0_44] : memref<1x32xf32, #tpu.memory_space<vmem>>, vector<1x32xf32>
    %116 = vector.shape_cast %115 : vector<1x32xf32> to vector<32xf32>
    %117 = vector.shape_cast %116 : vector<32xf32> to vector<1x32xf32>
    %118 = vector.broadcast %117 : vector<1x32xf32> to vector<65x32xf32>
    %119 = arith.addf %114, %118 : vector<65x32xf32>
    %120 = arith.addf %119, %1 : vector<65x32xf32>
    %121 = vector.extract_strided_slice %120 {offsets = [1, 0], sizes = [64, 32], strides = [1, 1]} : vector<65x32xf32> to vector<64x32xf32>
    %c0_45 = arith.constant 0 : index
    %c0_46 = arith.constant 0 : index
    %122 = vector.load %arg7[%c0_45, %c0_46] : memref<32x128xf32, #tpu.memory_space<vmem>>, vector<32x128xf32>
    %cst_47 = arith.constant dense<0.000000e+00> : vector<64x128xf32>
    %123 = tpu.matmul %121, %122, %cst_47 {dimension_numbers = #tpu.dot_dimension_numbers<[1], [0], [0], [1], [0, 0, 1, 1], [], []>} : vector<64x32xf32>, vector<32x128xf32>, vector<64x128xf32> -> vector<64x128xf32>
    %c0_48 = arith.constant 0 : index
    %c0_49 = arith.constant 0 : index
    %124 = vector.load %arg8[%c0_48, %c0_49] : memref<1x128xf32, #tpu.memory_space<vmem>>, vector<1x128xf32>
    %125 = vector.shape_cast %124 : vector<1x128xf32> to vector<128xf32>
    %126 = vector.shape_cast %125 : vector<128xf32> to vector<1x128xf32>
    %127 = vector.broadcast %126 : vector<1x128xf32> to vector<64x128xf32>
    %128 = arith.mulf %123, %127 : vector<64x128xf32>
    %c0_50 = arith.constant 0 : index
    %c0_51 = arith.constant 0 : index
    %129 = vector.load %arg9[%c0_50, %c0_51] : memref<1x128xf32, #tpu.memory_space<vmem>>, vector<1x128xf32>
    %130 = vector.shape_cast %129 : vector<1x128xf32> to vector<128xf32>
    %131 = vector.shape_cast %130 : vector<128xf32> to vector<1x128xf32>
    %132 = vector.broadcast %131 : vector<1x128xf32> to vector<64x128xf32>
    %133 = arith.addf %128, %132 : vector<64x128xf32>
    %cst_52 = arith.constant 3.000000e+00 : f32
    %134 = vector.broadcast %cst_52 : f32 to vector<64x128xf32>
    %135 = arith.addf %133, %134 : vector<64x128xf32>
    %cst_53 = arith.constant 0.000000e+00 : f32
    %cst_54 = arith.constant 6.000000e+00 : f32
    %136 = vector.broadcast %cst_53 : f32 to vector<64x128xf32>
    %137 = arith.maximumf %136, %135 : vector<64x128xf32>
    %138 = vector.broadcast %cst_54 : f32 to vector<64x128xf32>
    %139 = arith.minimumf %138, %137 : vector<64x128xf32>
    %cst_55 = arith.constant 0.166666672 : f32
    %140 = vector.broadcast %cst_55 : f32 to vector<64x128xf32>
    %141 = arith.mulf %139, %140 : vector<64x128xf32>
    %142 = arith.mulf %133, %141 : vector<64x128xf32>
    %143 = vector.shape_cast %142 : vector<64x128xf32> to vector<8x8x128xf32>
    %c0_56 = arith.constant 0 : index
    %c0_57 = arith.constant 0 : index
    %144 = vector.load %arg10[%c0_56, %c0_57] : memref<9x128xf32, #tpu.memory_space<vmem>>, vector<9x128xf32>
    %cst_58 = arith.constant 0.000000e+00 : f32
    %145 = vector.broadcast %cst_58 : f32 to vector<1x8x128xf32>
    %cst_59 = arith.constant 0.000000e+00 : f32
    %146 = vector.broadcast %cst_59 : f32 to vector<8x1x128xf32>
    %cst_60 = arith.constant 0.000000e+00 : f32
    %147 = vector.broadcast %cst_60 : f32 to vector<8x8x128xf32>
    %148 = vector.extract_strided_slice %143 {offsets = [0, 0, 0], sizes = [7, 8, 128], strides = [1, 1, 1]} : vector<8x8x128xf32> to vector<7x8x128xf32>
    %149 = tpu.concatenate %145, %148 in 0 : vector<1x8x128xf32>, vector<7x8x128xf32> -> vector<8x8x128xf32>
    %150 = vector.extract_strided_slice %149 {offsets = [0, 0, 0], sizes = [8, 7, 128], strides = [1, 1, 1]} : vector<8x8x128xf32> to vector<8x7x128xf32>
    %151 = tpu.concatenate %146, %150 in 1 : vector<8x1x128xf32>, vector<8x7x128xf32> -> vector<8x8x128xf32>
    %152 = vector.extract_strided_slice %144 {offsets = [0, 0], sizes = [1, 128], strides = [1, 1]} : vector<9x128xf32> to vector<1x128xf32>
    %153 = vector.shape_cast %152 : vector<1x128xf32> to vector<128xf32>
    %154 = vector.shape_cast %153 : vector<128xf32> to vector<1x1x128xf32>
    %155 = vector.broadcast %154 : vector<1x1x128xf32> to vector<8x8x128xf32>
    %156 = arith.mulf %151, %155 : vector<8x8x128xf32>
    %157 = arith.addf %147, %156 : vector<8x8x128xf32>
    %158 = vector.extract_strided_slice %144 {offsets = [1, 0], sizes = [1, 128], strides = [1, 1]} : vector<9x128xf32> to vector<1x128xf32>
    %159 = vector.shape_cast %158 : vector<1x128xf32> to vector<128xf32>
    %160 = vector.shape_cast %159 : vector<128xf32> to vector<1x1x128xf32>
    %161 = vector.broadcast %160 : vector<1x1x128xf32> to vector<8x8x128xf32>
    %162 = arith.mulf %149, %161 : vector<8x8x128xf32>
    %163 = arith.addf %157, %162 : vector<8x8x128xf32>
    %164 = vector.extract_strided_slice %149 {offsets = [0, 1, 0], sizes = [8, 7, 128], strides = [1, 1, 1]} : vector<8x8x128xf32> to vector<8x7x128xf32>
    %165 = tpu.concatenate %164, %146 in 1 : vector<8x7x128xf32>, vector<8x1x128xf32> -> vector<8x8x128xf32>
    %166 = vector.extract_strided_slice %144 {offsets = [2, 0], sizes = [1, 128], strides = [1, 1]} : vector<9x128xf32> to vector<1x128xf32>
    %167 = vector.shape_cast %166 : vector<1x128xf32> to vector<128xf32>
    %168 = vector.shape_cast %167 : vector<128xf32> to vector<1x1x128xf32>
    %169 = vector.broadcast %168 : vector<1x1x128xf32> to vector<8x8x128xf32>
    %170 = arith.mulf %165, %169 : vector<8x8x128xf32>
    %171 = arith.addf %163, %170 : vector<8x8x128xf32>
    %172 = vector.extract_strided_slice %143 {offsets = [0, 0, 0], sizes = [8, 7, 128], strides = [1, 1, 1]} : vector<8x8x128xf32> to vector<8x7x128xf32>
    %173 = tpu.concatenate %146, %172 in 1 : vector<8x1x128xf32>, vector<8x7x128xf32> -> vector<8x8x128xf32>
    %174 = vector.extract_strided_slice %144 {offsets = [3, 0], sizes = [1, 128], strides = [1, 1]} : vector<9x128xf32> to vector<1x128xf32>
    %175 = vector.shape_cast %174 : vector<1x128xf32> to vector<128xf32>
    %176 = vector.shape_cast %175 : vector<128xf32> to vector<1x1x128xf32>
    %177 = vector.broadcast %176 : vector<1x1x128xf32> to vector<8x8x128xf32>
    %178 = arith.mulf %173, %177 : vector<8x8x128xf32>
    %179 = arith.addf %171, %178 : vector<8x8x128xf32>
    %180 = vector.extract_strided_slice %144 {offsets = [4, 0], sizes = [1, 128], strides = [1, 1]} : vector<9x128xf32> to vector<1x128xf32>
    %181 = vector.shape_cast %180 : vector<1x128xf32> to vector<128xf32>
    %182 = vector.shape_cast %181 : vector<128xf32> to vector<1x1x128xf32>
    %183 = vector.broadcast %182 : vector<1x1x128xf32> to vector<8x8x128xf32>
    %184 = arith.mulf %143, %183 : vector<8x8x128xf32>
    %185 = arith.addf %179, %184 : vector<8x8x128xf32>
    %186 = vector.extract_strided_slice %143 {offsets = [0, 1, 0], sizes = [8, 7, 128], strides = [1, 1, 1]} : vector<8x8x128xf32> to vector<8x7x128xf32>
    %187 = tpu.concatenate %186, %146 in 1 : vector<8x7x128xf32>, vector<8x1x128xf32> -> vector<8x8x128xf32>
    %188 = vector.extract_strided_slice %144 {offsets = [5, 0], sizes = [1, 128], strides = [1, 1]} : vector<9x128xf32> to vector<1x128xf32>
    %189 = vector.shape_cast %188 : vector<1x128xf32> to vector<128xf32>
    %190 = vector.shape_cast %189 : vector<128xf32> to vector<1x1x128xf32>
    %191 = vector.broadcast %190 : vector<1x1x128xf32> to vector<8x8x128xf32>
    %192 = arith.mulf %187, %191 : vector<8x8x128xf32>
    %193 = arith.addf %185, %192 : vector<8x8x128xf32>
    %194 = vector.extract_strided_slice %143 {offsets = [1, 0, 0], sizes = [7, 8, 128], strides = [1, 1, 1]} : vector<8x8x128xf32> to vector<7x8x128xf32>
    %195 = tpu.concatenate %194, %145 in 0 : vector<7x8x128xf32>, vector<1x8x128xf32> -> vector<8x8x128xf32>
    %196 = vector.extract_strided_slice %195 {offsets = [0, 0, 0], sizes = [8, 7, 128], strides = [1, 1, 1]} : vector<8x8x128xf32> to vector<8x7x128xf32>
    %197 = tpu.concatenate %146, %196 in 1 : vector<8x1x128xf32>, vector<8x7x128xf32> -> vector<8x8x128xf32>
    %198 = vector.extract_strided_slice %144 {offsets = [6, 0], sizes = [1, 128], strides = [1, 1]} : vector<9x128xf32> to vector<1x128xf32>
    %199 = vector.shape_cast %198 : vector<1x128xf32> to vector<128xf32>
    %200 = vector.shape_cast %199 : vector<128xf32> to vector<1x1x128xf32>
    %201 = vector.broadcast %200 : vector<1x1x128xf32> to vector<8x8x128xf32>
    %202 = arith.mulf %197, %201 : vector<8x8x128xf32>
    %203 = arith.addf %193, %202 : vector<8x8x128xf32>
    %204 = vector.extract_strided_slice %144 {offsets = [7, 0], sizes = [1, 128], strides = [1, 1]} : vector<9x128xf32> to vector<1x128xf32>
    %205 = vector.shape_cast %204 : vector<1x128xf32> to vector<128xf32>
    %206 = vector.shape_cast %205 : vector<128xf32> to vector<1x1x128xf32>
    %207 = vector.broadcast %206 : vector<1x1x128xf32> to vector<8x8x128xf32>
    %208 = arith.mulf %195, %207 : vector<8x8x128xf32>
    %209 = arith.addf %203, %208 : vector<8x8x128xf32>
    %210 = vector.extract_strided_slice %195 {offsets = [0, 1, 0], sizes = [8, 7, 128], strides = [1, 1, 1]} : vector<8x8x128xf32> to vector<8x7x128xf32>
    %211 = tpu.concatenate %210, %146 in 1 : vector<8x7x128xf32>, vector<8x1x128xf32> -> vector<8x8x128xf32>
    %212 = vector.extract_strided_slice %144 {offsets = [8, 0], sizes = [1, 128], strides = [1, 1]} : vector<9x128xf32> to vector<1x128xf32>
    %213 = vector.shape_cast %212 : vector<1x128xf32> to vector<128xf32>
    %214 = vector.shape_cast %213 : vector<128xf32> to vector<1x1x128xf32>
    %215 = vector.broadcast %214 : vector<1x1x128xf32> to vector<8x8x128xf32>
    %216 = arith.mulf %211, %215 : vector<8x8x128xf32>
    %217 = arith.addf %209, %216 : vector<8x8x128xf32>
    %c0_61 = arith.constant 0 : index
    %c0_62 = arith.constant 0 : index
    %218 = vector.load %arg11[%c0_61, %c0_62] : memref<1x128xf32, #tpu.memory_space<vmem>>, vector<1x128xf32>
    %219 = vector.shape_cast %218 : vector<1x128xf32> to vector<128xf32>
    %220 = vector.shape_cast %219 : vector<128xf32> to vector<1x1x128xf32>
    %221 = vector.broadcast %220 : vector<1x1x128xf32> to vector<8x8x128xf32>
    %222 = arith.mulf %217, %221 : vector<8x8x128xf32>
    %c0_63 = arith.constant 0 : index
    %c0_64 = arith.constant 0 : index
    %223 = vector.load %arg12[%c0_63, %c0_64] : memref<1x128xf32, #tpu.memory_space<vmem>>, vector<1x128xf32>
    %224 = vector.shape_cast %223 : vector<1x128xf32> to vector<128xf32>
    %225 = vector.shape_cast %224 : vector<128xf32> to vector<1x1x128xf32>
    %226 = vector.broadcast %225 : vector<1x1x128xf32> to vector<8x8x128xf32>
    %227 = arith.addf %222, %226 : vector<8x8x128xf32>
    %cst_65 = arith.constant 3.000000e+00 : f32
    %228 = vector.broadcast %cst_65 : f32 to vector<8x8x128xf32>
    %229 = arith.addf %227, %228 : vector<8x8x128xf32>
    %cst_66 = arith.constant 0.000000e+00 : f32
    %cst_67 = arith.constant 6.000000e+00 : f32
    %230 = vector.broadcast %cst_66 : f32 to vector<8x8x128xf32>
    %231 = arith.maximumf %230, %229 : vector<8x8x128xf32>
    %232 = vector.broadcast %cst_67 : f32 to vector<8x8x128xf32>
    %233 = arith.minimumf %232, %231 : vector<8x8x128xf32>
    %cst_68 = arith.constant 0.166666672 : f32
    %234 = vector.broadcast %cst_68 : f32 to vector<8x8x128xf32>
    %235 = arith.mulf %233, %234 : vector<8x8x128xf32>
    %236 = arith.mulf %227, %235 : vector<8x8x128xf32>
    %237 = vector.shape_cast %236 : vector<8x8x128xf32> to vector<64x128xf32>
    %cst_69 = arith.constant dense<0.000000e+00> : vector<128xf32>
    %238 = vector.multi_reduction <add>, %237, %cst_69 [0] : vector<64x128xf32> to vector<128xf32>
    %239 = vector.shape_cast %238 : vector<128xf32> to vector<1x128xf32>
    %cst_70 = arith.constant 6.400000e+01 : f32
    %240 = vector.broadcast %cst_70 : f32 to vector<1x128xf32>
    %241 = arith.divf %239, %240 : vector<1x128xf32>
    %c0_71 = arith.constant 0 : index
    %c0_72 = arith.constant 0 : index
    %242 = vector.load %arg13[%c0_71, %c0_72] : memref<128x32xf32, #tpu.memory_space<vmem>>, vector<128x32xf32>
    %cst_73 = arith.constant dense<0.000000e+00> : vector<1x32xf32>
    %243 = tpu.matmul %241, %242, %cst_73 {dimension_numbers = #tpu.dot_dimension_numbers<[1], [0], [0], [1], [0, 0, 1, 1], [], []>} : vector<1x128xf32>, vector<128x32xf32>, vector<1x32xf32> -> vector<1x32xf32>
    %c0_74 = arith.constant 0 : index
    %c0_75 = arith.constant 0 : index
    %244 = vector.load %arg14[%c0_74, %c0_75] : memref<1x32xf32, #tpu.memory_space<vmem>>, vector<1x32xf32>
    %245 = vector.shape_cast %244 : vector<1x32xf32> to vector<32xf32>
    %246 = vector.shape_cast %245 : vector<32xf32> to vector<1x32xf32>
    %247 = arith.addf %243, %246 : vector<1x32xf32>
    %cst_76 = arith.constant 0.000000e+00 : f32
    %248 = vector.broadcast %cst_76 : f32 to vector<1x32xf32>
    %249 = arith.maximumf %247, %248 : vector<1x32xf32>
    %c0_77 = arith.constant 0 : index
    %c0_78 = arith.constant 0 : index
    %250 = vector.load %arg15[%c0_77, %c0_78] : memref<32x128xf32, #tpu.memory_space<vmem>>, vector<32x128xf32>
    %cst_79 = arith.constant dense<0.000000e+00> : vector<1x128xf32>
    %251 = tpu.matmul %249, %250, %cst_79 {dimension_numbers = #tpu.dot_dimension_numbers<[1], [0], [0], [1], [0, 0, 1, 1], [], []>} : vector<1x32xf32>, vector<32x128xf32>, vector<1x128xf32> -> vector<1x128xf32>
    %c0_80 = arith.constant 0 : index
    %c0_81 = arith.constant 0 : index
    %252 = vector.load %arg16[%c0_80, %c0_81] : memref<1x128xf32, #tpu.memory_space<vmem>>, vector<1x128xf32>
    %253 = vector.shape_cast %252 : vector<1x128xf32> to vector<128xf32>
    %254 = vector.shape_cast %253 : vector<128xf32> to vector<1x128xf32>
    %255 = arith.addf %251, %254 : vector<1x128xf32>
    %cst_82 = arith.constant 3.000000e+00 : f32
    %256 = vector.broadcast %cst_82 : f32 to vector<1x128xf32>
    %257 = arith.addf %255, %256 : vector<1x128xf32>
    %cst_83 = arith.constant 0.000000e+00 : f32
    %cst_84 = arith.constant 6.000000e+00 : f32
    %258 = vector.broadcast %cst_83 : f32 to vector<1x128xf32>
    %259 = arith.maximumf %258, %257 : vector<1x128xf32>
    %260 = vector.broadcast %cst_84 : f32 to vector<1x128xf32>
    %261 = arith.minimumf %260, %259 : vector<1x128xf32>
    %cst_85 = arith.constant 0.166666672 : f32
    %262 = vector.broadcast %cst_85 : f32 to vector<1x128xf32>
    %263 = arith.mulf %261, %262 : vector<1x128xf32>
    %264 = vector.broadcast %263 : vector<1x128xf32> to vector<64x128xf32>
    %265 = arith.mulf %237, %264 : vector<64x128xf32>
    %c0_86 = arith.constant 0 : index
    %c0_87 = arith.constant 0 : index
    %266 = vector.load %arg17[%c0_86, %c0_87] : memref<128x32xf32, #tpu.memory_space<vmem>>, vector<128x32xf32>
    %cst_88 = arith.constant dense<0.000000e+00> : vector<64x32xf32>
    %267 = tpu.matmul %265, %266, %cst_88 {dimension_numbers = #tpu.dot_dimension_numbers<[1], [0], [0], [1], [0, 0, 1, 1], [], []>} : vector<64x128xf32>, vector<128x32xf32>, vector<64x32xf32> -> vector<64x32xf32>
    %c0_89 = arith.constant 0 : index
    %c0_90 = arith.constant 0 : index
    %268 = vector.load %arg18[%c0_89, %c0_90] : memref<1x32xf32, #tpu.memory_space<vmem>>, vector<1x32xf32>
    %269 = vector.shape_cast %268 : vector<1x32xf32> to vector<32xf32>
    %270 = vector.shape_cast %269 : vector<32xf32> to vector<1x32xf32>
    %271 = vector.broadcast %270 : vector<1x32xf32> to vector<64x32xf32>
    %272 = arith.mulf %267, %271 : vector<64x32xf32>
    %c0_91 = arith.constant 0 : index
    %c0_92 = arith.constant 0 : index
    %273 = vector.load %arg19[%c0_91, %c0_92] : memref<1x32xf32, #tpu.memory_space<vmem>>, vector<1x32xf32>
    %274 = vector.shape_cast %273 : vector<1x32xf32> to vector<32xf32>
    %275 = vector.shape_cast %274 : vector<32xf32> to vector<1x32xf32>
    %276 = vector.broadcast %275 : vector<1x32xf32> to vector<64x32xf32>
    %277 = arith.addf %272, %276 : vector<64x32xf32>
    %278 = arith.addf %277, %121 : vector<64x32xf32>
    %279 = vector.extract_strided_slice %120 {offsets = [0, 0], sizes = [1, 32], strides = [1, 1]} : vector<65x32xf32> to vector<1x32xf32>
    %c0_93 = arith.constant 0 : index
    %c0_94 = arith.constant 0 : index
    %c0_95 = arith.constant 0 : index
    %280 = vector.load %arg20[%c0_93, %c0_94, %c0_95] : memref<1x65x32xf32, #tpu.memory_space<vmem>>, vector<1x1x32xf32>
    %281 = vector.shape_cast %280 : vector<1x1x32xf32> to vector<1x32xf32>
    %282 = vector.shape_cast %279 : vector<1x32xf32> to vector<1x1x32xf32>
    tpu.vector_store %arg20[%c0_93, %c0_94, %c0_95], %282 {strides = array<i32>} : memref<1x65x32xf32, #tpu.memory_space<vmem>>, vector<1x1x32xf32>,
    %c0_96 = arith.constant 0 : index
    %c1 = arith.constant 1 : index
    %c0_97 = arith.constant 0 : index
    %283 = vector.load %arg20[%c0_96, %c1, %c0_97] : memref<1x65x32xf32, #tpu.memory_space<vmem>>, vector<1x64x32xf32>
    %284 = vector.shape_cast %283 : vector<1x64x32xf32> to vector<64x32xf32>
    %285 = vector.shape_cast %278 : vector<64x32xf32> to vector<1x64x32xf32>
    tpu.vector_store %arg20[%c0_96, %c1, %c0_97], %285 {strides = array<i32>} : memref<1x65x32xf32, #tpu.memory_space<vmem>>, vector<1x64x32xf32>,
    return
  }
  func.func @transform_0(%arg0: i32) -> (i32, i32, i32) {
    %c0_i32 = arith.constant 0 : i32
    %c0_i32_0 = arith.constant 0 : i32
    %c0_i32_1 = arith.constant 0 : i32
    return %arg0, %c0_i32, %c0_i32_0 : i32, i32, i32
  }
  func.func @transform_1(%arg0: i32) -> (i32, i32) {
    %c0_i32 = arith.constant 0 : i32
    %c0_i32_0 = arith.constant 0 : i32
    %c0_i32_1 = arith.constant 0 : i32
    return %c0_i32, %c0_i32_0 : i32, i32
  }
  func.func @transform_2(%arg0: i32) -> (i32, i32) {
    %c0_i32 = arith.constant 0 : i32
    %c0_i32_0 = arith.constant 0 : i32
    %c0_i32_1 = arith.constant 0 : i32
    return %c0_i32, %c0_i32_0 : i32, i32
  }
  func.func @transform_3(%arg0: i32) -> (i32, i32) {
    %c0_i32 = arith.constant 0 : i32
    %c0_i32_0 = arith.constant 0 : i32
    %c0_i32_1 = arith.constant 0 : i32
    return %c0_i32, %c0_i32_0 : i32, i32
  }
  func.func @transform_4(%arg0: i32) -> (i32, i32) {
    %c0_i32 = arith.constant 0 : i32
    %c0_i32_0 = arith.constant 0 : i32
    %c0_i32_1 = arith.constant 0 : i32
    return %c0_i32, %c0_i32_0 : i32, i32
  }
  func.func @transform_5(%arg0: i32) -> (i32, i32) {
    %c0_i32 = arith.constant 0 : i32
    %c0_i32_0 = arith.constant 0 : i32
    %c0_i32_1 = arith.constant 0 : i32
    return %c0_i32, %c0_i32_0 : i32, i32
  }
  func.func @transform_6(%arg0: i32) -> (i32, i32) {
    %c0_i32 = arith.constant 0 : i32
    %c0_i32_0 = arith.constant 0 : i32
    %c0_i32_1 = arith.constant 0 : i32
    return %c0_i32, %c0_i32_0 : i32, i32
  }
  func.func @transform_7(%arg0: i32) -> (i32, i32) {
    %c0_i32 = arith.constant 0 : i32
    %c0_i32_0 = arith.constant 0 : i32
    %c0_i32_1 = arith.constant 0 : i32
    return %c0_i32, %c0_i32_0 : i32, i32
  }
  func.func @transform_8(%arg0: i32) -> (i32, i32) {
    %c0_i32 = arith.constant 0 : i32
    %c0_i32_0 = arith.constant 0 : i32
    %c0_i32_1 = arith.constant 0 : i32
    return %c0_i32, %c0_i32_0 : i32, i32
  }
  func.func @transform_9(%arg0: i32) -> (i32, i32) {
    %c0_i32 = arith.constant 0 : i32
    %c0_i32_0 = arith.constant 0 : i32
    %c0_i32_1 = arith.constant 0 : i32
    return %c0_i32, %c0_i32_0 : i32, i32
  }
  func.func @transform_10(%arg0: i32) -> (i32, i32) {
    %c0_i32 = arith.constant 0 : i32
    %c0_i32_0 = arith.constant 0 : i32
    %c0_i32_1 = arith.constant 0 : i32
    return %c0_i32, %c0_i32_0 : i32, i32
  }
  func.func @transform_11(%arg0: i32) -> (i32, i32) {
    %c0_i32 = arith.constant 0 : i32
    %c0_i32_0 = arith.constant 0 : i32
    %c0_i32_1 = arith.constant 0 : i32
    return %c0_i32, %c0_i32_0 : i32, i32
  }
  func.func @transform_12(%arg0: i32) -> (i32, i32) {
    %c0_i32 = arith.constant 0 : i32
    %c0_i32_0 = arith.constant 0 : i32
    %c0_i32_1 = arith.constant 0 : i32
    return %c0_i32, %c0_i32_0 : i32, i32
  }
  func.func @transform_13(%arg0: i32) -> (i32, i32) {
    %c0_i32 = arith.constant 0 : i32
    %c0_i32_0 = arith.constant 0 : i32
    %c0_i32_1 = arith.constant 0 : i32
    return %c0_i32, %c0_i32_0 : i32, i32
  }
  func.func @transform_14(%arg0: i32) -> (i32, i32) {
    %c0_i32 = arith.constant 0 : i32
    %c0_i32_0 = arith.constant 0 : i32
    %c0_i32_1 = arith.constant 0 : i32
    return %c0_i32, %c0_i32_0 : i32, i32
  }
  func.func @transform_15(%arg0: i32) -> (i32, i32) {
    %c0_i32 = arith.constant 0 : i32
    %c0_i32_0 = arith.constant 0 : i32
    %c0_i32_1 = arith.constant 0 : i32
    return %c0_i32, %c0_i32_0 : i32, i32
  }
  func.func @transform_16(%arg0: i32) -> (i32, i32) {
    %c0_i32 = arith.constant 0 : i32
    %c0_i32_0 = arith.constant 0 : i32
    %c0_i32_1 = arith.constant 0 : i32
    return %c0_i32, %c0_i32_0 : i32, i32
  }
  func.func @transform_17(%arg0: i32) -> (i32, i32) {
    %c0_i32 = arith.constant 0 : i32
    %c0_i32_0 = arith.constant 0 : i32
    %c0_i32_1 = arith.constant 0 : i32
    return %c0_i32, %c0_i32_0 : i32, i32
  }
  func.func @transform_18(%arg0: i32) -> (i32, i32) {
    %c0_i32 = arith.constant 0 : i32
    %c0_i32_0 = arith.constant 0 : i32
    %c0_i32_1 = arith.constant 0 : i32
    return %c0_i32, %c0_i32_0 : i32, i32
  }
  func.func @transform_19(%arg0: i32) -> (i32, i32, i32) {
    %c0_i32 = arith.constant 0 : i32
    %c0_i32_0 = arith.constant 0 : i32
    %c0_i32_1 = arith.constant 0 : i32
    return %arg0, %c0_i32, %c0_i32_0 : i32, i32, i32
  }
}

</mosaic_0001>

<llo_original>
// kernel: block_with_cnn.1
$region0: #{block_with_cnn.1}
  #allocation0 [shape = 'u32[]', space=smem, size = 0x4, offset = 0x4, fixed_abs, tag = 'smem constant byte address 0x4 - core index']
  #allocation1 [shape = 'u32[144,128]{1,0:T(1,128)}', space=vmem, size = 0x12000, scoped, tag = 'internal scratch']
  %s0 = inlined_call_operand.vmem [shape: f32[2,65,32], index: 0, kind: input, shape index: {}]
  %s1 = inlined_call_operand.vmem [shape: f32[1,32], index: 1, kind: input, shape index: {}]
  %s2 = inlined_call_operand.vmem [shape: f32[1,32], index: 2, kind: input, shape index: {}]
  %s3 = inlined_call_operand.vmem [shape: f32[32,96], index: 3, kind: input, shape index: {}]
  %s4 = inlined_call_operand.vmem [shape: f32[32,32], index: 4, kind: input, shape index: {}]
  %s5 = inlined_call_operand.vmem [shape: f32[1,32], index: 5, kind: input, shape index: {}]
  %s6 = inlined_call_operand.vmem [shape: f32[32,128], index: 6, kind: input, shape index: {}]
  %s7 = inlined_call_operand.vmem [shape: f32[1,128], index: 7, kind: input, shape index: {}]
  %s8 = inlined_call_operand.vmem [shape: f32[1,128], index: 8, kind: input, shape index: {}]
  %s9 = inlined_call_operand.vmem [shape: f32[9,128], index: 9, kind: input, shape index: {}]
  %s10 = inlined_call_operand.vmem [shape: f32[1,128], index: 10, kind: input, shape index: {}]
  %s11 = inlined_call_operand.vmem [shape: f32[1,128], index: 11, kind: input, shape index: {}]
  %s12 = inlined_call_operand.vmem [shape: f32[128,32], index: 12, kind: input, shape index: {}]
  %s13 = inlined_call_operand.vmem [shape: f32[1,32], index: 13, kind: input, shape index: {}]
  %s14 = inlined_call_operand.vmem [shape: f32[32,128], index: 14, kind: input, shape index: {}]
  %s15 = inlined_call_operand.vmem [shape: f32[1,128], index: 15, kind: input, shape index: {}]
  %s16 = inlined_call_operand.vmem [shape: f32[128,32], index: 16, kind: input, shape index: {}]
  %s17 = inlined_call_operand.vmem [shape: f32[1,32], index: 17, kind: input, shape index: {}]
  %s18 = inlined_call_operand.vmem [shape: f32[1,32], index: 18, kind: input, shape index: {}]
  %s19 = inlined_call_operand.vmem [shape: f32[2,65,32], index: 19, kind: output, shape index: {}]
  %s20 = sld [smem:[#allocation0]]
  $region109: #{block_with_cnn.1} parent=0
    _
  %s22 = ssub.s32 1, %s20
  %s23 = scalar_select 0, %s22, %s20
  loop: start=0, step=1, limit=4
  $region2: #{block_with_cnn.1} parent=0 // loop_pre_header
    _
  $region3: #{block_with_cnn.1} parent=0 // loop_header
    %s25 = sphi 0, %s29
    %p26 = scmp.ge.s32.totalorder %s25, 4
    %s35 = sphi 0, %s37
    %s38 = sphi 0, %s35
    %s39 = sphi 0, %s38
    %s55 = sphi 0, %s39
    %s59 = sphi 0, %s59
    %s61 = sphi 0, %s59
    %s62 = sphi 0, %s61
    %s76 = sphi 0, %s62
    %s80 = sphi 0, %s80
    %s82 = sphi 0, %s80
    %s83 = sphi 0, %s82
    %s97 = sphi 0, %s83
    %s101 = sphi 0, %s101
    %s103 = sphi 0, %s101
    %s104 = sphi 0, %s103
    %s118 = sphi 0, %s104
    %s122 = sphi 0, %s122
    %s124 = sphi 0, %s122
    %s125 = sphi 0, %s124
    %s139 = sphi 0, %s125
    %s143 = sphi 0, %s143
    %s145 = sphi 0, %s143
    %s146 = sphi 0, %s145
    %s160 = sphi 0, %s146
    %s164 = sphi 0, %s164
    %s166 = sphi 0, %s164
    %s167 = sphi 0, %s166
    %s181 = sphi 0, %s167
    %s185 = sphi 0, %s185
    %s187 = sphi 0, %s185
    %s188 = sphi 0, %s187
    %s202 = sphi 0, %s188
    %s206 = sphi 0, %s206
    %s208 = sphi 0, %s206
    %s209 = sphi 0, %s208
    %s223 = sphi 0, %s209
    %s227 = sphi 0, %s227
    %s229 = sphi 0, %s227
    %s230 = sphi 0, %s229
    %s244 = sphi 0, %s230
    %s248 = sphi 0, %s248
    %s250 = sphi 0, %s248
    %s251 = sphi 0, %s250
    %s265 = sphi 0, %s251
    %s269 = sphi 0, %s269
    %s271 = sphi 0, %s269
    %s272 = sphi 0, %s271
    %s286 = sphi 0, %s272
    %s290 = sphi 0, %s290
    %s292 = sphi 0, %s290
    %s293 = sphi 0, %s292
    %s307 = sphi 0, %s293
    %s311 = sphi 0, %s311
    %s313 = sphi 0, %s311
    %s314 = sphi 0, %s313
    %s328 = sphi 0, %s314
    %s332 = sphi 0, %s332
    %s334 = sphi 0, %s332
    %s335 = sphi 0, %s334
    %s349 = sphi 0, %s335
    %s353 = sphi 0, %s353
    %s355 = sphi 0, %s353
    %s356 = sphi 0, %s355
    %s370 = sphi 0, %s356
    %s374 = sphi 0, %s374
    %s376 = sphi 0, %s374
    %s377 = sphi 0, %s376
    %s391 = sphi 0, %s377
    %s395 = sphi 0, %s395
    %s397 = sphi 0, %s395
    %s398 = sphi 0, %s397
    %s412 = sphi 0, %s398
    %s416 = sphi 0, %s416
    %s418 = sphi 0, %s416
    %s419 = sphi 0, %s418
    %s433 = sphi 0, %s419
    %s439 = sphi 0, %s441
    %s442 = sphi 0, %s439
    %s443 = sphi 0, %s442
    %s459 = sphi 0, %s443
  $region4: #{block_with_cnn.1} parent=0 // loop_header_branch
    %28 = sbr.rel (%p26) target = $region8
  $region5: #{block_with_cnn.1} parent=0 // loop_body
    %s30 = ssub.s32 %s25, 1
    %s31 = ssub.s32 %s25, 2
    %s32 = sadd.s32 %s25, 1
    %s33 = ssub.s32 %s25, %s32
    %p34 = scmp.eq.s32.totalorder %s33, 0
    %s36 = sadd.s32 %s35, 1
    %s37 = scalar_select %p34, %s35, %s36
    %p40 = pneg %p34
    %p41 = scmp.eq.s32.totalorder %s25, 1
    %p42 = por %p40, %p41
    %p43 = scmp.ne.s32.totalorder %s35, %s38
    %p44 = scmp.eq.s32.totalorder %s25, 0
    %p45 = por %p43, %p44
    %p46 = scmp.ne.s32.totalorder %s35, %s38
    %p47 = scmp.eq.s32.totalorder %s30, 1
    %p48 = por %p46, %p47
    %p49 = scmp.ne.s32.totalorder %s38, %s39
    %p50 = scmp.eq.s32.totalorder %s30, 0
    %p51 = por %p49, %p50
    %p52 = scmp.ne.s32.totalorder %s38, %s39
    %p53 = scmp.eq.s32.totalorder %s31, 1
    %p54 = por %p52, %p53
    %p56 = scmp.ne.s32.totalorder %s39, %s55
    %p57 = scmp.eq.s32.totalorder %s31, 0
    %p58 = por %p56, %p57
    %s60 = sadd.s32 %s59, 1
    %p63 = scmp.eq.s32.totalorder %s25, 1
    %p64 = scmp.ne.s32.totalorder %s59, %s61
    %p65 = scmp.eq.s32.totalorder %s25, 0
    %p66 = por %p64, %p65
    %p67 = scmp.ne.s32.totalorder %s59, %s61
    %p68 = scmp.eq.s32.totalorder %s30, 1
    %p69 = por %p67, %p68
    %p70 = scmp.ne.s32.totalorder %s61, %s62
    %p71 = scmp.eq.s32.totalorder %s30, 0
    %p72 = por %p70, %p71
    %p73 = scmp.ne.s32.totalorder %s61, %s62
    %p74 = scmp.eq.s32.totalorder %s31, 1
    %p75 = por %p73, %p74
    %p77 = scmp.ne.s32.totalorder %s62, %s76
    %p78 = scmp.eq.s32.totalorder %s31, 0
    %p79 = por %p77, %p78
    %s81 = sadd.s32 %s80, 1
    %p84 = scmp.eq.s32.totalorder %s25, 1
    %p85 = scmp.ne.s32.totalorder %s80, %s82
    %p86 = scmp.eq.s32.totalorder %s25, 0
    %p87 = por %p85, %p86
    %p88 = scmp.ne.s32.totalorder %s80, %s82
    %p89 = scmp.eq.s32.totalorder %s30, 1
    %p90 = por %p88, %p89
    %p91 = scmp.ne.s32.totalorder %s82, %s83
    %p92 = scmp.eq.s32.totalorder %s30, 0
    %p93 = por %p91, %p92
    %p94 = scmp.ne.s32.totalorder %s82, %s83
    %p95 = scmp.eq.s32.totalorder %s31, 1
    %p96 = por %p94, %p95
    %p98 = scmp.ne.s32.totalorder %s83, %s97
    %p99 = scmp.eq.s32.totalorder %s31, 0
    %p100 = por %p98, %p99
    %s102 = sadd.s32 %s101, 1
    %p105 = scmp.eq.s32.totalorder %s25, 1
    %p106 = scmp.ne.s32.totalorder %s101, %s103
    %p107 = scmp.eq.s32.totalorder %s25, 0
    %p108 = por %p106, %p107
    %p109 = scmp.ne.s32.totalorder %s101, %s103
    %p110 = scmp.eq.s32.totalorder %s30, 1
    %p111 = por %p109, %p110
    %p112 = scmp.ne.s32.totalorder %s103, %s104
    %p113 = scmp.eq.s32.totalorder %s30, 0
    %p114 = por %p112, %p113
    %p115 = scmp.ne.s32.totalorder %s103, %s104
    %p116 = scmp.eq.s32.totalorder %s31, 1
    %p117 = por %p115, %p116
    %p119 = scmp.ne.s32.totalorder %s104, %s118
    %p120 = scmp.eq.s32.totalorder %s31, 0
    %p121 = por %p119, %p120
    %s123 = sadd.s32 %s122, 1
    %p126 = scmp.eq.s32.totalorder %s25, 1
    %p127 = scmp.ne.s32.totalorder %s122, %s124
    %p128 = scmp.eq.s32.totalorder %s25, 0
    %p129 = por %p127, %p128
    %p130 = scmp.ne.s32.totalorder %s122, %s124
    %p131 = scmp.eq.s32.totalorder %s30, 1
    %p132 = por %p130, %p131
    %p133 = scmp.ne.s32.totalorder %s124, %s125
    %p134 = scmp.eq.s32.totalorder %s30, 0
    %p135 = por %p133, %p134
    %p136 = scmp.ne.s32.totalorder %s124, %s125
    %p137 = scmp.eq.s32.totalorder %s31, 1
    %p138 = por %p136, %p137
    %p140 = scmp.ne.s32.totalorder %s125, %s139
    %p141 = scmp.eq.s32.totalorder %s31, 0
    %p142 = por %p140, %p141
    %s144 = sadd.s32 %s143, 1
    %p147 = scmp.eq.s32.totalorder %s25, 1
    %p148 = scmp.ne.s32.totalorder %s143, %s145
    %p149 = scmp.eq.s32.totalorder %s25, 0
    %p150 = por %p148, %p149
    %p151 = scmp.ne.s32.totalorder %s143, %s145
    %p152 = scmp.eq.s32.totalorder %s30, 1
    %p153 = por %p151, %p152
    %p154 = scmp.ne.s32.totalorder %s145, %s146
    %p155 = scmp.eq.s32.totalorder %s30, 0
    %p156 = por %p154, %p155
    %p157 = scmp.ne.s32.totalorder %s145, %s146
    %p158 = scmp.eq.s32.totalorder %s31, 1
    %p159 = por %p157, %p158
    %p161 = scmp.ne.s32.totalorder %s146, %s160
    %p162 = scmp.eq.s32.totalorder %s31, 0
    %p163 = por %p161, %p162
    %s165 = sadd.s32 %s164, 1
    %p168 = scmp.eq.s32.totalorder %s25, 1
    %p169 = scmp.ne.s32.totalorder %s164, %s166
    %p170 = scmp.eq.s32.totalorder %s25, 0
    %p171 = por %p169, %p170
    %p172 = scmp.ne.s32.totalorder %s164, %s166
    %p173 = scmp.eq.s32.totalorder %s30, 1
    %p174 = por %p172, %p173
    %p175 = scmp.ne.s32.totalorder %s166, %s167
    %p176 = scmp.eq.s32.totalorder %s30, 0
    %p177 = por %p175, %p176
    %p178 = scmp.ne.s32.totalorder %s166, %s167
    %p179 = scmp.eq.s32.totalorder %s31, 1
    %p180 = por %p178, %p179
    %p182 = scmp.ne.s32.totalorder %s167, %s181
    %p183 = scmp.eq.s32.totalorder %s31, 0
    %p184 = por %p182, %p183
    %s186 = sadd.s32 %s185, 1
    %p189 = scmp.eq.s32.totalorder %s25, 1
    %p190 = scmp.ne.s32.totalorder %s185, %s187
    %p191 = scmp.eq.s32.totalorder %s25, 0
    %p192 = por %p190, %p191
    %p193 = scmp.ne.s32.totalorder %s185, %s187
    %p194 = scmp.eq.s32.totalorder %s30, 1
    %p195 = por %p193, %p194
    %p196 = scmp.ne.s32.totalorder %s187, %s188
    %p197 = scmp.eq.s32.totalorder %s30, 0
    %p198 = por %p196, %p197
    %p199 = scmp.ne.s32.totalorder %s187, %s188
    %p200 = scmp.eq.s32.totalorder %s31, 1
    %p201 = por %p199, %p200
    %p203 = scmp.ne.s32.totalorder %s188, %s202
    %p204 = scmp.eq.s32.totalorder %s31, 0
    %p205 = por %p203, %p204
    %s207 = sadd.s32 %s206, 1
    %p210 = scmp.eq.s32.totalorder %s25, 1
    %p211 = scmp.ne.s32.totalorder %s206, %s208
    %p212 = scmp.eq.s32.totalorder %s25, 0
    %p213 = por %p211, %p212
    %p214 = scmp.ne.s32.totalorder %s206, %s208
    %p215 = scmp.eq.s32.totalorder %s30, 1
    %p216 = por %p214, %p215
    %p217 = scmp.ne.s32.totalorder %s208, %s209
    %p218 = scmp.eq.s32.totalorder %s30, 0
    %p219 = por %p217, %p218
    %p220 = scmp.ne.s32.totalorder %s208, %s209
    %p221 = scmp.eq.s32.totalorder %s31, 1
    %p222 = por %p220, %p221
    %p224 = scmp.ne.s32.totalorder %s209, %s223
    %p225 = scmp.eq.s32.totalorder %s31, 0
    %p226 = por %p224, %p225
    %s228 = sadd.s32 %s227, 1
    %p231 = scmp.eq.s32.totalorder %s25, 1
    %p232 = scmp.ne.s32.totalorder %s227, %s229
    %p233 = scmp.eq.s32.totalorder %s25, 0
    %p234 = por %p232, %p233
    %p235 = scmp.ne.s32.totalorder %s227, %s229
    %p236 = scmp.eq.s32.totalorder %s30, 1
    %p237 = por %p235, %p236
    %p238 = scmp.ne.s32.totalorder %s229, %s230
    %p239 = scmp.eq.s32.totalorder %s30, 0
    %p240 = por %p238, %p239
    %p241 = scmp.ne.s32.totalorder %s229, %s230
    %p242 = scmp.eq.s32.totalorder %s31, 1
    %p243 = por %p241, %p242
    %p245 = scmp.ne.s32.totalorder %s230, %s244
    %p246 = scmp.eq.s32.totalorder %s31, 0
    %p247 = por %p245, %p246
    %s249 = sadd.s32 %s248, 1
    %p252 = scmp.eq.s32.totalorder %s25, 1
    %p253 = scmp.ne.s32.totalorder %s248, %s250
    %p254 = scmp.eq.s32.totalorder %s25, 0
    %p255 = por %p253, %p254
    %p256 = scmp.ne.s32.totalorder %s248, %s250
    %p257 = scmp.eq.s32.totalorder %s30, 1
    %p258 = por %p256, %p257
    %p259 = scmp.ne.s32.totalorder %s250, %s251
    %p260 = scmp.eq.s32.totalorder %s30, 0
    %p261 = por %p259, %p260
    %p262 = scmp.ne.s32.totalorder %s250, %s251
    %p263 = scmp.eq.s32.totalorder %s31, 1
    %p264 = por %p262, %p263
    %p266 = scmp.ne.s32.totalorder %s251, %s265
    %p267 = scmp.eq.s32.totalorder %s31, 0
    %p268 = por %p266, %p267
    %s270 = sadd.s32 %s269, 1
    %p273 = scmp.eq.s32.totalorder %s25, 1
    %p274 = scmp.ne.s32.totalorder %s269, %s271
    %p275 = scmp.eq.s32.totalorder %s25, 0
    %p276 = por %p274, %p275
    %p277 = scmp.ne.s32.totalorder %s269, %s271
    %p278 = scmp.eq.s32.totalorder %s30, 1
    %p279 = por %p277, %p278
    %p280 = scmp.ne.s32.totalorder %s271, %s272
    %p281 = scmp.eq.s32.totalorder %s30, 0
    %p282 = por %p280, %p281
    %p283 = scmp.ne.s32.totalorder %s271, %s272
    %p284 = scmp.eq.s32.totalorder %s31, 1
    %p285 = por %p283, %p284
    %p287 = scmp.ne.s32.totalorder %s272, %s286
    %p288 = scmp.eq.s32.totalorder %s31, 0
    %p289 = por %p287, %p288
    %s291 = sadd.s32 %s290, 1
    %p294 = scmp.eq.s32.totalorder %s25, 1
    %p295 = scmp.ne.s32.totalorder %s290, %s292
    %p296 = scmp.eq.s32.totalorder %s25, 0
    %p297 = por %p295, %p296
    %p298 = scmp.ne.s32.totalorder %s290, %s292
    %p299 = scmp.eq.s32.totalorder %s30, 1
    %p300 = por %p298, %p299
    %p301 = scmp.ne.s32.totalorder %s292, %s293
    %p302 = scmp.eq.s32.totalorder %s30, 0
    %p303 = por %p301, %p302
    %p304 = scmp.ne.s32.totalorder %s292, %s293
    %p305 = scmp.eq.s32.totalorder %s31, 1
    %p306 = por %p304, %p305
    %p308 = scmp.ne.s32.totalorder %s293, %s307
    %p309 = scmp.eq.s32.totalorder %s31, 0
    %p310 = por %p308, %p309
    %s312 = sadd.s32 %s311, 1
    %p315 = scmp.eq.s32.totalorder %s25, 1
    %p316 = scmp.ne.s32.totalorder %s311, %s313
    %p317 = scmp.eq.s32.totalorder %s25, 0
    %p318 = por %p316, %p317
    %p319 = scmp.ne.s32.totalorder %s311, %s313
    %p320 = scmp.eq.s32.totalorder %s30, 1
    %p321 = por %p319, %p320
    %p322 = scmp.ne.s32.totalorder %s313, %s314
    %p323 = scmp.eq.s32.totalorder %s30, 0
    %p324 = por %p322, %p323
    %p325 = scmp.ne.s32.totalorder %s313, %s314
    %p326 = scmp.eq.s32.totalorder %s31, 1
    %p327 = por %p325, %p326
    %p329 = scmp.ne.s32.totalorder %s314, %s328
    %p330 = scmp.eq.s32.totalorder %s31, 0
    %p331 = por %p329, %p330
    %s333 = sadd.s32 %s332, 1
    %p336 = scmp.eq.s32.totalorder %s25, 1
    %p337 = scmp.ne.s32.totalorder %s332, %s334
    %p338 = scmp.eq.s32.totalorder %s25, 0
    %p339 = por %p337, %p338
    %p340 = scmp.ne.s32.totalorder %s332, %s334
    %p341 = scmp.eq.s32.totalorder %s30, 1
    %p342 = por %p340, %p341
    %p343 = scmp.ne.s32.totalorder %s334, %s335
    %p344 = scmp.eq.s32.totalorder %s30, 0
    %p345 = por %p343, %p344
    %p346 = scmp.ne.s32.totalorder %s334, %s335
    %p347 = scmp.eq.s32.totalorder %s31, 1
    %p348 = por %p346, %p347
    %p350 = scmp.ne.s32.totalorder %s335, %s349
    %p351 = scmp.eq.s32.totalorder %s31, 0
    %p352 = por %p350, %p351
    %s354 = sadd.s32 %s353, 1
    %p357 = scmp.eq.s32.totalorder %s25, 1
    %p358 = scmp.ne.s32.totalorder %s353, %s355
    %p359 = scmp.eq.s32.totalorder %s25, 0
    %p360 = por %p358, %p359
    %p361 = scmp.ne.s32.totalorder %s353, %s355
    %p362 = scmp.eq.s32.totalorder %s30, 1
    %p363 = por %p361, %p362
    %p364 = scmp.ne.s32.totalorder %s355, %s356
    %p365 = scmp.eq.s32.totalorder %s30, 0
    %p366 = por %p364, %p365
    %p367 = scmp.ne.s32.totalorder %s355, %s356
    %p368 = scmp.eq.s32.totalorder %s31, 1
    %p369 = por %p367, %p368
    %p371 = scmp.ne.s32.totalorder %s356, %s370
    %p372 = scmp.eq.s32.totalorder %s31, 0
    %p373 = por %p371, %p372
    %s375 = sadd.s32 %s374, 1
    %p378 = scmp.eq.s32.totalorder %s25, 1
    %p379 = scmp.ne.s32.totalorder %s374, %s376
    %p380 = scmp.eq.s32.totalorder %s25, 0
    %p381 = por %p379, %p380
    %p382 = scmp.ne.s32.totalorder %s374, %s376
    %p383 = scmp.eq.s32.totalorder %s30, 1
    %p384 = por %p382, %p383
    %p385 = scmp.ne.s32.totalorder %s376, %s377
    %p386 = scmp.eq.s32.totalorder %s30, 0
    %p387 = por %p385, %p386
    %p388 = scmp.ne.s32.totalorder %s376, %s377
    %p389 = scmp.eq.s32.totalorder %s31, 1
    %p390 = por %p388, %p389
    %p392 = scmp.ne.s32.totalorder %s377, %s391
    %p393 = scmp.eq.s32.totalorder %s31, 0
    %p394 = por %p392, %p393
    %s396 = sadd.s32 %s395, 1
    %p399 = scmp.eq.s32.totalorder %s25, 1
    %p400 = scmp.ne.s32.totalorder %s395, %s397
    %p401 = scmp.eq.s32.totalorder %s25, 0
    %p402 = por %p400, %p401
    %p403 = scmp.ne.s32.totalorder %s395, %s397
    %p404 = scmp.eq.s32.totalorder %s30, 1
    %p405 = por %p403, %p404
    %p406 = scmp.ne.s32.totalorder %s397, %s398
    %p407 = scmp.eq.s32.totalorder %s30, 0
    %p408 = por %p406, %p407
    %p409 = scmp.ne.s32.totalorder %s397, %s398
    %p410 = scmp.eq.s32.totalorder %s31, 1
    %p411 = por %p409, %p410
    %p413 = scmp.ne.s32.totalorder %s398, %s412
    %p414 = scmp.eq.s32.totalorder %s31, 0
    %p415 = por %p413, %p414
    %s417 = sadd.s32 %s416, 1
    %p420 = scmp.eq.s32.totalorder %s25, 1
    %p421 = scmp.ne.s32.totalorder %s416, %s418
    %p422 = scmp.eq.s32.totalorder %s25, 0
    %p423 = por %p421, %p422
    %p424 = scmp.ne.s32.totalorder %s416, %s418
    %p425 = scmp.eq.s32.totalorder %s30, 1
    %p426 = por %p424, %p425
    %p427 = scmp.ne.s32.totalorder %s418, %s419
    %p428 = scmp.eq.s32.totalorder %s30, 0
    %p429 = por %p427, %p428
    %p430 = scmp.ne.s32.totalorder %s418, %s419
    %p431 = scmp.eq.s32.totalorder %s31, 1
    %p432 = por %p430, %p431
    %p434 = scmp.ne.s32.totalorder %s419, %s433
    %p435 = scmp.eq.s32.totalorder %s31, 0
    %p436 = por %p434, %p435
    %s437 = ssub.s32 %s25, %s32
    %p438 = scmp.eq.s32.totalorder %s437, 0
    %s440 = sadd.s32 %s439, 1
    %s441 = scalar_select %p438, %s439, %s440
    %p444 = pneg %p438
    %p445 = scmp.eq.s32.totalorder %s25, 1
    %p446 = por %p444, %p445
    %p447 = scmp.ne.s32.totalorder %s439, %s442
    %p448 = scmp.eq.s32.totalorder %s25, 0
    %p449 = por %p447, %p448
    %p450 = scmp.ne.s32.totalorder %s439, %s442
    %p451 = scmp.eq.s32.totalorder %s30, 1
    %p452 = por %p450, %p451
    %p453 = scmp.ne.s32.totalorder %s442, %s443
    %p454 = scmp.eq.s32.totalorder %s30, 0
    %p455 = por %p453, %p454
    %p456 = scmp.ne.s32.totalorder %s442, %s443
    %p457 = scmp.eq.s32.totalorder %s31, 1
    %p458 = por %p456, %p457
    %p460 = scmp.ne.s32.totalorder %s443, %s459
    %p461 = scmp.eq.s32.totalorder %s31, 0
    %p462 = por %p460, %p461
    %p463 = scmp.le.s32.totalorder 1, %s25
    %p464 = scmp.lt.s32.totalorder %s25, 3
    %p465 = pnand %p463, %p464
    %p466 = pneg %p465
    // Predicated region
    $region9: #{block_with_cnn.1} parent=5 // pred_check
      _
    $region10: #{block_with_cnn.1} parent=5 // pred_check_branch
      %468 = sbr.rel (%p465) target = $region12
    $region11: #{block_with_cnn.1} parent=5 // pred_region
      %s469 = ssub.s32 %s25, 1
      // Predicated region
      $region13: #{block_with_cnn.1} parent=11 // pred_check
        %p470 = pneg %p72
      $region14: #{block_with_cnn.1} parent=11 // pred_check_branch
        %472 = sbr.rel (%p470) target = $region16
      $region15: #{block_with_cnn.1} parent=11 // pred_region
        _
      $region16: #{block_with_cnn.1} parent=11 // pred_fallthru
        _
      // Predicated region
      $region17: #{block_with_cnn.1} parent=11 // pred_check
        %p473 = pneg %p93
      $region18: #{block_with_cnn.1} parent=11 // pred_check_branch
        %475 = sbr.rel (%p473) target = $region20
      $region19: #{block_with_cnn.1} parent=11 // pred_region
        _
      $region20: #{block_with_cnn.1} parent=11 // pred_fallthru
        _
      // Predicated region
      $region21: #{block_with_cnn.1} parent=11 // pred_check
        %p476 = pneg %p114
      $region22: #{block_with_cnn.1} parent=11 // pred_check_branch
        %478 = sbr.rel (%p476) target = $region24
      $region23: #{block_with_cnn.1} parent=11 // pred_region
        _
      $region24: #{block_with_cnn.1} parent=11 // pred_fallthru
        _
      // Predicated region
      $region25: #{block_with_cnn.1} parent=11 // pred_check
        %p479 = pneg %p135
      $region26: #{block_with_cnn.1} parent=11 // pred_check_branch
        %481 = sbr.rel (%p479) target = $region28
      $region27: #{block_with_cnn.1} parent=11 // pred_region
        _
      $region28: #{block_with_cnn.1} parent=11 // pred_fallthru
        _
      // Predicated region
      $region29: #{block_with_cnn.1} parent=11 // pred_check
        %p482 = pneg %p156
      $region30: #{block_with_cnn.1} parent=11 // pred_check_branch
        %484 = sbr.rel (%p482) target = $region32
      $region31: #{block_with_cnn.1} parent=11 // pred_region
        _
      $region32: #{block_with_cnn.1} parent=11 // pred_fallthru
        _
      // Predicated region
      $region33: #{block_with_cnn.1} parent=11 // pred_check
        %p485 = pneg %p177
      $region34: #{block_with_cnn.1} parent=11 // pred_check_branch
        %487 = sbr.rel (%p485) target = $region36
      $region35: #{block_with_cnn.1} parent=11 // pred_region
        _
      $region36: #{block_with_cnn.1} parent=11 // pred_fallthru
        _
      // Predicated region
      $region37: #{block_with_cnn.1} parent=11 // pred_check
        %p488 = pneg %p198
      $region38: #{block_with_cnn.1} parent=11 // pred_check_branch
        %490 = sbr.rel (%p488) target = $region40
      $region39: #{block_with_cnn.1} parent=11 // pred_region
        _
      $region40: #{block_with_cnn.1} parent=11 // pred_fallthru
        _
      // Predicated region
      $region41: #{block_with_cnn.1} parent=11 // pred_check
        %p491 = pneg %p219
      $region42: #{block_with_cnn.1} parent=11 // pred_check_branch
        %493 = sbr.rel (%p491) target = $region44
      $region43: #{block_with_cnn.1} parent=11 // pred_region
        _
      $region44: #{block_with_cnn.1} parent=11 // pred_fallthru
        _
      // Predicated region
      $region45: #{block_with_cnn.1} parent=11 // pred_check
        %p494 = pneg %p240
      $region46: #{block_with_cnn.1} parent=11 // pred_check_branch
        %496 = sbr.rel (%p494) target = $region48
      $region47: #{block_with_cnn.1} parent=11 // pred_region
        _
      $region48: #{block_with_cnn.1} parent=11 // pred_fallthru
        _
      // Predicated region
      $region49: #{block_with_cnn.1} parent=11 // pred_check
        %p497 = pneg %p261
      $region50: #{block_with_cnn.1} parent=11 // pred_check_branch
        %499 = sbr.rel (%p497) target = $region52
      $region51: #{block_with_cnn.1} parent=11 // pred_region
        _
      $region52: #{block_with_cnn.1} parent=11 // pred_fallthru
        _
      // Predicated region
      $region53: #{block_with_cnn.1} parent=11 // pred_check
        %p500 = pneg %p282
      $region54: #{block_with_cnn.1} parent=11 // pred_check_branch
        %502 = sbr.rel (%p500) target = $region56
      $region55: #{block_with_cnn.1} parent=11 // pred_region
        _
      $region56: #{block_with_cnn.1} parent=11 // pred_fallthru
        _
      // Predicated region
      $region57: #{block_with_cnn.1} parent=11 // pred_check
        %p503 = pneg %p303
      $region58: #{block_with_cnn.1} parent=11 // pred_check_branch
        %505 = sbr.rel (%p503) target = $region60
      $region59: #{block_with_cnn.1} parent=11 // pred_region
        _
      $region60: #{block_with_cnn.1} parent=11 // pred_fallthru
        _
      // Predicated region
      $region61: #{block_with_cnn.1} parent=11 // pred_check
        %p506 = pneg %p324
      $region62: #{block_with_cnn.1} parent=11 // pred_check_branch
        %508 = sbr.rel (%p506) target = $region64
      $region63: #{block_with_cnn.1} parent=11 // pred_region
        _
      $region64: #{block_with_cnn.1} parent=11 // pred_fallthru
        _
      // Predicated region
      $region65: #{block_with_cnn.1} parent=11 // pred_check
        %p509 = pneg %p345
      $region66: #{block_with_cnn.1} parent=11 // pred_check_branch
        %511 = sbr.rel (%p509) target = $region68
      $region67: #{block_with_cnn.1} parent=11 // pred_region
        _
      $region68: #{block_with_cnn.1} parent=11 // pred_fallthru
        _
      // Predicated region
      $region69: #{block_with_cnn.1} parent=11 // pred_check
        %p512 = pneg %p366
      $region70: #{block_with_cnn.1} parent=11 // pred_check_branch
        %514 = sbr.rel (%p512) target = $region72
      $region71: #{block_with_cnn.1} parent=11 // pred_region
        _
      $region72: #{block_with_cnn.1} parent=11 // pred_fallthru
        _
      // Predicated region
      $region73: #{block_with_cnn.1} parent=11 // pred_check
        %p515 = pneg %p387
      $region74: #{block_with_cnn.1} parent=11 // pred_check_branch
        %517 = sbr.rel (%p515) target = $region76
      $region75: #{block_with_cnn.1} parent=11 // pred_region
        _
      $region76: #{block_with_cnn.1} parent=11 // pred_fallthru
        _
      // Predicated region
      $region77: #{block_with_cnn.1} parent=11 // pred_check
        %p518 = pneg %p408
      $region78: #{block_with_cnn.1} parent=11 // pred_check_branch
        %520 = sbr.rel (%p518) target = $region80
      $region79: #{block_with_cnn.1} parent=11 // pred_region
        _
      $region80: #{block_with_cnn.1} parent=11 // pred_fallthru
        _
      // Predicated region
      $region81: #{block_with_cnn.1} parent=11 // pred_check
        %p521 = pneg %p429
      $region82: #{block_with_cnn.1} parent=11 // pred_check_branch
        %523 = sbr.rel (%p521) target = $region84
      $region83: #{block_with_cnn.1} parent=11 // pred_region
        _
      $region84: #{block_with_cnn.1} parent=11 // pred_fallthru
        _
    $region12: #{block_with_cnn.1} parent=5 // pred_fallthru
      _
    %p524 = scmp.lt.s32.totalorder %s25, 2
    // Predicated region
    $region85: #{block_with_cnn.1} parent=5 // pred_check
      %p525 = pneg %p524
    $region86: #{block_with_cnn.1} parent=5 // pred_check_branch
      %527 = sbr.rel (%p525) target = $region88
    $region87: #{block_with_cnn.1} parent=5 // pred_region
      // Predicated region
      $region89: #{block_with_cnn.1} parent=87 // pred_check
        %p528 = pneg %p45
      $region90: #{block_with_cnn.1} parent=87 // pred_check_branch
        %530 = sbr.rel (%p528) target = $region92
      $region91: #{block_with_cnn.1} parent=87 // pred_region
        %p531 = scmp.lt.s32.totalorder %s25, 1
        %s532 = scalar_select %p531, %s25, 1
        %s533 = smul.addr %s532, 9
        %s534 = smul.addr %s533, 8
        %s535 = scalar_lea.vmem %s0, %s534
      $region92: #{block_with_cnn.1} parent=87 // pred_fallthru
        _
    $region88: #{block_with_cnn.1} parent=5 // pred_fallthru
      _
    %p536 = scmp.le.s32.totalorder 1, %s25
    %p537 = scmp.lt.s32.totalorder %s25, 3
    %p538 = pnand %p536, %p537
    %p539 = pneg %p538
    // Predicated region
    $region93: #{block_with_cnn.1} parent=5 // pred_check
      _
    $region94: #{block_with_cnn.1} parent=5 // pred_check_branch
      %541 = sbr.rel (%p538) target = $region96
    $region95: #{block_with_cnn.1} parent=5 // pred_region
      %s542 = ssub.s32 %s25, 1
      %p543 = scmp.lt.s32.totalorder %s30, 1
      %s544 = scalar_select %p543, %s30, 1
      %s545 = smul.addr %s544, 9
      %s546 = smul.addr %s545, 8
      %s547 = scalar_lea.vmem %s0, %s546
      %p548 = pneg %p51
      %p549 = pneg %p48
      %p550 = pneg %p72
      %p551 = pneg %p69
      %p552 = pneg %p93
      %p553 = pneg %p90
      %p554 = pneg %p114
      %p555 = pneg %p111
      %p556 = pneg %p135
      %p557 = pneg %p132
      %p558 = pneg %p156
      %p559 = pneg %p153
      %p560 = pneg %p177
      %p561 = pneg %p174
      %p562 = pneg %p198
      %p563 = pneg %p195
      %p564 = pneg %p219
      %p565 = pneg %p216
      %p566 = pneg %p240
      %p567 = pneg %p237
      %p568 = pneg %p261
      %p569 = pneg %p258
      %p570 = pneg %p282
      %p571 = pneg %p279
      %p572 = pneg %p303
      %p573 = pneg %p300
      %p574 = pneg %p324
      %p575 = pneg %p321
      %p576 = pneg %p345
      %p577 = pneg %p342
      %p578 = pneg %p366
      %p579 = pneg %p363
      %p580 = pneg %p387
      %p581 = pneg %p384
      %p582 = pneg %p408
      %p583 = pneg %p405
      %p584 = pneg %p429
      %p585 = pneg %p426
      %p586 = pneg %p455
      %p587 = pneg %p452
      %p588 = scmp.lt.s32.totalorder %s30, 1
      %s589 = scalar_select %p588, %s30, 1
      %s590 = smul.addr %s589, 9
      %s591 = smul.addr %s590, 8
      %s592 = scalar_lea.vmem %s19, %s591
      %p593 = scmp.lt.s32.totalorder %s30, 1
      %s594 = scalar_select %p593, %s30, 1
      %s595 = smul.addr %s594, 9
      %s596 = smul.addr %s595, 8
      %s597 = scalar_lea.vmem %s0, %s596
      %p598 = scmp.lt.s32.totalorder %s30, 1
      %s599 = scalar_select %p598, %s30, 1
      %s600 = smul.addr %s599, 9
      %s601 = smul.addr %s600, 8
      %s602 = scalar_lea.vmem %s19, %s601
      %v603 = vld [vmem:[%s597] sm:$0xff]
      %v604 = vld [vmem:[%s597 + $0x8] sm:$0xff]
      %v605 = vld [vmem:[%s597 + $0x10] sm:$0xff]
      %v606 = vld [vmem:[%s597 + $0x18] sm:$0xff]
      %v607 = vld [vmem:[%s597 + $0x20] sm:$0xff]
      %v608 = vld [vmem:[%s597 + $0x28] sm:$0xff]
      %v609 = vld [vmem:[%s597 + $0x30] sm:$0xff]
      %v610 = vld [vmem:[%s597 + $0x38] sm:$0xff]
      %v611 = vld [vmem:[%s597 + $0x40] sm:$0x1]
      %vm612 = vcmask 261120
      %v613 = vsel %vm612, %v603, 0.0
      %614 = vadd.xlane.f32.xlu0 %v613
      %v615 = vpop.xlane.xlu0 %614
      %v616 = vsel %vm612, %v604, 0.0
      %617 = vadd.xlane.f32.xlu0 %v616
      %v618 = vpop.xlane.xlu0 %617
      %v619 = vsel %vm612, %v605, 0.0
      %620 = vadd.xlane.f32.xlu0 %v619
      %v621 = vpop.xlane.xlu0 %620
      %v622 = vsel %vm612, %v606, 0.0
      %623 = vadd.xlane.f32.xlu0 %v622
      %v624 = vpop.xlane.xlu0 %623
      %v625 = vsel %vm612, %v607, 0.0
      %626 = vadd.xlane.f32.xlu0 %v625
      %v627 = vpop.xlane.xlu0 %626
      %v628 = vsel %vm612, %v608, 0.0
      %629 = vadd.xlane.f32.xlu0 %v628
      %v630 = vpop.xlane.xlu0 %629
      %v631 = vsel %vm612, %v609, 0.0
      %632 = vadd.xlane.f32.xlu0 %v631
      %v633 = vpop.xlane.xlu0 %632
      %v634 = vsel %vm612, %v610, 0.0
      %635 = vadd.xlane.f32.xlu0 %v634
      %v636 = vpop.xlane.xlu0 %635
      %vm637 = vcmask 253952
      %v638 = vsel %vm637, %v611, 0.0
      %639 = vadd.xlane.f32.xlu0 %v638
      %v640 = vpop.xlane.xlu0 %639
      %v641 = vrcp.pop 32.0
      %v642 = vmul.f32 %v615, %v641
      %v643 = vmul.f32 %v618, %v641
      %v644 = vmul.f32 %v621, %v641
      %v645 = vmul.f32 %v624, %v641
      %v646 = vmul.f32 %v627, %v641
      %v647 = vmul.f32 %v630, %v641
      %v648 = vmul.f32 %v633, %v641
      %v649 = vmul.f32 %v636, %v641
      %v650 = vmul.f32 %v640, %v641
      %v651 = vsub.f32 %v603, %v642
      %v652 = vsub.f32 %v604, %v643
      %v653 = vsub.f32 %v605, %v644
      %v654 = vsub.f32 %v606, %v645
      %v655 = vsub.f32 %v607, %v646
      %v656 = vsub.f32 %v608, %v647
      %v657 = vsub.f32 %v609, %v648
      %v658 = vsub.f32 %v610, %v649
      %v659 = vsub.f32 %v611, %v650
      %v660 = vmul.f32 %v651, %v651
      %v661 = vmul.f32 %v652, %v652
      %v662 = vmul.f32 %v653, %v653
      %v663 = vmul.f32 %v654, %v654
      %v664 = vmul.f32 %v655, %v655
      %v665 = vmul.f32 %v656, %v656
      %v666 = vmul.f32 %v657, %v657
      %v667 = vmul.f32 %v658, %v658
      %v668 = vmul.f32 %v659, %v659
      %v669 = vsel %vm612, %v660, 0.0
      %670 = vadd.xlane.f32.xlu0 %v669
      %v671 = vpop.xlane.xlu0 %670
      %v672 = vsel %vm612, %v661, 0.0
      %673 = vadd.xlane.f32.xlu0 %v672
      %v674 = vpop.xlane.xlu0 %673
      %v675 = vsel %vm612, %v662, 0.0
      %676 = vadd.xlane.f32.xlu0 %v675
      %v677 = vpop.xlane.xlu0 %676
      %v678 = vsel %vm612, %v663, 0.0
      %679 = vadd.xlane.f32.xlu0 %v678
      %v680 = vpop.xlane.xlu0 %679
      %v681 = vsel %vm612, %v664, 0.0
      %682 = vadd.xlane.f32.xlu0 %v681
      %v683 = vpop.xlane.xlu0 %682
      %v684 = vsel %vm612, %v665, 0.0
      %685 = vadd.xlane.f32.xlu0 %v684
      %v686 = vpop.xlane.xlu0 %685
      %v687 = vsel %vm612, %v666, 0.0
      %688 = vadd.xlane.f32.xlu0 %v687
      %v689 = vpop.xlane.xlu0 %688
      %v690 = vsel %vm612, %v667, 0.0
      %691 = vadd.xlane.f32.xlu0 %v690
      %v692 = vpop.xlane.xlu0 %691
      %v693 = vsel %vm637, %v668, 0.0
      %694 = vadd.xlane.f32.xlu0 %v693
      %v695 = vpop.xlane.xlu0 %694
      %v696 = vmul.f32 %v671, %v641
      %v697 = vmul.f32 %v674, %v641
      %v698 = vmul.f32 %v677, %v641
      %v699 = vmul.f32 %v680, %v641
      %v700 = vmul.f32 %v683, %v641
      %v701 = vmul.f32 %v686, %v641
      %v702 = vmul.f32 %v689, %v641
      %v703 = vmul.f32 %v692, %v641
      %v704 = vmul.f32 %v695, %v641
      %v705 = vadd.f32 %v696, 1e-06
      %v706 = vadd.f32 %v697, 1e-06
      %v707 = vadd.f32 %v698, 1e-06
      %v708 = vadd.f32 %v699, 1e-06
      %v709 = vadd.f32 %v700, 1e-06
      %v710 = vadd.f32 %v701, 1e-06
      %v711 = vadd.f32 %v702, 1e-06
      %v712 = vadd.f32 %v703, 1e-06
      %v713 = vadd.f32 %v704, 1e-06
      %v714 = vrsqrt.pop %v705
      %v715 = vrsqrt.pop %v706
      %v716 = vrsqrt.pop %v707
      %v717 = vrsqrt.pop %v708
      %v718 = vrsqrt.pop %v709
      %v719 = vrsqrt.pop %v710
      %v720 = vrsqrt.pop %v711
      %v721 = vrsqrt.pop %v712
      %v722 = vrsqrt.pop %v713
      %v723 = vmul.f32 %v651, %v714
      %v724 = vmul.f32 %v652, %v715
      %v725 = vmul.f32 %v653, %v716
      %v726 = vmul.f32 %v654, %v717
      %v727 = vmul.f32 %v655, %v718
      %v728 = vmul.f32 %v656, %v719
      %v729 = vmul.f32 %v657, %v720
      %v730 = vmul.f32 %v658, %v721
      %v731 = vmul.f32 %v659, %v722
      %v732 = vld [vmem:[%s1] sm:$0x1]
      %v734 = vlaneseq
      %v735 = vshrl.u32 %v734, 7
      %v736 = vsub.s32 0, %v735
      %v737 = vrot.slane %v732, %v736
      %v739 = vmul.f32 %v723, %v737
      %v740 = vmul.f32 %v724, %v737
      %v741 = vmul.f32 %v725, %v737
      %v742 = vmul.f32 %v726, %v737
      %v743 = vmul.f32 %v727, %v737
      %v744 = vmul.f32 %v728, %v737
      %v745 = vmul.f32 %v729, %v737
      %v746 = vmul.f32 %v730, %v737
      %v747 = vmul.f32 %v731, %v737
      %v748 = vld [vmem:[%s2] sm:$0x1]
      %v750 = vlaneseq
      %v751 = vshrl.u32 %v750, 7
      %v752 = vsub.s32 0, %v751
      %v753 = vrot.slane %v748, %v752
      %v755 = vadd.f32 %v739, %v753
      %v756 = vadd.f32 %v740, %v753
      %v757 = vadd.f32 %v741, %v753
      %v758 = vadd.f32 %v742, %v753
      %v759 = vadd.f32 %v743, %v753
      %v760 = vadd.f32 %v744, %v753
      %v761 = vadd.f32 %v745, %v753
      %v762 = vadd.f32 %v746, %v753
      %v763 = vadd.f32 %v747, %v753
      %v764 = vld [vmem:[%s3] sm:$0xff]
      %v765 = vld [vmem:[%s3 + $0x8] sm:$0xff]
      %v766 = vld [vmem:[%s3 + $0x10] sm:$0xff]
      %v767 = vld [vmem:[%s3 + $0x18] sm:$0xff]
      %v769 = vsel %vm612, %v755, 0
      %v772 = vsel %vm612, %v756, 0
      %v775 = vsel %vm612, %v757, 0
      %v778 = vsel %vm612, %v758, 0
      %v781 = vsel %vm612, %v759, 0
      %v784 = vsel %vm612, %v760, 0
      %v787 = vsel %vm612, %v761, 0
      %v790 = vsel %vm612, %v762, 0
      %v793 = vsel %vm612, %v763, 0
      %795 = vmatprep.subr.mxu0 0.0
      %796 = vmatpush1.msra.mxu0 %v764
      %797 = vmatprep.subr.mxu0 0.0
      %798 = vmatpush1.msra.mxu0 %v765
      %799 = vmatprep.subr.mxu0 0.0
      %800 = vmatpush1.msra.mxu0 %v766
      %801 = vmatprep.subr.mxu0 0.0
      %802 = vmatpush1.msra.mxu0 %v767
      %803 = vmatprep.subr.mxu0 0.0
      %804 = vmatpush1.msra.mxu0 0.0
      %805 = vmatprep.subr.mxu0 0.0
      %806 = vmatpush1.msra.mxu0 0.0
      %807 = vmatprep.subr.mxu0 0.0
      %808 = vmatpush1.msra.mxu0 0.0
      %809 = vmatprep.subr.mxu0 0.0
      %810 = vmatpush1.msra.mxu0 0.0
      %811 = vmatprep.subr.mxu0 0.0
      %812 = vmatpush1.msra.mxu0 0.0
      %813 = vmatprep.subr.mxu0 0.0
      %814 = vmatpush1.msra.mxu0 0.0
      %815 = vmatprep.subr.mxu0 0.0
      %816 = vmatpush1.msra.mxu0 0.0
      %817 = vmatprep.subr.mxu0 0.0
      %818 = vmatpush1.msra.mxu0 0.0
      %819 = vmatprep.subr.mxu0 0.0
      %820 = vmatpush1.msra.mxu0 0.0
      %821 = vmatprep.subr.mxu0 0.0
      %822 = vmatpush1.msra.mxu0 0.0
      %823 = vmatprep.subr.mxu0 0.0
      %824 = vmatpush1.msra.mxu0 0.0
      %825 = vmatprep.subr.mxu0 0.0
      %826 = vmatpush1.msra.mxu0 0.0
      %827 = vmatprep.subr.mxu0 0.0
      %828 = vmatpush1.msra.mxu0 0.0
      %829 = vmatprep.subr.mxu0 0.0
      %830 = vmatpush1.msra.mxu0 0.0
      %831 = vmatprep.subr.mxu0 0.0
      %832 = vmatpush1.msra.mxu0 0.0
      %833 = vmatprep.subr.mxu0 0.0
      %834 = vmatpush1.msra.mxu0 0.0
      %835 = vmatprep.subr.mxu0 0.0
      %836 = vmatpush1.msra.mxu0 0.0
      %837 = vmatprep.subr.mxu0 0.0
      %838 = vmatpush1.msra.mxu0 0.0
      %839 = vmatprep.subr.mxu0 0.0
      %840 = vmatpush1.msra.mxu0 0.0
      %841 = vmatprep.subr.mxu0 0.0
      %842 = vmatpush1.msra.mxu0 0.0
      %843 = vmatprep.subr.mxu0 0.0
      %844 = vmatpush1.msra.mxu0 0.0
      %845 = vmatprep.subr.mxu0 0.0
      %846 = vmatpush1.msra.mxu0 0.0
      %847 = vmatprep.subr.mxu0 0.0
      %848 = vmatpush1.msra.mxu0 0.0
      %849 = vmatprep.subr.mxu0 0.0
      %850 = vmatpush1.msra.mxu0 0.0
      %851 = vmatprep.subr.mxu0 0.0
      %852 = vmatpush1.msra.mxu0 0.0
      %853 = vmatprep.subr.mxu0 0.0
      %854 = vmatpush1.msra.mxu0 0.0
      %855 = vmatprep.subr.mxu0 0.0
      %856 = vmatpush1.msra.mxu0 0.0
      %857 = vmatprep.subr.mxu0 0.0
      %858 = vmatpush1.msra.mxu0 0.0
      %859 = vmatprep.mubr.f32.mxu0 0.0
      %860 = vmatmul.mubr.f32.gmra.mrb[0].mxu0 %v769
      %v861 = vpop.f32.mrb[0].mxu0
      %v862 = vadd.f32 0.0, %v861
      %v863 = vpop.f32.mrb[0].mxu0
      %864 = vmatprep.mubr.f32.mxu0 0.0
      %865 = vmatmul.mubr.f32.gmra.mrb[0].mxu0 %v772
      %v866 = vpop.f32.mrb[0].mxu0
      %v867 = vadd.f32 0.0, %v866
      %v868 = vpop.f32.mrb[0].mxu0
      %869 = vmatprep.mubr.f32.mxu0 0.0
      %870 = vmatmul.mubr.f32.gmra.mrb[0].mxu0 %v775
      %v871 = vpop.f32.mrb[0].mxu0
      %v872 = vadd.f32 0.0, %v871
      %v873 = vpop.f32.mrb[0].mxu0
      %874 = vmatprep.mubr.f32.mxu0 0.0
      %875 = vmatmul.mubr.f32.gmra.mrb[0].mxu0 %v778
      %v876 = vpop.f32.mrb[0].mxu0
      %v877 = vadd.f32 0.0, %v876
      %v878 = vpop.f32.mrb[0].mxu0
      %879 = vmatprep.mubr.f32.mxu0 0.0
      %880 = vmatmul.mubr.f32.gmra.mrb[0].mxu0 %v781
      %v881 = vpop.f32.mrb[0].mxu0
      %v882 = vadd.f32 0.0, %v881
      %v883 = vpop.f32.mrb[0].mxu0
      %884 = vmatprep.mubr.f32.mxu0 0.0
      %885 = vmatmul.mubr.f32.gmra.mrb[0].mxu0 %v784
      %v886 = vpop.f32.mrb[0].mxu0
      %v887 = vadd.f32 0.0, %v886
      %v888 = vpop.f32.mrb[0].mxu0
      %889 = vmatprep.mubr.f32.mxu0 0.0
      %890 = vmatmul.mubr.f32.gmra.mrb[0].mxu0 %v787
      %v891 = vpop.f32.mrb[0].mxu0
      %v892 = vadd.f32 0.0, %v891
      %v893 = vpop.f32.mrb[0].mxu0
      %894 = vmatprep.mubr.f32.mxu0 0.0
      %895 = vmatmul.mubr.f32.gmra.mrb[0].mxu0 %v790
      %v896 = vpop.f32.mrb[0].mxu0
      %v897 = vadd.f32 0.0, %v896
      %v898 = vpop.f32.mrb[0].mxu0
      %899 = vmatprep.mubr.f32.mxu0 0.0
      %900 = vmatmul.mubr.f32.gmra.mrb[0].mxu0 %v793
      %v901 = vpop.f32.mrb[0].mxu0
      %v902 = vadd.f32 0.0, %v901
      %v903 = vpop.f32.mrb[0].mxu0
      %904 = vdwg.mxu0
      %914 = vrot.lane.b32.xlu0 %v862, 96
      %v915 = vpop.permute.xlu0 %914
      %916 = vrot.lane.b32.xlu0 %v867, 96
      %v917 = vpop.permute.xlu0 %916
      %918 = vrot.lane.b32.xlu0 %v872, 96
      %v919 = vpop.permute.xlu0 %918
      %920 = vrot.lane.b32.xlu0 %v877, 96
      %v921 = vpop.permute.xlu0 %920
      %922 = vrot.lane.b32.xlu0 %v882, 96
      %v923 = vpop.permute.xlu0 %922
      %924 = vrot.lane.b32.xlu0 %v887, 96
      %v925 = vpop.permute.xlu0 %924
      %926 = vrot.lane.b32.xlu0 %v892, 96
      %v927 = vpop.permute.xlu0 %926
      %928 = vrot.lane.b32.xlu0 %v897, 96
      %v929 = vpop.permute.xlu0 %928
      %930 = vrot.lane.b32.xlu0 %v902, 96
      %v931 = vpop.permute.xlu0 %930
      %vm932 = vcmask 64512
      %v933 = vsel %vm932, %v862, 0
      %v935 = vsel %vm932, %v867, 0
      %v937 = vsel %vm932, %v872, 0
      %v939 = vsel %vm932, %v877, 0
      %v941 = vsel %vm932, %v882, 0
      %v943 = vsel %vm932, %v887, 0
      %v945 = vsel %vm932, %v892, 0
      %v947 = vsel %vm932, %v897, 0
      %v949 = vsel %vm932, %v902, 0
      %v951 = vsel %vm932, %v915, 0
      %v953 = vsel %vm932, %v917, 0
      %v955 = vsel %vm932, %v919, 0
      %v957 = vsel %vm932, %v921, 0
      %v959 = vsel %vm932, %v923, 0
      %v961 = vsel %vm932, %v925, 0
      %v963 = vsel %vm932, %v927, 0
      %v965 = vsel %vm932, %v929, 0
      %v967 = vsel %vm932, %v931, 0
      %969 = vmatprep.subr.mxu0 0.0
      %970 = vmatpush1.xpose.msra.mxu0 %v951
      %971 = vmatprep.subr.mxu0 0.0
      %972 = vmatpush1.xpose.msra.mxu0 %v953
      %973 = vmatprep.subr.mxu0 0.0
      %974 = vmatpush1.xpose.msra.mxu0 %v955
      %975 = vmatprep.subr.mxu0 0.0
      %976 = vmatpush1.xpose.msra.mxu0 %v957
      %977 = vmatprep.subr.mxu0 0.0
      %978 = vmatpush1.xpose.msra.mxu0 %v959
      %979 = vmatprep.subr.mxu0 0.0
      %980 = vmatpush1.xpose.msra.mxu0 %v961
      %981 = vmatprep.subr.mxu0 0.0
      %982 = vmatpush1.xpose.msra.mxu0 %v963
      %983 = vmatprep.subr.mxu0 0.0
      %984 = vmatpush1.xpose.msra.mxu0 %v965
      %985 = vmatprep.subr.mxu0 0.0
      %986 = vmatpush1.xpose.msra.mxu0 %v967
      %987 = vmatprep.subr.mxu0 0.0
      %988 = vmatpush1.xpose.msra.mxu0 0.0
      %989 = vmatprep.subr.mxu0 0.0
      %990 = vmatpush1.xpose.msra.mxu0 0.0
      %991 = vmatprep.subr.mxu0 0.0
      %992 = vmatpush1.xpose.msra.mxu0 0.0
      %993 = vmatprep.subr.mxu0 0.0
      %994 = vmatpush1.xpose.msra.mxu0 0.0
      %995 = vmatprep.subr.mxu0 0.0
      %996 = vmatpush1.xpose.msra.mxu0 0.0
      %997 = vmatprep.subr.mxu0 0.0
      %998 = vmatpush1.xpose.msra.mxu0 0.0
      %999 = vmatprep.subr.mxu0 0.0
      %1000 = vmatpush1.xpose.msra.mxu0 0.0
      %1001 = vmatprep.subr.mxu0 0.0
      %1002 = vmatpush1.xpose.msra.mxu0 0.0
      %1003 = vmatprep.subr.mxu0 0.0
      %1004 = vmatpush1.xpose.msra.mxu0 0.0
      %1005 = vmatprep.subr.mxu0 0.0
      %1006 = vmatpush1.xpose.msra.mxu0 0.0
      %1007 = vmatprep.subr.mxu0 0.0
      %1008 = vmatpush1.xpose.msra.mxu0 0.0
      %1009 = vmatprep.subr.mxu0 0.0
      %1010 = vmatpush1.xpose.msra.mxu0 0.0
      %1011 = vmatprep.subr.mxu0 0.0
      %1012 = vmatpush1.xpose.msra.mxu0 0.0
      %1013 = vmatprep.subr.mxu0 0.0
      %1014 = vmatpush1.xpose.msra.mxu0 0.0
      %1015 = vmatprep.subr.mxu0 0.0
      %1016 = vmatpush1.xpose.msra.mxu0 0.0
      %1017 = vmatprep.subr.mxu0 0.0
      %1018 = vmatpush1.xpose.msra.mxu0 0.0
      %1019 = vmatprep.subr.mxu0 0.0
      %1020 = vmatpush1.xpose.msra.mxu0 0.0
      %1021 = vmatprep.subr.mxu0 0.0
      %1022 = vmatpush1.xpose.msra.mxu0 0.0
      %1023 = vmatprep.subr.mxu0 0.0
      %1024 = vmatpush1.xpose.msra.mxu0 0.0
      %1025 = vmatprep.subr.mxu0 0.0
      %1026 = vmatpush1.xpose.msra.mxu0 0.0
      %1027 = vmatprep.subr.mxu0 0.0
      %1028 = vmatpush1.xpose.msra.mxu0 0.0
      %1029 = vmatprep.subr.mxu0 0.0
      %1030 = vmatpush1.xpose.msra.mxu0 0.0
      %1031 = vmatprep.subr.mxu0 0.0
      %1032 = vmatpush1.xpose.msra.mxu0 0.0
      %1033 = vmatprep.mubr.f32.mxu0 0.0
      %1034 = vmatmul.mubr.f32.gmra.mrb[0].mxu0 %v933
      %v1035 = vpop.f32.mrb[0].mxu0
      %v1036 = vadd.f32 0.0, %v1035
      %v1037 = vpop.f32.mrb[0].mxu0
      %1038 = vmatprep.mubr.f32.mxu0 0.0
      %1039 = vmatmul.mubr.f32.gmra.mrb[0].mxu0 %v935
      %v1040 = vpop.f32.mrb[0].mxu0
      %v1041 = vadd.f32 0.0, %v1040
      %v1042 = vpop.f32.mrb[0].mxu0
      %1043 = vmatprep.mubr.f32.mxu0 0.0
      %1044 = vmatmul.mubr.f32.gmra.mrb[0].mxu0 %v937
      %v1045 = vpop.f32.mrb[0].mxu0
      %v1046 = vadd.f32 0.0, %v1045
      %v1047 = vpop.f32.mrb[0].mxu0
      %1048 = vmatprep.mubr.f32.mxu0 0.0
      %1049 = vmatmul.mubr.f32.gmra.mrb[0].mxu0 %v939
      %v1050 = vpop.f32.mrb[0].mxu0
      %v1051 = vadd.f32 0.0, %v1050
      %v1052 = vpop.f32.mrb[0].mxu0
      %1053 = vmatprep.mubr.f32.mxu0 0.0
      %1054 = vmatmul.mubr.f32.gmra.mrb[0].mxu0 %v941
      %v1055 = vpop.f32.mrb[0].mxu0
      %v1056 = vadd.f32 0.0, %v1055
      %v1057 = vpop.f32.mrb[0].mxu0
      %1058 = vmatprep.mubr.f32.mxu0 0.0
      %1059 = vmatmul.mubr.f32.gmra.mrb[0].mxu0 %v943
      %v1060 = vpop.f32.mrb[0].mxu0
      %v1061 = vadd.f32 0.0, %v1060
      %v1062 = vpop.f32.mrb[0].mxu0
      %1063 = vmatprep.mubr.f32.mxu0 0.0
      %1064 = vmatmul.mubr.f32.gmra.mrb[0].mxu0 %v945
      %v1065 = vpop.f32.mrb[0].mxu0
      %v1066 = vadd.f32 0.0, %v1065
      %v1067 = vpop.f32.mrb[0].mxu0
      %1068 = vmatprep.mubr.f32.mxu0 0.0
      %1069 = vmatmul.mubr.f32.gmra.mrb[0].mxu0 %v947
      %v1070 = vpop.f32.mrb[0].mxu0
      %v1071 = vadd.f32 0.0, %v1070
      %v1072 = vpop.f32.mrb[0].mxu0
      %1073 = vmatprep.mubr.f32.mxu0 0.0
      %1074 = vmatmul.mubr.f32.gmra.mrb[0].mxu0 %v949
      %v1075 = vpop.f32.mrb[0].mxu0
      %v1076 = vadd.f32 0.0, %v1075
      %v1077 = vpop.f32.mrb[0].mxu0
      %1078 = vdwg.mxu0
      %v1079 = vmul.f32 %v1036, 0.35355338
      %v1080 = vmul.f32 %v1041, 0.35355338
      %v1081 = vmul.f32 %v1046, 0.35355338
      %v1082 = vmul.f32 %v1051, 0.35355338
      %v1083 = vmul.f32 %v1056, 0.35355338
      %v1084 = vmul.f32 %v1061, 0.35355338
      %v1085 = vmul.f32 %v1066, 0.35355338
      %v1086 = vmul.f32 %v1071, 0.35355338
      %v1087 = vmul.f32 %v1076, 0.35355338
      %vm1088 = vcmask 531456
      %v1089 = vsel %vm1088, %v1079, -inf
      %1090 = vmax.xlane.f32.xlu0 %v1089
      %v1091 = vpop.xlane.xlu0 %1090
      %v1092 = vsel %vm1088, %v1080, -inf
      %1093 = vmax.xlane.f32.xlu0 %v1092
      %v1094 = vpop.xlane.xlu0 %1093
      %v1095 = vsel %vm1088, %v1081, -inf
      %1096 = vmax.xlane.f32.xlu0 %v1095
      %v1097 = vpop.xlane.xlu0 %1096
      %v1098 = vsel %vm1088, %v1082, -inf
      %1099 = vmax.xlane.f32.xlu0 %v1098
      %v1100 = vpop.xlane.xlu0 %1099
      %v1101 = vsel %vm1088, %v1083, -inf
      %1102 = vmax.xlane.f32.xlu0 %v1101
      %v1103 = vpop.xlane.xlu0 %1102
      %v1104 = vsel %vm1088, %v1084, -inf
      %1105 = vmax.xlane.f32.xlu0 %v1104
      %v1106 = vpop.xlane.xlu0 %1105
      %v1107 = vsel %vm1088, %v1085, -inf
      %1108 = vmax.xlane.f32.xlu0 %v1107
      %v1109 = vpop.xlane.xlu0 %1108
      %v1110 = vsel %vm1088, %v1086, -inf
      %1111 = vmax.xlane.f32.xlu0 %v1110
      %v1112 = vpop.xlane.xlu0 %1111
      %vm1113 = vcmask 524288
      %v1114 = vsel %vm1113, %v1087, -inf
      %1115 = vmax.xlane.f32.xlu0 %v1114
      %v1116 = vpop.xlane.xlu0 %1115
      %v1117 = vsub.f32 %v1079, %v1091
      %v1118 = vsub.f32 %v1080, %v1094
      %v1119 = vsub.f32 %v1081, %v1097
      %v1120 = vsub.f32 %v1082, %v1100
      %v1121 = vsub.f32 %v1083, %v1103
      %v1122 = vsub.f32 %v1084, %v1106
      %v1123 = vsub.f32 %v1085, %v1109
      %v1124 = vsub.f32 %v1086, %v1112
      %v1125 = vsub.f32 %v1087, %v1116
      %v1126 = vmul.f32 %v1117, 1.442695
      %v1127 = vpow.pop %v1126
      %v1128 = vmul.f32 %v1118, 1.442695
      %v1129 = vpow.pop %v1128
      %v1130 = vmul.f32 %v1119, 1.442695
      %v1131 = vpow.pop %v1130
      %v1132 = vmul.f32 %v1120, 1.442695
      %v1133 = vpow.pop %v1132
      %v1134 = vmul.f32 %v1121, 1.442695
      %v1135 = vpow.pop %v1134
      %v1136 = vmul.f32 %v1122, 1.442695
      %v1137 = vpow.pop %v1136
      %v1138 = vmul.f32 %v1123, 1.442695
      %v1139 = vpow.pop %v1138
      %v1140 = vmul.f32 %v1124, 1.442695
      %v1141 = vpow.pop %v1140
      %v1142 = vmul.f32 %v1125, 1.442695
      %v1143 = vpow.pop %v1142
      %v1144 = vsel %vm1088, %v1127, 0.0
      %1145 = vadd.xlane.f32.xlu0 %v1144
      %v1146 = vpop.xlane.xlu0 %1145
      %v1147 = vsel %vm1088, %v1129, 0.0
      %1148 = vadd.xlane.f32.xlu0 %v1147
      %v1149 = vpop.xlane.xlu0 %1148
      %v1150 = vsel %vm1088, %v1131, 0.0
      %1151 = vadd.xlane.f32.xlu0 %v1150
      %v1152 = vpop.xlane.xlu0 %1151
      %v1153 = vsel %vm1088, %v1133, 0.0
      %1154 = vadd.xlane.f32.xlu0 %v1153
      %v1155 = vpop.xlane.xlu0 %1154
      %v1156 = vsel %vm1088, %v1135, 0.0
      %1157 = vadd.xlane.f32.xlu0 %v1156
      %v1158 = vpop.xlane.xlu0 %1157
      %v1159 = vsel %vm1088, %v1137, 0.0
      %1160 = vadd.xlane.f32.xlu0 %v1159
      %v1161 = vpop.xlane.xlu0 %1160
      %v1162 = vsel %vm1088, %v1139, 0.0
      %1163 = vadd.xlane.f32.xlu0 %v1162
      %v1164 = vpop.xlane.xlu0 %1163
      %v1165 = vsel %vm1088, %v1141, 0.0
      %1166 = vadd.xlane.f32.xlu0 %v1165
      %v1167 = vpop.xlane.xlu0 %1166
      %v1168 = vsel %vm1113, %v1143, 0.0
      %1169 = vadd.xlane.f32.xlu0 %v1168
      %v1170 = vpop.xlane.xlu0 %1169
      %v1171 = vrcp.pop %v1146
      %v1172 = vrcp.pop %v1149
      %v1173 = vrcp.pop %v1152
      %v1174 = vrcp.pop %v1155
      %v1175 = vrcp.pop %v1158
      %v1176 = vrcp.pop %v1161
      %v1177 = vrcp.pop %v1164
      %v1178 = vrcp.pop %v1167
      %v1179 = vrcp.pop %v1170
      %v1180 = vmul.f32 %v1127, %v1171
      %v1181 = vmul.f32 %v1129, %v1172
      %v1182 = vmul.f32 %v1131, %v1173
      %v1183 = vmul.f32 %v1133, %v1174
      %v1184 = vmul.f32 %v1135, %v1175
      %v1185 = vmul.f32 %v1137, %v1176
      %v1186 = vmul.f32 %v1139, %v1177
      %v1187 = vmul.f32 %v1141, %v1178
      %v1188 = vmul.f32 %v1143, %v1179
      %1189 = vrot.lane.b32.xlu0 %v862, 64
      %v1190 = vpop.permute.xlu0 %1189
      %1191 = vrot.lane.b32.xlu0 %v867, 64
      %v1192 = vpop.permute.xlu0 %1191
      %1193 = vrot.lane.b32.xlu0 %v872, 64
      %v1194 = vpop.permute.xlu0 %1193
      %1195 = vrot.lane.b32.xlu0 %v877, 64
      %v1196 = vpop.permute.xlu0 %1195
      %1197 = vrot.lane.b32.xlu0 %v882, 64
      %v1198 = vpop.permute.xlu0 %1197
      %1199 = vrot.lane.b32.xlu0 %v887, 64
      %v1200 = vpop.permute.xlu0 %1199
      %1201 = vrot.lane.b32.xlu0 %v892, 64
      %v1202 = vpop.permute.xlu0 %1201
      %1203 = vrot.lane.b32.xlu0 %v897, 64
      %v1204 = vpop.permute.xlu0 %1203
      %1205 = vrot.lane.b32.xlu0 %v902, 64
      %v1206 = vpop.permute.xlu0 %1205
      %v1216 = vsel %vm1088, %v1180, 0
      %v1219 = vsel %vm1088, %v1181, 0
      %v1222 = vsel %vm1088, %v1182, 0
      %v1225 = vsel %vm1088, %v1183, 0
      %v1228 = vsel %vm1088, %v1184, 0
      %v1231 = vsel %vm1088, %v1185, 0
      %v1234 = vsel %vm1088, %v1186, 0
      %v1237 = vsel %vm1088, %v1187, 0
      %v1240 = vsel %vm1088, %v1188, 0
      %vm1242 = vcmask 1040384
      %v1243 = vsel %vm1242, %v1206, 0
      %1245 = vmatprep.subr.mxu0 0.0
      %1246 = vmatpush1.msra.mxu0 %v1190
      %1247 = vmatprep.subr.mxu0 0.0
      %1248 = vmatpush1.msra.mxu0 %v1192
      %1249 = vmatprep.subr.mxu0 0.0
      %1250 = vmatpush1.msra.mxu0 %v1194
      %1251 = vmatprep.subr.mxu0 0.0
      %1252 = vmatpush1.msra.mxu0 %v1196
      %1253 = vmatprep.subr.mxu0 0.0
      %1254 = vmatpush1.msra.mxu0 %v1198
      %1255 = vmatprep.subr.mxu0 0.0
      %1256 = vmatpush1.msra.mxu0 %v1200
      %1257 = vmatprep.subr.mxu0 0.0
      %1258 = vmatpush1.msra.mxu0 %v1202
      %1259 = vmatprep.subr.mxu0 0.0
      %1260 = vmatpush1.msra.mxu0 %v1204
      %1261 = vmatprep.subr.mxu0 0.0
      %1262 = vmatpush1.msra.mxu0 %v1243
      %1263 = vmatprep.subr.mxu0 0.0
      %1264 = vmatpush1.msra.mxu0 0.0
      %1265 = vmatprep.subr.mxu0 0.0
      %1266 = vmatpush1.msra.mxu0 0.0
      %1267 = vmatprep.subr.mxu0 0.0
      %1268 = vmatpush1.msra.mxu0 0.0
      %1269 = vmatprep.subr.mxu0 0.0
      %1270 = vmatpush1.msra.mxu0 0.0
      %1271 = vmatprep.subr.mxu0 0.0
      %1272 = vmatpush1.msra.mxu0 0.0
      %1273 = vmatprep.subr.mxu0 0.0
      %1274 = vmatpush1.msra.mxu0 0.0
      %1275 = vmatprep.subr.mxu0 0.0
      %1276 = vmatpush1.msra.mxu0 0.0
      %1277 = vmatprep.subr.mxu0 0.0
      %1278 = vmatpush1.msra.mxu0 0.0
      %1279 = vmatprep.subr.mxu0 0.0
      %1280 = vmatpush1.msra.mxu0 0.0
      %1281 = vmatprep.subr.mxu0 0.0
      %1282 = vmatpush1.msra.mxu0 0.0
      %1283 = vmatprep.subr.mxu0 0.0
      %1284 = vmatpush1.msra.mxu0 0.0
      %1285 = vmatprep.subr.mxu0 0.0
      %1286 = vmatpush1.msra.mxu0 0.0
      %1287 = vmatprep.subr.mxu0 0.0
      %1288 = vmatpush1.msra.mxu0 0.0
      %1289 = vmatprep.subr.mxu0 0.0
      %1290 = vmatpush1.msra.mxu0 0.0
      %1291 = vmatprep.subr.mxu0 0.0
      %1292 = vmatpush1.msra.mxu0 0.0
      %1293 = vmatprep.subr.mxu0 0.0
      %1294 = vmatpush1.msra.mxu0 0.0
      %1295 = vmatprep.subr.mxu0 0.0
      %1296 = vmatpush1.msra.mxu0 0.0
      %1297 = vmatprep.subr.mxu0 0.0
      %1298 = vmatpush1.msra.mxu0 0.0
      %1299 = vmatprep.subr.mxu0 0.0
      %1300 = vmatpush1.msra.mxu0 0.0
      %1301 = vmatprep.subr.mxu0 0.0
      %1302 = vmatpush1.msra.mxu0 0.0
      %1303 = vmatprep.subr.mxu0 0.0
      %1304 = vmatpush1.msra.mxu0 0.0
      %1305 = vmatprep.subr.mxu0 0.0
      %1306 = vmatpush1.msra.mxu0 0.0
      %1307 = vmatprep.subr.mxu0 0.0
      %1308 = vmatpush1.msra.mxu0 0.0
      %1309 = vmatprep.mubr.f32.mxu0 0.0
      %1310 = vmatmul.mubr.f32.gmra.mrb[0].mxu0 %v1216
      %v1311 = vpop.f32.mrb[0].mxu0
      %v1312 = vadd.f32 0.0, %v1311
      %v1313 = vpop.f32.mrb[0].mxu0
      %1314 = vmatprep.mubr.f32.mxu0 0.0
      %1315 = vmatmul.mubr.f32.gmra.mrb[0].mxu0 %v1219
      %v1316 = vpop.f32.mrb[0].mxu0
      %v1317 = vadd.f32 0.0, %v1316
      %v1318 = vpop.f32.mrb[0].mxu0
      %1319 = vmatprep.mubr.f32.mxu0 0.0
      %1320 = vmatmul.mubr.f32.gmra.mrb[0].mxu0 %v1222
      %v1321 = vpop.f32.mrb[0].mxu0
      %v1322 = vadd.f32 0.0, %v1321
      %v1323 = vpop.f32.mrb[0].mxu0
      %1324 = vmatprep.mubr.f32.mxu0 0.0
      %1325 = vmatmul.mubr.f32.gmra.mrb[0].mxu0 %v1225
      %v1326 = vpop.f32.mrb[0].mxu0
      %v1327 = vadd.f32 0.0, %v1326
      %v1328 = vpop.f32.mrb[0].mxu0
      %1329 = vmatprep.mubr.f32.mxu0 0.0
      %1330 = vmatmul.mubr.f32.gmra.mrb[0].mxu0 %v1228
      %v1331 = vpop.f32.mrb[0].mxu0
      %v1332 = vadd.f32 0.0, %v1331
      %v1333 = vpop.f32.mrb[0].mxu0
      %1334 = vmatprep.mubr.f32.mxu0 0.0
      %1335 = vmatmul.mubr.f32.gmra.mrb[0].mxu0 %v1231
      %v1336 = vpop.f32.mrb[0].mxu0
      %v1337 = vadd.f32 0.0, %v1336
      %v1338 = vpop.f32.mrb[0].mxu0
      %1339 = vmatprep.mubr.f32.mxu0 0.0
      %1340 = vmatmul.mubr.f32.gmra.mrb[0].mxu0 %v1234
      %v1341 = vpop.f32.mrb[0].mxu0
      %v1342 = vadd.f32 0.0, %v1341
      %v1343 = vpop.f32.mrb[0].mxu0
      %1344 = vmatprep.mubr.f32.mxu0 0.0
      %1345 = vmatmul.mubr.f32.gmra.mrb[0].mxu0 %v1237
      %v1346 = vpop.f32.mrb[0].mxu0
      %v1347 = vadd.f32 0.0, %v1346
      %v1348 = vpop.f32.mrb[0].mxu0
      %1349 = vmatprep.mubr.f32.mxu0 0.0
      %1350 = vmatmul.mubr.f32.gmra.mrb[0].mxu0 %v1240
      %v1351 = vpop.f32.mrb[0].mxu0
      %v1352 = vadd.f32 0.0, %v1351
      %v1353 = vpop.f32.mrb[0].mxu0
      %1354 = vdwg.mxu0
      %v1355 = vld [vmem:[%s4] sm:$0xff]
      %1356 = vrot.lane.b32.xlu0 %v862, 120
      %v1357 = vpop.permute.xlu0 %1356
      %1358 = vrot.lane.b32.xlu0 %v867, 120
      %v1359 = vpop.permute.xlu0 %1358
      %1360 = vrot.lane.b32.xlu0 %v872, 120
      %v1361 = vpop.permute.xlu0 %1360
      %1362 = vrot.lane.b32.xlu0 %v877, 120
      %v1363 = vpop.permute.xlu0 %1362
      %1364 = vrot.lane.b32.xlu0 %v882, 120
      %v1365 = vpop.permute.xlu0 %1364
      %1366 = vrot.lane.b32.xlu0 %v887, 120
      %v1367 = vpop.permute.xlu0 %1366
      %1368 = vrot.lane.b32.xlu0 %v892, 120
      %v1369 = vpop.permute.xlu0 %1368
      %1370 = vrot.lane.b32.xlu0 %v897, 120
      %v1371 = vpop.permute.xlu0 %1370
      %1372 = vrot.lane.b32.xlu0 %v902, 120
      %v1373 = vpop.permute.xlu0 %1372
      %1374 = vrot.lane.b32.xlu0 %v862, 88
      %v1375 = vpop.permute.xlu0 %1374
      %1376 = vrot.lane.b32.xlu0 %v867, 88
      %v1377 = vpop.permute.xlu0 %1376
      %1378 = vrot.lane.b32.xlu0 %v872, 88
      %v1379 = vpop.permute.xlu0 %1378
      %1380 = vrot.lane.b32.xlu0 %v877, 88
      %v1381 = vpop.permute.xlu0 %1380
      %1382 = vrot.lane.b32.xlu0 %v882, 88
      %v1383 = vpop.permute.xlu0 %1382
      %1384 = vrot.lane.b32.xlu0 %v887, 88
      %v1385 = vpop.permute.xlu0 %1384
      %1386 = vrot.lane.b32.xlu0 %v892, 88
      %v1387 = vpop.permute.xlu0 %1386
      %1388 = vrot.lane.b32.xlu0 %v897, 88
      %v1389 = vpop.permute.xlu0 %1388
      %1390 = vrot.lane.b32.xlu0 %v902, 88
      %v1391 = vpop.permute.xlu0 %1390
      %v1392 = vsel %vm932, %v1357, 0
      %v1394 = vsel %vm932, %v1359, 0
      %v1396 = vsel %vm932, %v1361, 0
      %v1398 = vsel %vm932, %v1363, 0
      %v1400 = vsel %vm932, %v1365, 0
      %v1402 = vsel %vm932, %v1367, 0
      %v1404 = vsel %vm932, %v1369, 0
      %v1406 = vsel %vm932, %v1371, 0
      %v1408 = vsel %vm932, %v1373, 0
      %v1410 = vsel %vm932, %v1375, 0
      %v1412 = vsel %vm932, %v1377, 0
      %v1414 = vsel %vm932, %v1379, 0
      %v1416 = vsel %vm932, %v1381, 0
      %v1418 = vsel %vm932, %v1383, 0
      %v1420 = vsel %vm932, %v1385, 0
      %v1422 = vsel %vm932, %v1387, 0
      %v1424 = vsel %vm932, %v1389, 0
      %v1426 = vsel %vm932, %v1391, 0
      %1428 = vmatprep.subr.mxu0 0.0
      %1429 = vmatpush1.xpose.msra.mxu0 %v1410
      %1430 = vmatprep.subr.mxu0 0.0
      %1431 = vmatpush1.xpose.msra.mxu0 %v1412
      %1432 = vmatprep.subr.mxu0 0.0
      %1433 = vmatpush1.xpose.msra.mxu0 %v1414
      %1434 = vmatprep.subr.mxu0 0.0
      %1435 = vmatpush1.xpose.msra.mxu0 %v1416
      %1436 = vmatprep.subr.mxu0 0.0
      %1437 = vmatpush1.xpose.msra.mxu0 %v1418
      %1438 = vmatprep.subr.mxu0 0.0
      %1439 = vmatpush1.xpose.msra.mxu0 %v1420
      %1440 = vmatprep.subr.mxu0 0.0
      %1441 = vmatpush1.xpose.msra.mxu0 %v1422
      %1442 = vmatprep.subr.mxu0 0.0
      %1443 = vmatpush1.xpose.msra.mxu0 %v1424
      %1444 = vmatprep.subr.mxu0 0.0
      %1445 = vmatpush1.xpose.msra.mxu0 %v1426
      %1446 = vmatprep.subr.mxu0 0.0
      %1447 = vmatpush1.xpose.msra.mxu0 0.0
      %1448 = vmatprep.subr.mxu0 0.0
      %1449 = vmatpush1.xpose.msra.mxu0 0.0
      %1450 = vmatprep.subr.mxu0 0.0
      %1451 = vmatpush1.xpose.msra.mxu0 0.0
      %1452 = vmatprep.subr.mxu0 0.0
      %1453 = vmatpush1.xpose.msra.mxu0 0.0
      %1454 = vmatprep.subr.mxu0 0.0
      %1455 = vmatpush1.xpose.msra.mxu0 0.0
      %1456 = vmatprep.subr.mxu0 0.0
      %1457 = vmatpush1.xpose.msra.mxu0 0.0
      %1458 = vmatprep.subr.mxu0 0.0
      %1459 = vmatpush1.xpose.msra.mxu0 0.0
      %1460 = vmatprep.subr.mxu0 0.0
      %1461 = vmatpush1.xpose.msra.mxu0 0.0
      %1462 = vmatprep.subr.mxu0 0.0
      %1463 = vmatpush1.xpose.msra.mxu0 0.0
      %1464 = vmatprep.subr.mxu0 0.0
      %1465 = vmatpush1.xpose.msra.mxu0 0.0
      %1466 = vmatprep.subr.mxu0 0.0
      %1467 = vmatpush1.xpose.msra.mxu0 0.0
      %1468 = vmatprep.subr.mxu0 0.0
      %1469 = vmatpush1.xpose.msra.mxu0 0.0
      %1470 = vmatprep.subr.mxu0 0.0
      %1471 = vmatpush1.xpose.msra.mxu0 0.0
      %1472 = vmatprep.subr.mxu0 0.0
      %1473 = vmatpush1.xpose.msra.mxu0 0.0
      %1474 = vmatprep.subr.mxu0 0.0
      %1475 = vmatpush1.xpose.msra.mxu0 0.0
      %1476 = vmatprep.subr.mxu0 0.0
      %1477 = vmatpush1.xpose.msra.mxu0 0.0
      %1478 = vmatprep.subr.mxu0 0.0
      %1479 = vmatpush1.xpose.msra.mxu0 0.0
      %1480 = vmatprep.subr.mxu0 0.0
      %1481 = vmatpush1.xpose.msra.mxu0 0.0
      %1482 = vmatprep.subr.mxu0 0.0
      %1483 = vmatpush1.xpose.msra.mxu0 0.0
      %1484 = vmatprep.subr.mxu0 0.0
      %1485 = vmatpush1.xpose.msra.mxu0 0.0
      %1486 = vmatprep.subr.mxu0 0.0
      %1487 = vmatpush1.xpose.msra.mxu0 0.0
      %1488 = vmatprep.subr.mxu0 0.0
      %1489 = vmatpush1.xpose.msra.mxu0 0.0
      %1490 = vmatprep.subr.mxu0 0.0
      %1491 = vmatpush1.xpose.msra.mxu0 0.0
      %1492 = vmatprep.mubr.f32.mxu0 0.0
      %1493 = vmatmul.mubr.f32.gmra.mrb[0].mxu0 %v1392
      %v1494 = vpop.f32.mrb[0].mxu0
      %v1495 = vadd.f32 0.0, %v1494
      %v1496 = vpop.f32.mrb[0].mxu0
      %1497 = vmatprep.mubr.f32.mxu0 0.0
      %1498 = vmatmul.mubr.f32.gmra.mrb[0].mxu0 %v1394
      %v1499 = vpop.f32.mrb[0].mxu0
      %v1500 = vadd.f32 0.0, %v1499
      %v1501 = vpop.f32.mrb[0].mxu0
      %1502 = vmatprep.mubr.f32.mxu0 0.0
      %1503 = vmatmul.mubr.f32.gmra.mrb[0].mxu0 %v1396
      %v1504 = vpop.f32.mrb[0].mxu0
      %v1505 = vadd.f32 0.0, %v1504
      %v1506 = vpop.f32.mrb[0].mxu0
      %1507 = vmatprep.mubr.f32.mxu0 0.0
      %1508 = vmatmul.mubr.f32.gmra.mrb[0].mxu0 %v1398
      %v1509 = vpop.f32.mrb[0].mxu0
      %v1510 = vadd.f32 0.0, %v1509
      %v1511 = vpop.f32.mrb[0].mxu0
      %1512 = vmatprep.mubr.f32.mxu0 0.0
      %1513 = vmatmul.mubr.f32.gmra.mrb[0].mxu0 %v1400
      %v1514 = vpop.f32.mrb[0].mxu0
      %v1515 = vadd.f32 0.0, %v1514
      %v1516 = vpop.f32.mrb[0].mxu0
      %1517 = vmatprep.mubr.f32.mxu0 0.0
      %1518 = vmatmul.mubr.f32.gmra.mrb[0].mxu0 %v1402
      %v1519 = vpop.f32.mrb[0].mxu0
      %v1520 = vadd.f32 0.0, %v1519
      %v1521 = vpop.f32.mrb[0].mxu0
      %1522 = vmatprep.mubr.f32.mxu0 0.0
      %1523 = vmatmul.mubr.f32.gmra.mrb[0].mxu0 %v1404
      %v1524 = vpop.f32.mrb[0].mxu0
      %v1525 = vadd.f32 0.0, %v1524
      %v1526 = vpop.f32.mrb[0].mxu0
      %1527 = vmatprep.mubr.f32.mxu0 0.0
      %1528 = vmatmul.mubr.f32.gmra.mrb[0].mxu0 %v1406
      %v1529 = vpop.f32.mrb[0].mxu0
      %v1530 = vadd.f32 0.0, %v1529
      %v1531 = vpop.f32.mrb[0].mxu0
      %1532 = vmatprep.mubr.f32.mxu0 0.0
      %1533 = vmatmul.mubr.f32.gmra.mrb[0].mxu0 %v1408
      %v1534 = vpop.f32.mrb[0].mxu0
      %v1535 = vadd.f32 0.0, %v1534
      %v1536 = vpop.f32.mrb[0].mxu0
      %1537 = vdwg.mxu0
      %v1538 = vmul.f32 %v1495, 0.35355338
      %v1539 = vmul.f32 %v1500, 0.35355338
      %v1540 = vmul.f32 %v1505, 0.35355338
      %v1541 = vmul.f32 %v1510, 0.35355338
      %v1542 = vmul.f32 %v1515, 0.35355338
      %v1543 = vmul.f32 %v1520, 0.35355338
      %v1544 = vmul.f32 %v1525, 0.35355338
      %v1545 = vmul.f32 %v1530, 0.35355338
      %v1546 = vmul.f32 %v1535, 0.35355338
      %v1547 = vsel %vm1088, %v1538, -inf
      %1548 = vmax.xlane.f32.xlu0 %v1547
      %v1549 = vpop.xlane.xlu0 %1548
      %v1550 = vsel %vm1088, %v1539, -inf
      %1551 = vmax.xlane.f32.xlu0 %v1550
      %v1552 = vpop.xlane.xlu0 %1551
      %v1553 = vsel %vm1088, %v1540, -inf
      %1554 = vmax.xlane.f32.xlu0 %v1553
      %v1555 = vpop.xlane.xlu0 %1554
      %v1556 = vsel %vm1088, %v1541, -inf
      %1557 = vmax.xlane.f32.xlu0 %v1556
      %v1558 = vpop.xlane.xlu0 %1557
      %v1559 = vsel %vm1088, %v1542, -inf
      %1560 = vmax.xlane.f32.xlu0 %v1559
      %v1561 = vpop.xlane.xlu0 %1560
      %v1562 = vsel %vm1088, %v1543, -inf
      %1563 = vmax.xlane.f32.xlu0 %v1562
      %v1564 = vpop.xlane.xlu0 %1563
      %v1565 = vsel %vm1088, %v1544, -inf
      %1566 = vmax.xlane.f32.xlu0 %v1565
      %v1567 = vpop.xlane.xlu0 %1566
      %v1568 = vsel %vm1088, %v1545, -inf
      %1569 = vmax.xlane.f32.xlu0 %v1568
      %v1570 = vpop.xlane.xlu0 %1569
      %v1571 = vsel %vm1113, %v1546, -inf
      %1572 = vmax.xlane.f32.xlu0 %v1571
      %v1573 = vpop.xlane.xlu0 %1572
      %v1574 = vsub.f32 %v1538, %v1549
      %v1575 = vsub.f32 %v1539, %v1552
      %v1576 = vsub.f32 %v1540, %v1555
      %v1577 = vsub.f32 %v1541, %v1558
      %v1578 = vsub.f32 %v1542, %v1561
      %v1579 = vsub.f32 %v1543, %v1564
      %v1580 = vsub.f32 %v1544, %v1567
      %v1581 = vsub.f32 %v1545, %v1570
      %v1582 = vsub.f32 %v1546, %v1573
      %v1583 = vmul.f32 %v1574, 1.442695
      %v1584 = vpow.pop %v1583
      %v1585 = vmul.f32 %v1575, 1.442695
      %v1586 = vpow.pop %v1585
      %v1587 = vmul.f32 %v1576, 1.442695
      %v1588 = vpow.pop %v1587
      %v1589 = vmul.f32 %v1577, 1.442695
      %v1590 = vpow.pop %v1589
      %v1591 = vmul.f32 %v1578, 1.442695
      %v1592 = vpow.pop %v1591
      %v1593 = vmul.f32 %v1579, 1.442695
      %v1594 = vpow.pop %v1593
      %v1595 = vmul.f32 %v1580, 1.442695
      %v1596 = vpow.pop %v1595
      %v1597 = vmul.f32 %v1581, 1.442695
      %v1598 = vpow.pop %v1597
      %v1599 = vmul.f32 %v1582, 1.442695
      %v1600 = vpow.pop %v1599
      %v1601 = vsel %vm1088, %v1584, 0.0
      %1602 = vadd.xlane.f32.xlu0 %v1601
      %v1603 = vpop.xlane.xlu0 %1602
      %v1604 = vsel %vm1088, %v1586, 0.0
      %1605 = vadd.xlane.f32.xlu0 %v1604
      %v1606 = vpop.xlane.xlu0 %1605
      %v1607 = vsel %vm1088, %v1588, 0.0
      %1608 = vadd.xlane.f32.xlu0 %v1607
      %v1609 = vpop.xlane.xlu0 %1608
      %v1610 = vsel %vm1088, %v1590, 0.0
      %1611 = vadd.xlane.f32.xlu0 %v1610
      %v1612 = vpop.xlane.xlu0 %1611
      %v1613 = vsel %vm1088, %v1592, 0.0
      %1614 = vadd.xlane.f32.xlu0 %v1613
      %v1615 = vpop.xlane.xlu0 %1614
      %v1616 = vsel %vm1088, %v1594, 0.0
      %1617 = vadd.xlane.f32.xlu0 %v1616
      %v1618 = vpop.xlane.xlu0 %1617
      %v1619 = vsel %vm1088, %v1596, 0.0
      %1620 = vadd.xlane.f32.xlu0 %v1619
      %v1621 = vpop.xlane.xlu0 %1620
      %v1622 = vsel %vm1088, %v1598, 0.0
      %1623 = vadd.xlane.f32.xlu0 %v1622
      %v1624 = vpop.xlane.xlu0 %1623
      %v1625 = vsel %vm1113, %v1600, 0.0
      %1626 = vadd.xlane.f32.xlu0 %v1625
      %v1627 = vpop.xlane.xlu0 %1626
      %v1628 = vrcp.pop %v1603
      %v1629 = vrcp.pop %v1606
      %v1630 = vrcp.pop %v1609
      %v1631 = vrcp.pop %v1612
      %v1632 = vrcp.pop %v1615
      %v1633 = vrcp.pop %v1618
      %v1634 = vrcp.pop %v1621
      %v1635 = vrcp.pop %v1624
      %v1636 = vrcp.pop %v1627
      %v1637 = vmul.f32 %v1584, %v1628
      %v1638 = vmul.f32 %v1586, %v1629
      %v1639 = vmul.f32 %v1588, %v1630
      %v1640 = vmul.f32 %v1590, %v1631
      %v1641 = vmul.f32 %v1592, %v1632
      %v1642 = vmul.f32 %v1594, %v1633
      %v1643 = vmul.f32 %v1596, %v1634
      %v1644 = vmul.f32 %v1598, %v1635
      %v1645 = vmul.f32 %v1600, %v1636
      %1646 = vrot.lane.b32.xlu0 %v862, 56
      %v1647 = vpop.permute.xlu0 %1646
      %1648 = vrot.lane.b32.xlu0 %v867, 56
      %v1649 = vpop.permute.xlu0 %1648
      %1650 = vrot.lane.b32.xlu0 %v872, 56
      %v1651 = vpop.permute.xlu0 %1650
      %1652 = vrot.lane.b32.xlu0 %v877, 56
      %v1653 = vpop.permute.xlu0 %1652
      %1654 = vrot.lane.b32.xlu0 %v882, 56
      %v1655 = vpop.permute.xlu0 %1654
      %1656 = vrot.lane.b32.xlu0 %v887, 56
      %v1657 = vpop.permute.xlu0 %1656
      %1658 = vrot.lane.b32.xlu0 %v892, 56
      %v1659 = vpop.permute.xlu0 %1658
      %1660 = vrot.lane.b32.xlu0 %v897, 56
      %v1661 = vpop.permute.xlu0 %1660
      %1662 = vrot.lane.b32.xlu0 %v902, 56
      %v1663 = vpop.permute.xlu0 %1662
      %v1673 = vsel %vm1088, %v1637, 0
      %v1676 = vsel %vm1088, %v1638, 0
      %v1679 = vsel %vm1088, %v1639, 0
      %v1682 = vsel %vm1088, %v1640, 0
      %v1685 = vsel %vm1088, %v1641, 0
      %v1688 = vsel %vm1088, %v1642, 0
      %v1691 = vsel %vm1088, %v1643, 0
      %v1694 = vsel %vm1088, %v1644, 0
      %v1697 = vsel %vm1088, %v1645, 0
      %v1699 = vsel %vm1242, %v1663, 0
      %1701 = vmatprep.subr.mxu0 0.0
      %1702 = vmatpush1.msra.mxu0 %v1647
      %1703 = vmatprep.subr.mxu0 0.0
      %1704 = vmatpush1.msra.mxu0 %v1649
      %1705 = vmatprep.subr.mxu0 0.0
      %1706 = vmatpush1.msra.mxu0 %v1651
      %1707 = vmatprep.subr.mxu0 0.0
      %1708 = vmatpush1.msra.mxu0 %v1653
      %1709 = vmatprep.subr.mxu0 0.0
      %1710 = vmatpush1.msra.mxu0 %v1655
      %1711 = vmatprep.subr.mxu0 0.0
      %1712 = vmatpush1.msra.mxu0 %v1657
      %1713 = vmatprep.subr.mxu0 0.0
      %1714 = vmatpush1.msra.mxu0 %v1659
      %1715 = vmatprep.subr.mxu0 0.0
      %1716 = vmatpush1.msra.mxu0 %v1661
      %1717 = vmatprep.subr.mxu0 0.0
      %1718 = vmatpush1.msra.mxu0 %v1699
      %1719 = vmatprep.subr.mxu0 0.0
      %1720 = vmatpush1.msra.mxu0 0.0
      %1721 = vmatprep.subr.mxu0 0.0
      %1722 = vmatpush1.msra.mxu0 0.0
      %1723 = vmatprep.subr.mxu0 0.0
      %1724 = vmatpush1.msra.mxu0 0.0
      %1725 = vmatprep.subr.mxu0 0.0
      %1726 = vmatpush1.msra.mxu0 0.0
      %1727 = vmatprep.subr.mxu0 0.0
      %1728 = vmatpush1.msra.mxu0 0.0
      %1729 = vmatprep.subr.mxu0 0.0
      %1730 = vmatpush1.msra.mxu0 0.0
      %1731 = vmatprep.subr.mxu0 0.0
      %1732 = vmatpush1.msra.mxu0 0.0
      %1733 = vmatprep.subr.mxu0 0.0
      %1734 = vmatpush1.msra.mxu0 0.0
      %1735 = vmatprep.subr.mxu0 0.0
      %1736 = vmatpush1.msra.mxu0 0.0
      %1737 = vmatprep.subr.mxu0 0.0
      %1738 = vmatpush1.msra.mxu0 0.0
      %1739 = vmatprep.subr.mxu0 0.0
      %1740 = vmatpush1.msra.mxu0 0.0
      %1741 = vmatprep.subr.mxu0 0.0
      %1742 = vmatpush1.msra.mxu0 0.0
      %1743 = vmatprep.subr.mxu0 0.0
      %1744 = vmatpush1.msra.mxu0 0.0
      %1745 = vmatprep.subr.mxu0 0.0
      %1746 = vmatpush1.msra.mxu0 0.0
      %1747 = vmatprep.subr.mxu0 0.0
      %1748 = vmatpush1.msra.mxu0 0.0
      %1749 = vmatprep.subr.mxu0 0.0
      %1750 = vmatpush1.msra.mxu0 0.0
      %1751 = vmatprep.subr.mxu0 0.0
      %1752 = vmatpush1.msra.mxu0 0.0
      %1753 = vmatprep.subr.mxu0 0.0
      %1754 = vmatpush1.msra.mxu0 0.0
      %1755 = vmatprep.subr.mxu0 0.0
      %1756 = vmatpush1.msra.mxu0 0.0
      %1757 = vmatprep.subr.mxu0 0.0
      %1758 = vmatpush1.msra.mxu0 0.0
      %1759 = vmatprep.subr.mxu0 0.0
      %1760 = vmatpush1.msra.mxu0 0.0
      %1761 = vmatprep.subr.mxu0 0.0
      %1762 = vmatpush1.msra.mxu0 0.0
      %1763 = vmatprep.subr.mxu0 0.0
      %1764 = vmatpush1.msra.mxu0 0.0
      %1765 = vmatprep.mubr.f32.mxu0 0.0
      %1766 = vmatmul.mubr.f32.gmra.mrb[0].mxu0 %v1673
      %v1767 = vpop.f32.mrb[0].mxu0
      %v1768 = vadd.f32 0.0, %v1767
      %v1769 = vpop.f32.mrb[0].mxu0
      %1770 = vmatprep.mubr.f32.mxu0 0.0
      %1771 = vmatmul.mubr.f32.gmra.mrb[0].mxu0 %v1676
      %v1772 = vpop.f32.mrb[0].mxu0
      %v1773 = vadd.f32 0.0, %v1772
      %v1774 = vpop.f32.mrb[0].mxu0
      %1775 = vmatprep.mubr.f32.mxu0 0.0
      %1776 = vmatmul.mubr.f32.gmra.mrb[0].mxu0 %v1679
      %v1777 = vpop.f32.mrb[0].mxu0
      %v1778 = vadd.f32 0.0, %v1777
      %v1779 = vpop.f32.mrb[0].mxu0
      %1780 = vmatprep.mubr.f32.mxu0 0.0
      %1781 = vmatmul.mubr.f32.gmra.mrb[0].mxu0 %v1682
      %v1782 = vpop.f32.mrb[0].mxu0
      %v1783 = vadd.f32 0.0, %v1782
      %v1784 = vpop.f32.mrb[0].mxu0
      %1785 = vmatprep.mubr.f32.mxu0 0.0
      %1786 = vmatmul.mubr.f32.gmra.mrb[0].mxu0 %v1685
      %v1787 = vpop.f32.mrb[0].mxu0
      %v1788 = vadd.f32 0.0, %v1787
      %v1789 = vpop.f32.mrb[0].mxu0
      %1790 = vmatprep.mubr.f32.mxu0 0.0
      %1791 = vmatmul.mubr.f32.gmra.mrb[0].mxu0 %v1688
      %v1792 = vpop.f32.mrb[0].mxu0
      %v1793 = vadd.f32 0.0, %v1792
      %v1794 = vpop.f32.mrb[0].mxu0
      %1795 = vmatprep.mubr.f32.mxu0 0.0
      %1796 = vmatmul.mubr.f32.gmra.mrb[0].mxu0 %v1691
      %v1797 = vpop.f32.mrb[0].mxu0
      %v1798 = vadd.f32 0.0, %v1797
      %v1799 = vpop.f32.mrb[0].mxu0
      %1800 = vmatprep.mubr.f32.mxu0 0.0
      %1801 = vmatmul.mubr.f32.gmra.mrb[0].mxu0 %v1694
      %v1802 = vpop.f32.mrb[0].mxu0
      %v1803 = vadd.f32 0.0, %v1802
      %v1804 = vpop.f32.mrb[0].mxu0
      %1805 = vmatprep.mubr.f32.mxu0 0.0
      %1806 = vmatmul.mubr.f32.gmra.mrb[0].mxu0 %v1697
      %v1807 = vpop.f32.mrb[0].mxu0
      %v1808 = vadd.f32 0.0, %v1807
      %v1809 = vpop.f32.mrb[0].mxu0
      %1810 = vdwg.mxu0
      %v1811 = vld [vmem:[%s4 + $0x8] sm:$0xff]
      %v1813 = vsel %vm932, %v1768, 0
      %v1816 = vsel %vm932, %v1773, 0
      %v1819 = vsel %vm932, %v1778, 0
      %v1822 = vsel %vm932, %v1783, 0
      %v1825 = vsel %vm932, %v1788, 0
      %v1828 = vsel %vm932, %v1793, 0
      %v1831 = vsel %vm932, %v1798, 0
      %v1834 = vsel %vm932, %v1803, 0
      %v1837 = vsel %vm932, %v1808, 0
      %1839 = vmatprep.subr.mxu0 0.0
      %1840 = vmatpush1.msra.mxu0 %v1811
      %1841 = vmatprep.subr.mxu0 0.0
      %1842 = vmatpush1.msra.mxu0 0.0
      %1843 = vmatprep.subr.mxu0 0.0
      %1844 = vmatpush1.msra.mxu0 0.0
      %1845 = vmatprep.subr.mxu0 0.0
      %1846 = vmatpush1.msra.mxu0 0.0
      %1847 = vmatprep.subr.mxu0 0.0
      %1848 = vmatpush1.msra.mxu0 0.0
      %1849 = vmatprep.subr.mxu0 0.0
      %1850 = vmatpush1.msra.mxu0 0.0
      %1851 = vmatprep.subr.mxu0 0.0
      %1852 = vmatpush1.msra.mxu0 0.0
      %1853 = vmatprep.subr.mxu0 0.0
      %1854 = vmatpush1.msra.mxu0 0.0
      %1855 = vmatprep.subr.mxu0 0.0
      %1856 = vmatpush1.msra.mxu0 0.0
      %1857 = vmatprep.subr.mxu0 0.0
      %1858 = vmatpush1.msra.mxu0 0.0
      %1859 = vmatprep.subr.mxu0 0.0
      %1860 = vmatpush1.msra.mxu0 0.0
      %1861 = vmatprep.subr.mxu0 0.0
      %1862 = vmatpush1.msra.mxu0 0.0
      %1863 = vmatprep.subr.mxu0 0.0
      %1864 = vmatpush1.msra.mxu0 0.0
      %1865 = vmatprep.subr.mxu0 0.0
      %1866 = vmatpush1.msra.mxu0 0.0
      %1867 = vmatprep.subr.mxu0 0.0
      %1868 = vmatpush1.msra.mxu0 0.0
      %1869 = vmatprep.subr.mxu0 0.0
      %1870 = vmatpush1.msra.mxu0 0.0
      %1871 = vmatprep.subr.mxu0 0.0
      %1872 = vmatpush1.msra.mxu0 0.0
      %1873 = vmatprep.subr.mxu0 0.0
      %1874 = vmatpush1.msra.mxu0 0.0
      %1875 = vmatprep.subr.mxu0 0.0
      %1876 = vmatpush1.msra.mxu0 0.0
      %1877 = vmatprep.subr.mxu0 0.0
      %1878 = vmatpush1.msra.mxu0 0.0
      %1879 = vmatprep.subr.mxu0 0.0
      %1880 = vmatpush1.msra.mxu0 0.0
      %1881 = vmatprep.subr.mxu0 0.0
      %1882 = vmatpush1.msra.mxu0 0.0
      %1883 = vmatprep.subr.mxu0 0.0
      %1884 = vmatpush1.msra.mxu0 0.0
      %1885 = vmatprep.subr.mxu0 0.0
      %1886 = vmatpush1.msra.mxu0 0.0
      %1887 = vmatprep.subr.mxu0 0.0
      %1888 = vmatpush1.msra.mxu0 0.0
      %1889 = vmatprep.subr.mxu0 0.0
      %1890 = vmatpush1.msra.mxu0 0.0
      %1891 = vmatprep.subr.mxu0 0.0
      %1892 = vmatpush1.msra.mxu0 0.0
      %1893 = vmatprep.subr.mxu0 0.0
      %1894 = vmatpush1.msra.mxu0 0.0
      %1895 = vmatprep.subr.mxu0 0.0
      %1896 = vmatpush1.msra.mxu0 0.0
      %1897 = vmatprep.subr.mxu0 0.0
      %1898 = vmatpush1.msra.mxu0 0.0
      %1899 = vmatprep.subr.mxu0 0.0
      %1900 = vmatpush1.msra.mxu0 0.0
      %1901 = vmatprep.subr.mxu0 0.0
      %1902 = vmatpush1.msra.mxu0 0.0
      %1903 = vmatprep.mubr.f32.mxu0 0.0
      %1904 = vmatmul.mubr.f32.gmra.mrb[0].mxu0 %v1813
      %v1905 = vpop.f32.mrb[0].mxu0
      %v1906 = vadd.f32 0.0, %v1905
      %v1907 = vpop.f32.mrb[0].mxu0
      %1908 = vmatprep.mubr.f32.mxu0 0.0
      %1909 = vmatmul.mubr.f32.gmra.mrb[0].mxu0 %v1816
      %v1910 = vpop.f32.mrb[0].mxu0
      %v1911 = vadd.f32 0.0, %v1910
      %v1912 = vpop.f32.mrb[0].mxu0
      %1913 = vmatprep.mubr.f32.mxu0 0.0
      %1914 = vmatmul.mubr.f32.gmra.mrb[0].mxu0 %v1819
      %v1915 = vpop.f32.mrb[0].mxu0
      %v1916 = vadd.f32 0.0, %v1915
      %v1917 = vpop.f32.mrb[0].mxu0
      %1918 = vmatprep.mubr.f32.mxu0 0.0
      %1919 = vmatmul.mubr.f32.gmra.mrb[0].mxu0 %v1822
      %v1920 = vpop.f32.mrb[0].mxu0
      %v1921 = vadd.f32 0.0, %v1920
      %v1922 = vpop.f32.mrb[0].mxu0
      %1923 = vmatprep.mubr.f32.mxu0 0.0
      %1924 = vmatmul.mubr.f32.gmra.mrb[0].mxu0 %v1825
      %v1925 = vpop.f32.mrb[0].mxu0
      %v1926 = vadd.f32 0.0, %v1925
      %v1927 = vpop.f32.mrb[0].mxu0
      %1928 = vmatprep.mubr.f32.mxu0 0.0
      %1929 = vmatmul.mubr.f32.gmra.mrb[0].mxu0 %v1828
      %v1930 = vpop.f32.mrb[0].mxu0
      %v1931 = vadd.f32 0.0, %v1930
      %v1932 = vpop.f32.mrb[0].mxu0
      %1933 = vmatprep.mubr.f32.mxu0 0.0
      %1934 = vmatmul.mubr.f32.gmra.mrb[0].mxu0 %v1831
      %v1935 = vpop.f32.mrb[0].mxu0
      %v1936 = vadd.f32 0.0, %v1935
      %v1937 = vpop.f32.mrb[0].mxu0
      %1938 = vmatprep.mubr.f32.mxu0 0.0
      %1939 = vmatmul.mubr.f32.gmra.mrb[0].mxu0 %v1834
      %v1940 = vpop.f32.mrb[0].mxu0
      %v1941 = vadd.f32 0.0, %v1940
      %v1942 = vpop.f32.mrb[0].mxu0
      %1943 = vmatprep.mubr.f32.mxu0 0.0
      %1944 = vmatmul.mubr.f32.gmra.mrb[0].mxu0 %v1837
      %v1945 = vpop.f32.mrb[0].mxu0
      %v1946 = vadd.f32 0.0, %v1945
      %v1947 = vpop.f32.mrb[0].mxu0
      %1948 = vdwg.mxu0
      %v1950 = vsel %vm932, %v1312, 0
      %v1953 = vsel %vm932, %v1317, 0
      %v1956 = vsel %vm932, %v1322, 0
      %v1959 = vsel %vm932, %v1327, 0
      %v1962 = vsel %vm932, %v1332, 0
      %v1965 = vsel %vm932, %v1337, 0
      %v1968 = vsel %vm932, %v1342, 0
      %v1971 = vsel %vm932, %v1347, 0
      %v1974 = vsel %vm932, %v1352, 0
      %1976 = vmatprep.subr.mxu0 0.0
      %1977 = vmatpush1.msra.mxu0 %v1355
      %1978 = vmatprep.subr.mxu0 0.0
      %1979 = vmatpush1.msra.mxu0 0.0
      %1980 = vmatprep.subr.mxu0 0.0
      %1981 = vmatpush1.msra.mxu0 0.0
      %1982 = vmatprep.subr.mxu0 0.0
      %1983 = vmatpush1.msra.mxu0 0.0
      %1984 = vmatprep.subr.mxu0 0.0
      %1985 = vmatpush1.msra.mxu0 0.0
      %1986 = vmatprep.subr.mxu0 0.0
      %1987 = vmatpush1.msra.mxu0 0.0
      %1988 = vmatprep.subr.mxu0 0.0
      %1989 = vmatpush1.msra.mxu0 0.0
      %1990 = vmatprep.subr.mxu0 0.0
      %1991 = vmatpush1.msra.mxu0 0.0
      %1992 = vmatprep.subr.mxu0 0.0
      %1993 = vmatpush1.msra.mxu0 0.0
      %1994 = vmatprep.subr.mxu0 0.0
      %1995 = vmatpush1.msra.mxu0 0.0
      %1996 = vmatprep.subr.mxu0 0.0
      %1997 = vmatpush1.msra.mxu0 0.0
      %1998 = vmatprep.subr.mxu0 0.0
      %1999 = vmatpush1.msra.mxu0 0.0
      %2000 = vmatprep.subr.mxu0 0.0
      %2001 = vmatpush1.msra.mxu0 0.0
      %2002 = vmatprep.subr.mxu0 0.0
      %2003 = vmatpush1.msra.mxu0 0.0
      %2004 = vmatprep.subr.mxu0 0.0
      %2005 = vmatpush1.msra.mxu0 0.0
      %2006 = vmatprep.subr.mxu0 0.0
      %2007 = vmatpush1.msra.mxu0 0.0
      %2008 = vmatprep.subr.mxu0 0.0
      %2009 = vmatpush1.msra.mxu0 0.0
      %2010 = vmatprep.subr.mxu0 0.0
      %2011 = vmatpush1.msra.mxu0 0.0
      %2012 = vmatprep.subr.mxu0 0.0
      %2013 = vmatpush1.msra.mxu0 0.0
      %2014 = vmatprep.subr.mxu0 0.0
      %2015 = vmatpush1.msra.mxu0 0.0
      %2016 = vmatprep.subr.mxu0 0.0
      %2017 = vmatpush1.msra.mxu0 0.0
      %2018 = vmatprep.subr.mxu0 0.0
      %2019 = vmatpush1.msra.mxu0 0.0
      %2020 = vmatprep.subr.mxu0 0.0
      %2021 = vmatpush1.msra.mxu0 0.0
      %2022 = vmatprep.subr.mxu0 0.0
      %2023 = vmatpush1.msra.mxu0 0.0
      %2024 = vmatprep.subr.mxu0 0.0
      %2025 = vmatpush1.msra.mxu0 0.0
      %2026 = vmatprep.subr.mxu0 0.0
      %2027 = vmatpush1.msra.mxu0 0.0
      %2028 = vmatprep.subr.mxu0 0.0
      %2029 = vmatpush1.msra.mxu0 0.0
      %2030 = vmatprep.subr.mxu0 0.0
      %2031 = vmatpush1.msra.mxu0 0.0
      %2032 = vmatprep.subr.mxu0 0.0
      %2033 = vmatpush1.msra.mxu0 0.0
      %2034 = vmatprep.subr.mxu0 0.0
      %2035 = vmatpush1.msra.mxu0 0.0
      %2036 = vmatprep.subr.mxu0 0.0
      %2037 = vmatpush1.msra.mxu0 0.0
      %2038 = vmatprep.subr.mxu0 0.0
      %2039 = vmatpush1.msra.mxu0 0.0
      %2040 = vmatprep.mubr.f32.mxu0 0.0
      %2041 = vmatmul.mubr.f32.gmra.mrb[0].mxu0 %v1950
      %v2042 = vpop.f32.mrb[0].mxu0
      %v2043 = vadd.f32 %v1906, %v2042
      %v2044 = vpop.f32.mrb[0].mxu0
      %2045 = vmatprep.mubr.f32.mxu0 0.0
      %2046 = vmatmul.mubr.f32.gmra.mrb[0].mxu0 %v1953
      %v2047 = vpop.f32.mrb[0].mxu0
      %v2048 = vadd.f32 %v1911, %v2047
      %v2049 = vpop.f32.mrb[0].mxu0
      %2050 = vmatprep.mubr.f32.mxu0 0.0
      %2051 = vmatmul.mubr.f32.gmra.mrb[0].mxu0 %v1956
      %v2052 = vpop.f32.mrb[0].mxu0
      %v2053 = vadd.f32 %v1916, %v2052
      %v2054 = vpop.f32.mrb[0].mxu0
      %2055 = vmatprep.mubr.f32.mxu0 0.0
      %2056 = vmatmul.mubr.f32.gmra.mrb[0].mxu0 %v1959
      %v2057 = vpop.f32.mrb[0].mxu0
      %v2058 = vadd.f32 %v1921, %v2057
      %v2059 = vpop.f32.mrb[0].mxu0
      %2060 = vmatprep.mubr.f32.mxu0 0.0
      %2061 = vmatmul.mubr.f32.gmra.mrb[0].mxu0 %v1962
      %v2062 = vpop.f32.mrb[0].mxu0
      %v2063 = vadd.f32 %v1926, %v2062
      %v2064 = vpop.f32.mrb[0].mxu0
      %2065 = vmatprep.mubr.f32.mxu0 0.0
      %2066 = vmatmul.mubr.f32.gmra.mrb[0].mxu0 %v1965
      %v2067 = vpop.f32.mrb[0].mxu0
      %v2068 = vadd.f32 %v1931, %v2067
      %v2069 = vpop.f32.mrb[0].mxu0
      %2070 = vmatprep.mubr.f32.mxu0 0.0
      %2071 = vmatmul.mubr.f32.gmra.mrb[0].mxu0 %v1968
      %v2072 = vpop.f32.mrb[0].mxu0
      %v2073 = vadd.f32 %v1936, %v2072
      %v2074 = vpop.f32.mrb[0].mxu0
      %2075 = vmatprep.mubr.f32.mxu0 0.0
      %2076 = vmatmul.mubr.f32.gmra.mrb[0].mxu0 %v1971
      %v2077 = vpop.f32.mrb[0].mxu0
      %v2078 = vadd.f32 %v1941, %v2077
      %v2079 = vpop.f32.mrb[0].mxu0
      %2080 = vmatprep.mubr.f32.mxu0 0.0
      %2081 = vmatmul.mubr.f32.gmra.mrb[0].mxu0 %v1974
      %v2082 = vpop.f32.mrb[0].mxu0
      %v2083 = vadd.f32 %v1946, %v2082
      %v2084 = vpop.f32.mrb[0].mxu0
      %2085 = vdwg.mxu0
      %2086 = vrot.lane.b32.xlu0 %v862, 112
      %v2087 = vpop.permute.xlu0 %2086
      %2088 = vrot.lane.b32.xlu0 %v867, 112
      %v2089 = vpop.permute.xlu0 %2088
      %2090 = vrot.lane.b32.xlu0 %v872, 112
      %v2091 = vpop.permute.xlu0 %2090
      %2092 = vrot.lane.b32.xlu0 %v877, 112
      %v2093 = vpop.permute.xlu0 %2092
      %2094 = vrot.lane.b32.xlu0 %v882, 112
      %v2095 = vpop.permute.xlu0 %2094
      %2096 = vrot.lane.b32.xlu0 %v887, 112
      %v2097 = vpop.permute.xlu0 %2096
      %2098 = vrot.lane.b32.xlu0 %v892, 112
      %v2099 = vpop.permute.xlu0 %2098
      %2100 = vrot.lane.b32.xlu0 %v897, 112
      %v2101 = vpop.permute.xlu0 %2100
      %2102 = vrot.lane.b32.xlu0 %v902, 112
      %v2103 = vpop.permute.xlu0 %2102
      %2104 = vrot.lane.b32.xlu0 %v862, 80
      %v2105 = vpop.permute.xlu0 %2104
      %2106 = vrot.lane.b32.xlu0 %v867, 80
      %v2107 = vpop.permute.xlu0 %2106
      %2108 = vrot.lane.b32.xlu0 %v872, 80
      %v2109 = vpop.permute.xlu0 %2108
      %2110 = vrot.lane.b32.xlu0 %v877, 80
      %v2111 = vpop.permute.xlu0 %2110
      %2112 = vrot.lane.b32.xlu0 %v882, 80
      %v2113 = vpop.permute.xlu0 %2112
      %2114 = vrot.lane.b32.xlu0 %v887, 80
      %v2115 = vpop.permute.xlu0 %2114
      %2116 = vrot.lane.b32.xlu0 %v892, 80
      %v2117 = vpop.permute.xlu0 %2116
      %2118 = vrot.lane.b32.xlu0 %v897, 80
      %v2119 = vpop.permute.xlu0 %2118
      %2120 = vrot.lane.b32.xlu0 %v902, 80
      %v2121 = vpop.permute.xlu0 %2120
      %v2122 = vsel %vm932, %v2087, 0
      %v2124 = vsel %vm932, %v2089, 0
      %v2126 = vsel %vm932, %v2091, 0
      %v2128 = vsel %vm932, %v2093, 0
      %v2130 = vsel %vm932, %v2095, 0
      %v2132 = vsel %vm932, %v2097, 0
      %v2134 = vsel %vm932, %v2099, 0
      %v2136 = vsel %vm932, %v2101, 0
      %v2138 = vsel %vm932, %v2103, 0
      %v2140 = vsel %vm932, %v2105, 0
      %v2142 = vsel %vm932, %v2107, 0
      %v2144 = vsel %vm932, %v2109, 0
      %v2146 = vsel %vm932, %v2111, 0
      %v2148 = vsel %vm932, %v2113, 0
      %v2150 = vsel %vm932, %v2115, 0
      %v2152 = vsel %vm932, %v2117, 0
      %v2154 = vsel %vm932, %v2119, 0
      %v2156 = vsel %vm932, %v2121, 0
      %2158 = vmatprep.subr.mxu0 0.0
      %2159 = vmatpush1.xpose.msra.mxu0 %v2140
      %2160 = vmatprep.subr.mxu0 0.0
      %2161 = vmatpush1.xpose.msra.mxu0 %v2142
      %2162 = vmatprep.subr.mxu0 0.0
      %2163 = vmatpush1.xpose.msra.mxu0 %v2144
      %2164 = vmatprep.subr.mxu0 0.0
      %2165 = vmatpush1.xpose.msra.mxu0 %v2146
      %2166 = vmatprep.subr.mxu0 0.0
      %2167 = vmatpush1.xpose.msra.mxu0 %v2148
      %2168 = vmatprep.subr.mxu0 0.0
      %2169 = vmatpush1.xpose.msra.mxu0 %v2150
      %2170 = vmatprep.subr.mxu0 0.0
      %2171 = vmatpush1.xpose.msra.mxu0 %v2152
      %2172 = vmatprep.subr.mxu0 0.0
      %2173 = vmatpush1.xpose.msra.mxu0 %v2154
      %2174 = vmatprep.subr.mxu0 0.0
      %2175 = vmatpush1.xpose.msra.mxu0 %v2156
      %2176 = vmatprep.subr.mxu0 0.0
      %2177 = vmatpush1.xpose.msra.mxu0 0.0
      %2178 = vmatprep.subr.mxu0 0.0
      %2179 = vmatpush1.xpose.msra.mxu0 0.0
      %2180 = vmatprep.subr.mxu0 0.0
      %2181 = vmatpush1.xpose.msra.mxu0 0.0
      %2182 = vmatprep.subr.mxu0 0.0
      %2183 = vmatpush1.xpose.msra.mxu0 0.0
      %2184 = vmatprep.subr.mxu0 0.0
      %2185 = vmatpush1.xpose.msra.mxu0 0.0
      %2186 = vmatprep.subr.mxu0 0.0
      %2187 = vmatpush1.xpose.msra.mxu0 0.0
      %2188 = vmatprep.subr.mxu0 0.0
      %2189 = vmatpush1.xpose.msra.mxu0 0.0
      %2190 = vmatprep.subr.mxu0 0.0
      %2191 = vmatpush1.xpose.msra.mxu0 0.0
      %2192 = vmatprep.subr.mxu0 0.0
      %2193 = vmatpush1.xpose.msra.mxu0 0.0
      %2194 = vmatprep.subr.mxu0 0.0
      %2195 = vmatpush1.xpose.msra.mxu0 0.0
      %2196 = vmatprep.subr.mxu0 0.0
      %2197 = vmatpush1.xpose.msra.mxu0 0.0
      %2198 = vmatprep.subr.mxu0 0.0
      %2199 = vmatpush1.xpose.msra.mxu0 0.0
      %2200 = vmatprep.subr.mxu0 0.0
      %2201 = vmatpush1.xpose.msra.mxu0 0.0
      %2202 = vmatprep.subr.mxu0 0.0
      %2203 = vmatpush1.xpose.msra.mxu0 0.0
      %2204 = vmatprep.subr.mxu0 0.0
      %2205 = vmatpush1.xpose.msra.mxu0 0.0
      %2206 = vmatprep.subr.mxu0 0.0
      %2207 = vmatpush1.xpose.msra.mxu0 0.0
      %2208 = vmatprep.subr.mxu0 0.0
      %2209 = vmatpush1.xpose.msra.mxu0 0.0
      %2210 = vmatprep.subr.mxu0 0.0
      %2211 = vmatpush1.xpose.msra.mxu0 0.0
      %2212 = vmatprep.subr.mxu0 0.0
      %2213 = vmatpush1.xpose.msra.mxu0 0.0
      %2214 = vmatprep.subr.mxu0 0.0
      %2215 = vmatpush1.xpose.msra.mxu0 0.0
      %2216 = vmatprep.subr.mxu0 0.0
      %2217 = vmatpush1.xpose.msra.mxu0 0.0
      %2218 = vmatprep.subr.mxu0 0.0
      %2219 = vmatpush1.xpose.msra.mxu0 0.0
      %2220 = vmatprep.subr.mxu0 0.0
      %2221 = vmatpush1.xpose.msra.mxu0 0.0
      %2222 = vmatprep.mubr.f32.mxu0 0.0
      %2223 = vmatmul.mubr.f32.gmra.mrb[0].mxu0 %v2122
      %v2224 = vpop.f32.mrb[0].mxu0
      %v2225 = vadd.f32 0.0, %v2224
      %v2226 = vpop.f32.mrb[0].mxu0
      %2227 = vmatprep.mubr.f32.mxu0 0.0
      %2228 = vmatmul.mubr.f32.gmra.mrb[0].mxu0 %v2124
      %v2229 = vpop.f32.mrb[0].mxu0
      %v2230 = vadd.f32 0.0, %v2229
      %v2231 = vpop.f32.mrb[0].mxu0
      %2232 = vmatprep.mubr.f32.mxu0 0.0
      %2233 = vmatmul.mubr.f32.gmra.mrb[0].mxu0 %v2126
      %v2234 = vpop.f32.mrb[0].mxu0
      %v2235 = vadd.f32 0.0, %v2234
      %v2236 = vpop.f32.mrb[0].mxu0
      %2237 = vmatprep.mubr.f32.mxu0 0.0
      %2238 = vmatmul.mubr.f32.gmra.mrb[0].mxu0 %v2128
      %v2239 = vpop.f32.mrb[0].mxu0
      %v2240 = vadd.f32 0.0, %v2239
      %v2241 = vpop.f32.mrb[0].mxu0
      %2242 = vmatprep.mubr.f32.mxu0 0.0
      %2243 = vmatmul.mubr.f32.gmra.mrb[0].mxu0 %v2130
      %v2244 = vpop.f32.mrb[0].mxu0
      %v2245 = vadd.f32 0.0, %v2244
      %v2246 = vpop.f32.mrb[0].mxu0
      %2247 = vmatprep.mubr.f32.mxu0 0.0
      %2248 = vmatmul.mubr.f32.gmra.mrb[0].mxu0 %v2132
      %v2249 = vpop.f32.mrb[0].mxu0
      %v2250 = vadd.f32 0.0, %v2249
      %v2251 = vpop.f32.mrb[0].mxu0
      %2252 = vmatprep.mubr.f32.mxu0 0.0
      %2253 = vmatmul.mubr.f32.gmra.mrb[0].mxu0 %v2134
      %v2254 = vpop.f32.mrb[0].mxu0
      %v2255 = vadd.f32 0.0, %v2254
      %v2256 = vpop.f32.mrb[0].mxu0
      %2257 = vmatprep.mubr.f32.mxu0 0.0
      %2258 = vmatmul.mubr.f32.gmra.mrb[0].mxu0 %v2136
      %v2259 = vpop.f32.mrb[0].mxu0
      %v2260 = vadd.f32 0.0, %v2259
      %v2261 = vpop.f32.mrb[0].mxu0
      %2262 = vmatprep.mubr.f32.mxu0 0.0
      %2263 = vmatmul.mubr.f32.gmra.mrb[0].mxu0 %v2138
      %v2264 = vpop.f32.mrb[0].mxu0
      %v2265 = vadd.f32 0.0, %v2264
      %v2266 = vpop.f32.mrb[0].mxu0
      %2267 = vdwg.mxu0
      %v2268 = vmul.f32 %v2225, 0.35355338
      %v2269 = vmul.f32 %v2230, 0.35355338
      %v2270 = vmul.f32 %v2235, 0.35355338
      %v2271 = vmul.f32 %v2240, 0.35355338
      %v2272 = vmul.f32 %v2245, 0.35355338
      %v2273 = vmul.f32 %v2250, 0.35355338
      %v2274 = vmul.f32 %v2255, 0.35355338
      %v2275 = vmul.f32 %v2260, 0.35355338
      %v2276 = vmul.f32 %v2265, 0.35355338
      %v2277 = vsel %vm1088, %v2268, -inf
      %2278 = vmax.xlane.f32.xlu0 %v2277
      %v2279 = vpop.xlane.xlu0 %2278
      %v2280 = vsel %vm1088, %v2269, -inf
      %2281 = vmax.xlane.f32.xlu0 %v2280
      %v2282 = vpop.xlane.xlu0 %2281
      %v2283 = vsel %vm1088, %v2270, -inf
      %2284 = vmax.xlane.f32.xlu0 %v2283
      %v2285 = vpop.xlane.xlu0 %2284
      %v2286 = vsel %vm1088, %v2271, -inf
      %2287 = vmax.xlane.f32.xlu0 %v2286
      %v2288 = vpop.xlane.xlu0 %2287
      %v2289 = vsel %vm1088, %v2272, -inf
      %2290 = vmax.xlane.f32.xlu0 %v2289
      %v2291 = vpop.xlane.xlu0 %2290
      %v2292 = vsel %vm1088, %v2273, -inf
      %2293 = vmax.xlane.f32.xlu0 %v2292
      %v2294 = vpop.xlane.xlu0 %2293
      %v2295 = vsel %vm1088, %v2274, -inf
      %2296 = vmax.xlane.f32.xlu0 %v2295
      %v2297 = vpop.xlane.xlu0 %2296
      %v2298 = vsel %vm1088, %v2275, -inf
      %2299 = vmax.xlane.f32.xlu0 %v2298
      %v2300 = vpop.xlane.xlu0 %2299
      %v2301 = vsel %vm1113, %v2276, -inf
      %2302 = vmax.xlane.f32.xlu0 %v2301
      %v2303 = vpop.xlane.xlu0 %2302
      %v2304 = vsub.f32 %v2268, %v2279
      %v2305 = vsub.f32 %v2269, %v2282
      %v2306 = vsub.f32 %v2270, %v2285
      %v2307 = vsub.f32 %v2271, %v2288
      %v2308 = vsub.f32 %v2272, %v2291
      %v2309 = vsub.f32 %v2273, %v2294
      %v2310 = vsub.f32 %v2274, %v2297
      %v2311 = vsub.f32 %v2275, %v2300
      %v2312 = vsub.f32 %v2276, %v2303
      %v2313 = vmul.f32 %v2304, 1.442695
      %v2314 = vpow.pop %v2313
      %v2315 = vmul.f32 %v2305, 1.442695
      %v2316 = vpow.pop %v2315
      %v2317 = vmul.f32 %v2306, 1.442695
      %v2318 = vpow.pop %v2317
      %v2319 = vmul.f32 %v2307, 1.442695
      %v2320 = vpow.pop %v2319
      %v2321 = vmul.f32 %v2308, 1.442695
      %v2322 = vpow.pop %v2321
      %v2323 = vmul.f32 %v2309, 1.442695
      %v2324 = vpow.pop %v2323
      %v2325 = vmul.f32 %v2310, 1.442695
      %v2326 = vpow.pop %v2325
      %v2327 = vmul.f32 %v2311, 1.442695
      %v2328 = vpow.pop %v2327
      %v2329 = vmul.f32 %v2312, 1.442695
      %v2330 = vpow.pop %v2329
      %v2331 = vsel %vm1088, %v2314, 0.0
      %2332 = vadd.xlane.f32.xlu0 %v2331
      %v2333 = vpop.xlane.xlu0 %2332
      %v2334 = vsel %vm1088, %v2316, 0.0
      %2335 = vadd.xlane.f32.xlu0 %v2334
      %v2336 = vpop.xlane.xlu0 %2335
      %v2337 = vsel %vm1088, %v2318, 0.0
      %2338 = vadd.xlane.f32.xlu0 %v2337
      %v2339 = vpop.xlane.xlu0 %2338
      %v2340 = vsel %vm1088, %v2320, 0.0
      %2341 = vadd.xlane.f32.xlu0 %v2340
      %v2342 = vpop.xlane.xlu0 %2341
      %v2343 = vsel %vm1088, %v2322, 0.0
      %2344 = vadd.xlane.f32.xlu0 %v2343
      %v2345 = vpop.xlane.xlu0 %2344
      %v2346 = vsel %vm1088, %v2324, 0.0
      %2347 = vadd.xlane.f32.xlu0 %v2346
      %v2348 = vpop.xlane.xlu0 %2347
      %v2349 = vsel %vm1088, %v2326, 0.0
      %2350 = vadd.xlane.f32.xlu0 %v2349
      %v2351 = vpop.xlane.xlu0 %2350
      %v2352 = vsel %vm1088, %v2328, 0.0
      %2353 = vadd.xlane.f32.xlu0 %v2352
      %v2354 = vpop.xlane.xlu0 %2353
      %v2355 = vsel %vm1113, %v2330, 0.0
      %2356 = vadd.xlane.f32.xlu0 %v2355
      %v2357 = vpop.xlane.xlu0 %2356
      %v2358 = vrcp.pop %v2333
      %v2359 = vrcp.pop %v2336
      %v2360 = vrcp.pop %v2339
      %v2361 = vrcp.pop %v2342
      %v2362 = vrcp.pop %v2345
      %v2363 = vrcp.pop %v2348
      %v2364 = vrcp.pop %v2351
      %v2365 = vrcp.pop %v2354
      %v2366 = vrcp.pop %v2357
      %v2367 = vmul.f32 %v2314, %v2358
      %v2368 = vmul.f32 %v2316, %v2359
      %v2369 = vmul.f32 %v2318, %v2360
      %v2370 = vmul.f32 %v2320, %v2361
      %v2371 = vmul.f32 %v2322, %v2362
      %v2372 = vmul.f32 %v2324, %v2363
      %v2373 = vmul.f32 %v2326, %v2364
      %v2374 = vmul.f32 %v2328, %v2365
      %v2375 = vmul.f32 %v2330, %v2366
      %2376 = vrot.lane.b32.xlu0 %v862, 48
      %v2377 = vpop.permute.xlu0 %2376
      %2378 = vrot.lane.b32.xlu0 %v867, 48
      %v2379 = vpop.permute.xlu0 %2378
      %2380 = vrot.lane.b32.xlu0 %v872, 48
      %v2381 = vpop.permute.xlu0 %2380
      %2382 = vrot.lane.b32.xlu0 %v877, 48
      %v2383 = vpop.permute.xlu0 %2382
      %2384 = vrot.lane.b32.xlu0 %v882, 48
      %v2385 = vpop.permute.xlu0 %2384
      %2386 = vrot.lane.b32.xlu0 %v887, 48
      %v2387 = vpop.permute.xlu0 %2386
      %2388 = vrot.lane.b32.xlu0 %v892, 48
      %v2389 = vpop.permute.xlu0 %2388
      %2390 = vrot.lane.b32.xlu0 %v897, 48
      %v2391 = vpop.permute.xlu0 %2390
      %2392 = vrot.lane.b32.xlu0 %v902, 48
      %v2393 = vpop.permute.xlu0 %2392
      %v2403 = vsel %vm1088, %v2367, 0
      %v2406 = vsel %vm1088, %v2368, 0
      %v2409 = vsel %vm1088, %v2369, 0
      %v2412 = vsel %vm1088, %v2370, 0
      %v2415 = vsel %vm1088, %v2371, 0
      %v2418 = vsel %vm1088, %v2372, 0
      %v2421 = vsel %vm1088, %v2373, 0
      %v2424 = vsel %vm1088, %v2374, 0
      %v2427 = vsel %vm1088, %v2375, 0
      %v2429 = vsel %vm1242, %v2393, 0
      %2431 = vmatprep.subr.mxu0 0.0
      %2432 = vmatpush1.msra.mxu0 %v2377
      %2433 = vmatprep.subr.mxu0 0.0
      %2434 = vmatpush1.msra.mxu0 %v2379
      %2435 = vmatprep.subr.mxu0 0.0
      %2436 = vmatpush1.msra.mxu0 %v2381
      %2437 = vmatprep.subr.mxu0 0.0
      %2438 = vmatpush1.msra.mxu0 %v2383
      %2439 = vmatprep.subr.mxu0 0.0
      %2440 = vmatpush1.msra.mxu0 %v2385
      %2441 = vmatprep.subr.mxu0 0.0
      %2442 = vmatpush1.msra.mxu0 %v2387
      %2443 = vmatprep.subr.mxu0 0.0
      %2444 = vmatpush1.msra.mxu0 %v2389
      %2445 = vmatprep.subr.mxu0 0.0
      %2446 = vmatpush1.msra.mxu0 %v2391
      %2447 = vmatprep.subr.mxu0 0.0
      %2448 = vmatpush1.msra.mxu0 %v2429
      %2449 = vmatprep.subr.mxu0 0.0
      %2450 = vmatpush1.msra.mxu0 0.0
      %2451 = vmatprep.subr.mxu0 0.0
      %2452 = vmatpush1.msra.mxu0 0.0
      %2453 = vmatprep.subr.mxu0 0.0
      %2454 = vmatpush1.msra.mxu0 0.0
      %2455 = vmatprep.subr.mxu0 0.0
      %2456 = vmatpush1.msra.mxu0 0.0
      %2457 = vmatprep.subr.mxu0 0.0
      %2458 = vmatpush1.msra.mxu0 0.0
      %2459 = vmatprep.subr.mxu0 0.0
      %2460 = vmatpush1.msra.mxu0 0.0
      %2461 = vmatprep.subr.mxu0 0.0
      %2462 = vmatpush1.msra.mxu0 0.0
      %2463 = vmatprep.subr.mxu0 0.0
      %2464 = vmatpush1.msra.mxu0 0.0
      %2465 = vmatprep.subr.mxu0 0.0
      %2466 = vmatpush1.msra.mxu0 0.0
      %2467 = vmatprep.subr.mxu0 0.0
      %2468 = vmatpush1.msra.mxu0 0.0
      %2469 = vmatprep.subr.mxu0 0.0
      %2470 = vmatpush1.msra.mxu0 0.0
      %2471 = vmatprep.subr.mxu0 0.0
      %2472 = vmatpush1.msra.mxu0 0.0
      %2473 = vmatprep.subr.mxu0 0.0
      %2474 = vmatpush1.msra.mxu0 0.0
      %2475 = vmatprep.subr.mxu0 0.0
      %2476 = vmatpush1.msra.mxu0 0.0
      %2477 = vmatprep.subr.mxu0 0.0
      %2478 = vmatpush1.msra.mxu0 0.0
      %2479 = vmatprep.subr.mxu0 0.0
      %2480 = vmatpush1.msra.mxu0 0.0
      %2481 = vmatprep.subr.mxu0 0.0
      %2482 = vmatpush1.msra.mxu0 0.0
      %2483 = vmatprep.subr.mxu0 0.0
      %2484 = vmatpush1.msra.mxu0 0.0
      %2485 = vmatprep.subr.mxu0 0.0
      %2486 = vmatpush1.msra.mxu0 0.0
      %2487 = vmatprep.subr.mxu0 0.0
      %2488 = vmatpush1.msra.mxu0 0.0
      %2489 = vmatprep.subr.mxu0 0.0
      %2490 = vmatpush1.msra.mxu0 0.0
      %2491 = vmatprep.subr.mxu0 0.0
      %2492 = vmatpush1.msra.mxu0 0.0
      %2493 = vmatprep.subr.mxu0 0.0
      %2494 = vmatpush1.msra.mxu0 0.0
      %2495 = vmatprep.mubr.f32.mxu0 0.0
      %2496 = vmatmul.mubr.f32.gmra.mrb[0].mxu0 %v2403
      %v2497 = vpop.f32.mrb[0].mxu0
      %v2498 = vadd.f32 0.0, %v2497
      %v2499 = vpop.f32.mrb[0].mxu0
      %2500 = vmatprep.mubr.f32.mxu0 0.0
      %2501 = vmatmul.mubr.f32.gmra.mrb[0].mxu0 %v2406
      %v2502 = vpop.f32.mrb[0].mxu0
      %v2503 = vadd.f32 0.0, %v2502
      %v2504 = vpop.f32.mrb[0].mxu0
      %2505 = vmatprep.mubr.f32.mxu0 0.0
      %2506 = vmatmul.mubr.f32.gmra.mrb[0].mxu0 %v2409
      %v2507 = vpop.f32.mrb[0].mxu0
      %v2508 = vadd.f32 0.0, %v2507
      %v2509 = vpop.f32.mrb[0].mxu0
      %2510 = vmatprep.mubr.f32.mxu0 0.0
      %2511 = vmatmul.mubr.f32.gmra.mrb[0].mxu0 %v2412
      %v2512 = vpop.f32.mrb[0].mxu0
      %v2513 = vadd.f32 0.0, %v2512
      %v2514 = vpop.f32.mrb[0].mxu0
      %2515 = vmatprep.mubr.f32.mxu0 0.0
      %2516 = vmatmul.mubr.f32.gmra.mrb[0].mxu0 %v2415
      %v2517 = vpop.f32.mrb[0].mxu0
      %v2518 = vadd.f32 0.0, %v2517
      %v2519 = vpop.f32.mrb[0].mxu0
      %2520 = vmatprep.mubr.f32.mxu0 0.0
      %2521 = vmatmul.mubr.f32.gmra.mrb[0].mxu0 %v2418
      %v2522 = vpop.f32.mrb[0].mxu0
      %v2523 = vadd.f32 0.0, %v2522
      %v2524 = vpop.f32.mrb[0].mxu0
      %2525 = vmatprep.mubr.f32.mxu0 0.0
      %2526 = vmatmul.mubr.f32.gmra.mrb[0].mxu0 %v2421
      %v2527 = vpop.f32.mrb[0].mxu0
      %v2528 = vadd.f32 0.0, %v2527
      %v2529 = vpop.f32.mrb[0].mxu0
      %2530 = vmatprep.mubr.f32.mxu0 0.0
      %2531 = vmatmul.mubr.f32.gmra.mrb[0].mxu0 %v2424
      %v2532 = vpop.f32.mrb[0].mxu0
      %v2533 = vadd.f32 0.0, %v2532
      %v2534 = vpop.f32.mrb[0].mxu0
      %2535 = vmatprep.mubr.f32.mxu0 0.0
      %2536 = vmatmul.mubr.f32.gmra.mrb[0].mxu0 %v2427
      %v2537 = vpop.f32.mrb[0].mxu0
      %v2538 = vadd.f32 0.0, %v2537
      %v2539 = vpop.f32.mrb[0].mxu0
      %2540 = vdwg.mxu0
      %v2541 = vld [vmem:[%s4 + $0x10] sm:$0xff]
      %v2543 = vsel %vm932, %v2498, 0
      %v2546 = vsel %vm932, %v2503, 0
      %v2549 = vsel %vm932, %v2508, 0
      %v2552 = vsel %vm932, %v2513, 0
      %v2555 = vsel %vm932, %v2518, 0
      %v2558 = vsel %vm932, %v2523, 0
      %v2561 = vsel %vm932, %v2528, 0
      %v2564 = vsel %vm932, %v2533, 0
      %v2567 = vsel %vm932, %v2538, 0
      %2569 = vmatprep.subr.mxu0 0.0
      %2570 = vmatpush1.msra.mxu0 %v2541
      %2571 = vmatprep.subr.mxu0 0.0
      %2572 = vmatpush1.msra.mxu0 0.0
      %2573 = vmatprep.subr.mxu0 0.0
      %2574 = vmatpush1.msra.mxu0 0.0
      %2575 = vmatprep.subr.mxu0 0.0
      %2576 = vmatpush1.msra.mxu0 0.0
      %2577 = vmatprep.subr.mxu0 0.0
      %2578 = vmatpush1.msra.mxu0 0.0
      %2579 = vmatprep.subr.mxu0 0.0
      %2580 = vmatpush1.msra.mxu0 0.0
      %2581 = vmatprep.subr.mxu0 0.0
      %2582 = vmatpush1.msra.mxu0 0.0
      %2583 = vmatprep.subr.mxu0 0.0
      %2584 = vmatpush1.msra.mxu0 0.0
      %2585 = vmatprep.subr.mxu0 0.0
      %2586 = vmatpush1.msra.mxu0 0.0
      %2587 = vmatprep.subr.mxu0 0.0
      %2588 = vmatpush1.msra.mxu0 0.0
      %2589 = vmatprep.subr.mxu0 0.0
      %2590 = vmatpush1.msra.mxu0 0.0
      %2591 = vmatprep.subr.mxu0 0.0
      %2592 = vmatpush1.msra.mxu0 0.0
      %2593 = vmatprep.subr.mxu0 0.0
      %2594 = vmatpush1.msra.mxu0 0.0
      %2595 = vmatprep.subr.mxu0 0.0
      %2596 = vmatpush1.msra.mxu0 0.0
      %2597 = vmatprep.subr.mxu0 0.0
      %2598 = vmatpush1.msra.mxu0 0.0
      %2599 = vmatprep.subr.mxu0 0.0
      %2600 = vmatpush1.msra.mxu0 0.0
      %2601 = vmatprep.subr.mxu0 0.0
      %2602 = vmatpush1.msra.mxu0 0.0
      %2603 = vmatprep.subr.mxu0 0.0
      %2604 = vmatpush1.msra.mxu0 0.0
      %2605 = vmatprep.subr.mxu0 0.0
      %2606 = vmatpush1.msra.mxu0 0.0
      %2607 = vmatprep.subr.mxu0 0.0
      %2608 = vmatpush1.msra.mxu0 0.0
      %2609 = vmatprep.subr.mxu0 0.0
      %2610 = vmatpush1.msra.mxu0 0.0
      %2611 = vmatprep.subr.mxu0 0.0
      %2612 = vmatpush1.msra.mxu0 0.0
      %2613 = vmatprep.subr.mxu0 0.0
      %2614 = vmatpush1.msra.mxu0 0.0
      %2615 = vmatprep.subr.mxu0 0.0
      %2616 = vmatpush1.msra.mxu0 0.0
      %2617 = vmatprep.subr.mxu0 0.0
      %2618 = vmatpush1.msra.mxu0 0.0
      %2619 = vmatprep.subr.mxu0 0.0
      %2620 = vmatpush1.msra.mxu0 0.0
      %2621 = vmatprep.subr.mxu0 0.0
      %2622 = vmatpush1.msra.mxu0 0.0
      %2623 = vmatprep.subr.mxu0 0.0
      %2624 = vmatpush1.msra.mxu0 0.0
      %2625 = vmatprep.subr.mxu0 0.0
      %2626 = vmatpush1.msra.mxu0 0.0
      %2627 = vmatprep.subr.mxu0 0.0
      %2628 = vmatpush1.msra.mxu0 0.0
      %2629 = vmatprep.subr.mxu0 0.0
      %2630 = vmatpush1.msra.mxu0 0.0
      %2631 = vmatprep.subr.mxu0 0.0
      %2632 = vmatpush1.msra.mxu0 0.0
      %2633 = vmatprep.mubr.f32.mxu0 0.0
      %2634 = vmatmul.mubr.f32.gmra.mrb[0].mxu0 %v2543
      %v2635 = vpop.f32.mrb[0].mxu0
      %v2636 = vadd.f32 0.0, %v2635
      %v2637 = vpop.f32.mrb[0].mxu0
      %2638 = vmatprep.mubr.f32.mxu0 0.0
      %2639 = vmatmul.mubr.f32.gmra.mrb[0].mxu0 %v2546
      %v2640 = vpop.f32.mrb[0].mxu0
      %v2641 = vadd.f32 0.0, %v2640
      %v2642 = vpop.f32.mrb[0].mxu0
      %2643 = vmatprep.mubr.f32.mxu0 0.0
      %2644 = vmatmul.mubr.f32.gmra.mrb[0].mxu0 %v2549
      %v2645 = vpop.f32.mrb[0].mxu0
      %v2646 = vadd.f32 0.0, %v2645
      %v2647 = vpop.f32.mrb[0].mxu0
      %2648 = vmatprep.mubr.f32.mxu0 0.0
      %2649 = vmatmul.mubr.f32.gmra.mrb[0].mxu0 %v2552
      %v2650 = vpop.f32.mrb[0].mxu0
      %v2651 = vadd.f32 0.0, %v2650
      %v2652 = vpop.f32.mrb[0].mxu0
      %2653 = vmatprep.mubr.f32.mxu0 0.0
      %2654 = vmatmul.mubr.f32.gmra.mrb[0].mxu0 %v2555
      %v2655 = vpop.f32.mrb[0].mxu0
      %v2656 = vadd.f32 0.0, %v2655
      %v2657 = vpop.f32.mrb[0].mxu0
      %2658 = vmatprep.mubr.f32.mxu0 0.0
      %2659 = vmatmul.mubr.f32.gmra.mrb[0].mxu0 %v2558
      %v2660 = vpop.f32.mrb[0].mxu0
      %v2661 = vadd.f32 0.0, %v2660
      %v2662 = vpop.f32.mrb[0].mxu0
      %2663 = vmatprep.mubr.f32.mxu0 0.0
      %2664 = vmatmul.mubr.f32.gmra.mrb[0].mxu0 %v2561
      %v2665 = vpop.f32.mrb[0].mxu0
      %v2666 = vadd.f32 0.0, %v2665
      %v2667 = vpop.f32.mrb[0].mxu0
      %2668 = vmatprep.mubr.f32.mxu0 0.0
      %2669 = vmatmul.mubr.f32.gmra.mrb[0].mxu0 %v2564
      %v2670 = vpop.f32.mrb[0].mxu0
      %v2671 = vadd.f32 0.0, %v2670
      %v2672 = vpop.f32.mrb[0].mxu0
      %2673 = vmatprep.mubr.f32.mxu0 0.0
      %2674 = vmatmul.mubr.f32.gmra.mrb[0].mxu0 %v2567
      %v2675 = vpop.f32.mrb[0].mxu0
      %v2676 = vadd.f32 0.0, %v2675
      %v2677 = vpop.f32.mrb[0].mxu0
      %2678 = vdwg.mxu0
      %v2679 = vadd.f32 %v2043, %v2636
      %v2680 = vadd.f32 %v2048, %v2641
      %v2681 = vadd.f32 %v2053, %v2646
      %v2682 = vadd.f32 %v2058, %v2651
      %v2683 = vadd.f32 %v2063, %v2656
      %v2684 = vadd.f32 %v2068, %v2661
      %v2685 = vadd.f32 %v2073, %v2666
      %v2686 = vadd.f32 %v2078, %v2671
      %v2687 = vadd.f32 %v2083, %v2676
      %2688 = vrot.lane.b32.xlu0 %v862, 104
      %v2689 = vpop.permute.xlu0 %2688
      %2690 = vrot.lane.b32.xlu0 %v867, 104
      %v2691 = vpop.permute.xlu0 %2690
      %2692 = vrot.lane.b32.xlu0 %v872, 104
      %v2693 = vpop.permute.xlu0 %2692
      %2694 = vrot.lane.b32.xlu0 %v877, 104
      %v2695 = vpop.permute.xlu0 %2694
      %2696 = vrot.lane.b32.xlu0 %v882, 104
      %v2697 = vpop.permute.xlu0 %2696
      %2698 = vrot.lane.b32.xlu0 %v887, 104
      %v2699 = vpop.permute.xlu0 %2698
      %2700 = vrot.lane.b32.xlu0 %v892, 104
      %v2701 = vpop.permute.xlu0 %2700
      %2702 = vrot.lane.b32.xlu0 %v897, 104
      %v2703 = vpop.permute.xlu0 %2702
      %2704 = vrot.lane.b32.xlu0 %v902, 104
      %v2705 = vpop.permute.xlu0 %2704
      %2706 = vrot.lane.b32.xlu0 %v862, 72
      %v2707 = vpop.permute.xlu0 %2706
      %2708 = vrot.lane.b32.xlu0 %v867, 72
      %v2709 = vpop.permute.xlu0 %2708
      %2710 = vrot.lane.b32.xlu0 %v872, 72
      %v2711 = vpop.permute.xlu0 %2710
      %2712 = vrot.lane.b32.xlu0 %v877, 72
      %v2713 = vpop.permute.xlu0 %2712
      %2714 = vrot.lane.b32.xlu0 %v882, 72
      %v2715 = vpop.permute.xlu0 %2714
      %2716 = vrot.lane.b32.xlu0 %v887, 72
      %v2717 = vpop.permute.xlu0 %2716
      %2718 = vrot.lane.b32.xlu0 %v892, 72
      %v2719 = vpop.permute.xlu0 %2718
      %2720 = vrot.lane.b32.xlu0 %v897, 72
      %v2721 = vpop.permute.xlu0 %2720
      %2722 = vrot.lane.b32.xlu0 %v902, 72
      %v2723 = vpop.permute.xlu0 %2722
      %v2724 = vsel %vm932, %v2689, 0
      %v2726 = vsel %vm932, %v2691, 0
      %v2728 = vsel %vm932, %v2693, 0
      %v2730 = vsel %vm932, %v2695, 0
      %v2732 = vsel %vm932, %v2697, 0
      %v2734 = vsel %vm932, %v2699, 0
      %v2736 = vsel %vm932, %v2701, 0
      %v2738 = vsel %vm932, %v2703, 0
      %v2740 = vsel %vm932, %v2705, 0
      %v2742 = vsel %vm932, %v2707, 0
      %v2744 = vsel %vm932, %v2709, 0
      %v2746 = vsel %vm932, %v2711, 0
      %v2748 = vsel %vm932, %v2713, 0
      %v2750 = vsel %vm932, %v2715, 0
      %v2752 = vsel %vm932, %v2717, 0
      %v2754 = vsel %vm932, %v2719, 0
      %v2756 = vsel %vm932, %v2721, 0
      %v2758 = vsel %vm932, %v2723, 0
      %2760 = vmatprep.subr.mxu0 0.0
      %2761 = vmatpush1.xpose.msra.mxu0 %v2742
      %2762 = vmatprep.subr.mxu0 0.0
      %2763 = vmatpush1.xpose.msra.mxu0 %v2744
      %2764 = vmatprep.subr.mxu0 0.0
      %2765 = vmatpush1.xpose.msra.mxu0 %v2746
      %2766 = vmatprep.subr.mxu0 0.0
      %2767 = vmatpush1.xpose.msra.mxu0 %v2748
      %2768 = vmatprep.subr.mxu0 0.0
      %2769 = vmatpush1.xpose.msra.mxu0 %v2750
      %2770 = vmatprep.subr.mxu0 0.0
      %2771 = vmatpush1.xpose.msra.mxu0 %v2752
      %2772 = vmatprep.subr.mxu0 0.0
      %2773 = vmatpush1.xpose.msra.mxu0 %v2754
      %2774 = vmatprep.subr.mxu0 0.0
      %2775 = vmatpush1.xpose.msra.mxu0 %v2756
      %2776 = vmatprep.subr.mxu0 0.0
      %2777 = vmatpush1.xpose.msra.mxu0 %v2758
      %2778 = vmatprep.subr.mxu0 0.0
      %2779 = vmatpush1.xpose.msra.mxu0 0.0
      %2780 = vmatprep.subr.mxu0 0.0
      %2781 = vmatpush1.xpose.msra.mxu0 0.0
      %2782 = vmatprep.subr.mxu0 0.0
      %2783 = vmatpush1.xpose.msra.mxu0 0.0
      %2784 = vmatprep.subr.mxu0 0.0
      %2785 = vmatpush1.xpose.msra.mxu0 0.0
      %2786 = vmatprep.subr.mxu0 0.0
      %2787 = vmatpush1.xpose.msra.mxu0 0.0
      %2788 = vmatprep.subr.mxu0 0.0
      %2789 = vmatpush1.xpose.msra.mxu0 0.0
      %2790 = vmatprep.subr.mxu0 0.0
      %2791 = vmatpush1.xpose.msra.mxu0 0.0
      %2792 = vmatprep.subr.mxu0 0.0
      %2793 = vmatpush1.xpose.msra.mxu0 0.0
      %2794 = vmatprep.subr.mxu0 0.0
      %2795 = vmatpush1.xpose.msra.mxu0 0.0
      %2796 = vmatprep.subr.mxu0 0.0
      %2797 = vmatpush1.xpose.msra.mxu0 0.0
      %2798 = vmatprep.subr.mxu0 0.0
      %2799 = vmatpush1.xpose.msra.mxu0 0.0
      %2800 = vmatprep.subr.mxu0 0.0
      %2801 = vmatpush1.xpose.msra.mxu0 0.0
      %2802 = vmatprep.subr.mxu0 0.0
      %2803 = vmatpush1.xpose.msra.mxu0 0.0
      %2804 = vmatprep.subr.mxu0 0.0
      %2805 = vmatpush1.xpose.msra.mxu0 0.0
      %2806 = vmatprep.subr.mxu0 0.0
      %2807 = vmatpush1.xpose.msra.mxu0 0.0
      %2808 = vmatprep.subr.mxu0 0.0
      %2809 = vmatpush1.xpose.msra.mxu0 0.0
      %2810 = vmatprep.subr.mxu0 0.0
      %2811 = vmatpush1.xpose.msra.mxu0 0.0
      %2812 = vmatprep.subr.mxu0 0.0
      %2813 = vmatpush1.xpose.msra.mxu0 0.0
      %2814 = vmatprep.subr.mxu0 0.0
      %2815 = vmatpush1.xpose.msra.mxu0 0.0
      %2816 = vmatprep.subr.mxu0 0.0
      %2817 = vmatpush1.xpose.msra.mxu0 0.0
      %2818 = vmatprep.subr.mxu0 0.0
      %2819 = vmatpush1.xpose.msra.mxu0 0.0
      %2820 = vmatprep.subr.mxu0 0.0
      %2821 = vmatpush1.xpose.msra.mxu0 0.0
      %2822 = vmatprep.subr.mxu0 0.0
      %2823 = vmatpush1.xpose.msra.mxu0 0.0
      %2824 = vmatprep.mubr.f32.mxu0 0.0
      %2825 = vmatmul.mubr.f32.gmra.mrb[0].mxu0 %v2724
      %v2826 = vpop.f32.mrb[0].mxu0
      %v2827 = vadd.f32 0.0, %v2826
      %v2828 = vpop.f32.mrb[0].mxu0
      %2829 = vmatprep.mubr.f32.mxu0 0.0
      %2830 = vmatmul.mubr.f32.gmra.mrb[0].mxu0 %v2726
      %v2831 = vpop.f32.mrb[0].mxu0
      %v2832 = vadd.f32 0.0, %v2831
      %v2833 = vpop.f32.mrb[0].mxu0
      %2834 = vmatprep.mubr.f32.mxu0 0.0
      %2835 = vmatmul.mubr.f32.gmra.mrb[0].mxu0 %v2728
      %v2836 = vpop.f32.mrb[0].mxu0
      %v2837 = vadd.f32 0.0, %v2836
      %v2838 = vpop.f32.mrb[0].mxu0
      %2839 = vmatprep.mubr.f32.mxu0 0.0
      %2840 = vmatmul.mubr.f32.gmra.mrb[0].mxu0 %v2730
      %v2841 = vpop.f32.mrb[0].mxu0
      %v2842 = vadd.f32 0.0, %v2841
      %v2843 = vpop.f32.mrb[0].mxu0
      %2844 = vmatprep.mubr.f32.mxu0 0.0
      %2845 = vmatmul.mubr.f32.gmra.mrb[0].mxu0 %v2732
      %v2846 = vpop.f32.mrb[0].mxu0
      %v2847 = vadd.f32 0.0, %v2846
      %v2848 = vpop.f32.mrb[0].mxu0
      %2849 = vmatprep.mubr.f32.mxu0 0.0
      %2850 = vmatmul.mubr.f32.gmra.mrb[0].mxu0 %v2734
      %v2851 = vpop.f32.mrb[0].mxu0
      %v2852 = vadd.f32 0.0, %v2851
      %v2853 = vpop.f32.mrb[0].mxu0
      %2854 = vmatprep.mubr.f32.mxu0 0.0
      %2855 = vmatmul.mubr.f32.gmra.mrb[0].mxu0 %v2736
      %v2856 = vpop.f32.mrb[0].mxu0
      %v2857 = vadd.f32 0.0, %v2856
      %v2858 = vpop.f32.mrb[0].mxu0
      %2859 = vmatprep.mubr.f32.mxu0 0.0
      %2860 = vmatmul.mubr.f32.gmra.mrb[0].mxu0 %v2738
      %v2861 = vpop.f32.mrb[0].mxu0
      %v2862 = vadd.f32 0.0, %v2861
      %v2863 = vpop.f32.mrb[0].mxu0
      %2864 = vmatprep.mubr.f32.mxu0 0.0
      %2865 = vmatmul.mubr.f32.gmra.mrb[0].mxu0 %v2740
      %v2866 = vpop.f32.mrb[0].mxu0
      %v2867 = vadd.f32 0.0, %v2866
      %v2868 = vpop.f32.mrb[0].mxu0
      %2869 = vdwg.mxu0
      %v2870 = vmul.f32 %v2827, 0.35355338
      %v2871 = vmul.f32 %v2832, 0.35355338
      %v2872 = vmul.f32 %v2837, 0.35355338
      %v2873 = vmul.f32 %v2842, 0.35355338
      %v2874 = vmul.f32 %v2847, 0.35355338
      %v2875 = vmul.f32 %v2852, 0.35355338
      %v2876 = vmul.f32 %v2857, 0.35355338
      %v2877 = vmul.f32 %v2862, 0.35355338
      %v2878 = vmul.f32 %v2867, 0.35355338
      %v2879 = vsel %vm1088, %v2870, -inf
      %2880 = vmax.xlane.f32.xlu0 %v2879
      %v2881 = vpop.xlane.xlu0 %2880
      %v2882 = vsel %vm1088, %v2871, -inf
      %2883 = vmax.xlane.f32.xlu0 %v2882
      %v2884 = vpop.xlane.xlu0 %2883
      %v2885 = vsel %vm1088, %v2872, -inf
      %2886 = vmax.xlane.f32.xlu0 %v2885
      %v2887 = vpop.xlane.xlu0 %2886
      %v2888 = vsel %vm1088, %v2873, -inf
      %2889 = vmax.xlane.f32.xlu0 %v2888
      %v2890 = vpop.xlane.xlu0 %2889
      %v2891 = vsel %vm1088, %v2874, -inf
      %2892 = vmax.xlane.f32.xlu0 %v2891
      %v2893 = vpop.xlane.xlu0 %2892
      %v2894 = vsel %vm1088, %v2875, -inf
      %2895 = vmax.xlane.f32.xlu0 %v2894
      %v2896 = vpop.xlane.xlu0 %2895
      %v2897 = vsel %vm1088, %v2876, -inf
      %2898 = vmax.xlane.f32.xlu0 %v2897
      %v2899 = vpop.xlane.xlu0 %2898
      %v2900 = vsel %vm1088, %v2877, -inf
      %2901 = vmax.xlane.f32.xlu0 %v2900
      %v2902 = vpop.xlane.xlu0 %2901
      %v2903 = vsel %vm1113, %v2878, -inf
      %2904 = vmax.xlane.f32.xlu0 %v2903
      %v2905 = vpop.xlane.xlu0 %2904
      %v2906 = vsub.f32 %v2870, %v2881
      %v2907 = vsub.f32 %v2871, %v2884
      %v2908 = vsub.f32 %v2872, %v2887
      %v2909 = vsub.f32 %v2873, %v2890
      %v2910 = vsub.f32 %v2874, %v2893
      %v2911 = vsub.f32 %v2875, %v2896
      %v2912 = vsub.f32 %v2876, %v2899
      %v2913 = vsub.f32 %v2877, %v2902
      %v2914 = vsub.f32 %v2878, %v2905
      %v2915 = vmul.f32 %v2906, 1.442695
      %v2916 = vpow.pop %v2915
      %v2917 = vmul.f32 %v2907, 1.442695
      %v2918 = vpow.pop %v2917
      %v2919 = vmul.f32 %v2908, 1.442695
      %v2920 = vpow.pop %v2919
      %v2921 = vmul.f32 %v2909, 1.442695
      %v2922 = vpow.pop %v2921
      %v2923 = vmul.f32 %v2910, 1.442695
      %v2924 = vpow.pop %v2923
      %v2925 = vmul.f32 %v2911, 1.442695
      %v2926 = vpow.pop %v2925
      %v2927 = vmul.f32 %v2912, 1.442695
      %v2928 = vpow.pop %v2927
      %v2929 = vmul.f32 %v2913, 1.442695
      %v2930 = vpow.pop %v2929
      %v2931 = vmul.f32 %v2914, 1.442695
      %v2932 = vpow.pop %v2931
      %v2933 = vsel %vm1088, %v2916, 0.0
      %2934 = vadd.xlane.f32.xlu0 %v2933
      %v2935 = vpop.xlane.xlu0 %2934
      %v2936 = vsel %vm1088, %v2918, 0.0
      %2937 = vadd.xlane.f32.xlu0 %v2936
      %v2938 = vpop.xlane.xlu0 %2937
      %v2939 = vsel %vm1088, %v2920, 0.0
      %2940 = vadd.xlane.f32.xlu0 %v2939
      %v2941 = vpop.xlane.xlu0 %2940
      %v2942 = vsel %vm1088, %v2922, 0.0
      %2943 = vadd.xlane.f32.xlu0 %v2942
      %v2944 = vpop.xlane.xlu0 %2943
      %v2945 = vsel %vm1088, %v2924, 0.0
      %2946 = vadd.xlane.f32.xlu0 %v2945
      %v2947 = vpop.xlane.xlu0 %2946
      %v2948 = vsel %vm1088, %v2926, 0.0
      %2949 = vadd.xlane.f32.xlu0 %v2948
      %v2950 = vpop.xlane.xlu0 %2949
      %v2951 = vsel %vm1088, %v2928, 0.0
      %2952 = vadd.xlane.f32.xlu0 %v2951
      %v2953 = vpop.xlane.xlu0 %2952
      %v2954 = vsel %vm1088, %v2930, 0.0
      %2955 = vadd.xlane.f32.xlu0 %v2954
      %v2956 = vpop.xlane.xlu0 %2955
      %v2957 = vsel %vm1113, %v2932, 0.0
      %2958 = vadd.xlane.f32.xlu0 %v2957
      %v2959 = vpop.xlane.xlu0 %2958
      %v2960 = vrcp.pop %v2935
      %v2961 = vrcp.pop %v2938
      %v2962 = vrcp.pop %v2941
      %v2963 = vrcp.pop %v2944
      %v2964 = vrcp.pop %v2947
      %v2965 = vrcp.pop %v2950
      %v2966 = vrcp.pop %v2953
      %v2967 = vrcp.pop %v2956
      %v2968 = vrcp.pop %v2959
      %v2969 = vmul.f32 %v2916, %v2960
      %v2970 = vmul.f32 %v2918, %v2961
      %v2971 = vmul.f32 %v2920, %v2962
      %v2972 = vmul.f32 %v2922, %v2963
      %v2973 = vmul.f32 %v2924, %v2964
      %v2974 = vmul.f32 %v2926, %v2965
      %v2975 = vmul.f32 %v2928, %v2966
      %v2976 = vmul.f32 %v2930, %v2967
      %v2977 = vmul.f32 %v2932, %v2968
      %2978 = vrot.lane.b32.xlu0 %v862, 40
      %v2979 = vpop.permute.xlu0 %2978
      %2980 = vrot.lane.b32.xlu0 %v867, 40
      %v2981 = vpop.permute.xlu0 %2980
      %2982 = vrot.lane.b32.xlu0 %v872, 40
      %v2983 = vpop.permute.xlu0 %2982
      %2984 = vrot.lane.b32.xlu0 %v877, 40
      %v2985 = vpop.permute.xlu0 %2984
      %2986 = vrot.lane.b32.xlu0 %v882, 40
      %v2987 = vpop.permute.xlu0 %2986
      %2988 = vrot.lane.b32.xlu0 %v887, 40
      %v2989 = vpop.permute.xlu0 %2988
      %2990 = vrot.lane.b32.xlu0 %v892, 40
      %v2991 = vpop.permute.xlu0 %2990
      %2992 = vrot.lane.b32.xlu0 %v897, 40
      %v2993 = vpop.permute.xlu0 %2992
      %2994 = vrot.lane.b32.xlu0 %v902, 40
      %v2995 = vpop.permute.xlu0 %2994
      %v3005 = vsel %vm1088, %v2969, 0
      %v3008 = vsel %vm1088, %v2970, 0
      %v3011 = vsel %vm1088, %v2971, 0
      %v3014 = vsel %vm1088, %v2972, 0
      %v3017 = vsel %vm1088, %v2973, 0
      %v3020 = vsel %vm1088, %v2974, 0
      %v3023 = vsel %vm1088, %v2975, 0
      %v3026 = vsel %vm1088, %v2976, 0
      %v3029 = vsel %vm1088, %v2977, 0
      %v3031 = vsel %vm1242, %v2995, 0
      %3033 = vmatprep.subr.mxu0 0.0
      %3034 = vmatpush1.msra.mxu0 %v2979
      %3035 = vmatprep.subr.mxu0 0.0
      %3036 = vmatpush1.msra.mxu0 %v2981
      %3037 = vmatprep.subr.mxu0 0.0
      %3038 = vmatpush1.msra.mxu0 %v2983
      %3039 = vmatprep.subr.mxu0 0.0
      %3040 = vmatpush1.msra.mxu0 %v2985
      %3041 = vmatprep.subr.mxu0 0.0
      %3042 = vmatpush1.msra.mxu0 %v2987
      %3043 = vmatprep.subr.mxu0 0.0
      %3044 = vmatpush1.msra.mxu0 %v2989
      %3045 = vmatprep.subr.mxu0 0.0
      %3046 = vmatpush1.msra.mxu0 %v2991
      %3047 = vmatprep.subr.mxu0 0.0
      %3048 = vmatpush1.msra.mxu0 %v2993
      %3049 = vmatprep.subr.mxu0 0.0
      %3050 = vmatpush1.msra.mxu0 %v3031
      %3051 = vmatprep.subr.mxu0 0.0
      %3052 = vmatpush1.msra.mxu0 0.0
      %3053 = vmatprep.subr.mxu0 0.0
      %3054 = vmatpush1.msra.mxu0 0.0
      %3055 = vmatprep.subr.mxu0 0.0
      %3056 = vmatpush1.msra.mxu0 0.0
      %3057 = vmatprep.subr.mxu0 0.0
      %3058 = vmatpush1.msra.mxu0 0.0
      %3059 = vmatprep.subr.mxu0 0.0
      %3060 = vmatpush1.msra.mxu0 0.0
      %3061 = vmatprep.subr.mxu0 0.0
      %3062 = vmatpush1.msra.mxu0 0.0
      %3063 = vmatprep.subr.mxu0 0.0
      %3064 = vmatpush1.msra.mxu0 0.0
      %3065 = vmatprep.subr.mxu0 0.0
      %3066 = vmatpush1.msra.mxu0 0.0
      %3067 = vmatprep.subr.mxu0 0.0
      %3068 = vmatpush1.msra.mxu0 0.0
      %3069 = vmatprep.subr.mxu0 0.0
      %3070 = vmatpush1.msra.mxu0 0.0
      %3071 = vmatprep.subr.mxu0 0.0
      %3072 = vmatpush1.msra.mxu0 0.0
      %3073 = vmatprep.subr.mxu0 0.0
      %3074 = vmatpush1.msra.mxu0 0.0
      %3075 = vmatprep.subr.mxu0 0.0
      %3076 = vmatpush1.msra.mxu0 0.0
      %3077 = vmatprep.subr.mxu0 0.0
      %3078 = vmatpush1.msra.mxu0 0.0
      %3079 = vmatprep.subr.mxu0 0.0
      %3080 = vmatpush1.msra.mxu0 0.0
      %3081 = vmatprep.subr.mxu0 0.0
      %3082 = vmatpush1.msra.mxu0 0.0
      %3083 = vmatprep.subr.mxu0 0.0
      %3084 = vmatpush1.msra.mxu0 0.0
      %3085 = vmatprep.subr.mxu0 0.0
      %3086 = vmatpush1.msra.mxu0 0.0
      %3087 = vmatprep.subr.mxu0 0.0
      %3088 = vmatpush1.msra.mxu0 0.0
      %3089 = vmatprep.subr.mxu0 0.0
      %3090 = vmatpush1.msra.mxu0 0.0
      %3091 = vmatprep.subr.mxu0 0.0
      %3092 = vmatpush1.msra.mxu0 0.0
      %3093 = vmatprep.subr.mxu0 0.0
      %3094 = vmatpush1.msra.mxu0 0.0
      %3095 = vmatprep.subr.mxu0 0.0
      %3096 = vmatpush1.msra.mxu0 0.0
      %3097 = vmatprep.mubr.f32.mxu0 0.0
      %3098 = vmatmul.mubr.f32.gmra.mrb[0].mxu0 %v3005
      %v3099 = vpop.f32.mrb[0].mxu0
      %v3100 = vadd.f32 0.0, %v3099
      %v3101 = vpop.f32.mrb[0].mxu0
      %3102 = vmatprep.mubr.f32.mxu0 0.0
      %3103 = vmatmul.mubr.f32.gmra.mrb[0].mxu0 %v3008
      %v3104 = vpop.f32.mrb[0].mxu0
      %v3105 = vadd.f32 0.0, %v3104
      %v3106 = vpop.f32.mrb[0].mxu0
      %3107 = vmatprep.mubr.f32.mxu0 0.0
      %3108 = vmatmul.mubr.f32.gmra.mrb[0].mxu0 %v3011
      %v3109 = vpop.f32.mrb[0].mxu0
      %v3110 = vadd.f32 0.0, %v3109
      %v3111 = vpop.f32.mrb[0].mxu0
      %3112 = vmatprep.mubr.f32.mxu0 0.0
      %3113 = vmatmul.mubr.f32.gmra.mrb[0].mxu0 %v3014
      %v3114 = vpop.f32.mrb[0].mxu0
      %v3115 = vadd.f32 0.0, %v3114
      %v3116 = vpop.f32.mrb[0].mxu0
      %3117 = vmatprep.mubr.f32.mxu0 0.0
      %3118 = vmatmul.mubr.f32.gmra.mrb[0].mxu0 %v3017
      %v3119 = vpop.f32.mrb[0].mxu0
      %v3120 = vadd.f32 0.0, %v3119
      %v3121 = vpop.f32.mrb[0].mxu0
      %3122 = vmatprep.mubr.f32.mxu0 0.0
      %3123 = vmatmul.mubr.f32.gmra.mrb[0].mxu0 %v3020
      %v3124 = vpop.f32.mrb[0].mxu0
      %v3125 = vadd.f32 0.0, %v3124
      %v3126 = vpop.f32.mrb[0].mxu0
      %3127 = vmatprep.mubr.f32.mxu0 0.0
      %3128 = vmatmul.mubr.f32.gmra.mrb[0].mxu0 %v3023
      %v3129 = vpop.f32.mrb[0].mxu0
      %v3130 = vadd.f32 0.0, %v3129
      %v3131 = vpop.f32.mrb[0].mxu0
      %3132 = vmatprep.mubr.f32.mxu0 0.0
      %3133 = vmatmul.mubr.f32.gmra.mrb[0].mxu0 %v3026
      %v3134 = vpop.f32.mrb[0].mxu0
      %v3135 = vadd.f32 0.0, %v3134
      %v3136 = vpop.f32.mrb[0].mxu0
      %3137 = vmatprep.mubr.f32.mxu0 0.0
      %3138 = vmatmul.mubr.f32.gmra.mrb[0].mxu0 %v3029
      %v3139 = vpop.f32.mrb[0].mxu0
      %v3140 = vadd.f32 0.0, %v3139
      %v3141 = vpop.f32.mrb[0].mxu0
      %3142 = vdwg.mxu0
      %v3143 = vld [vmem:[%s4 + $0x18] sm:$0xff]
      %v3145 = vsel %vm932, %v3100, 0
      %v3148 = vsel %vm932, %v3105, 0
      %v3151 = vsel %vm932, %v3110, 0
      %v3154 = vsel %vm932, %v3115, 0
      %v3157 = vsel %vm932, %v3120, 0
      %v3160 = vsel %vm932, %v3125, 0
      %v3163 = vsel %vm932, %v3130, 0
      %v3166 = vsel %vm932, %v3135, 0
      %v3169 = vsel %vm932, %v3140, 0
      %3171 = vmatprep.subr.mxu0 0.0
      %3172 = vmatpush1.msra.mxu0 %v3143
      %3173 = vmatprep.subr.mxu0 0.0
      %3174 = vmatpush1.msra.mxu0 0.0
      %3175 = vmatprep.subr.mxu0 0.0
      %3176 = vmatpush1.msra.mxu0 0.0
      %3177 = vmatprep.subr.mxu0 0.0
      %3178 = vmatpush1.msra.mxu0 0.0
      %3179 = vmatprep.subr.mxu0 0.0
      %3180 = vmatpush1.msra.mxu0 0.0
      %3181 = vmatprep.subr.mxu0 0.0
      %3182 = vmatpush1.msra.mxu0 0.0
      %3183 = vmatprep.subr.mxu0 0.0
      %3184 = vmatpush1.msra.mxu0 0.0
      %3185 = vmatprep.subr.mxu0 0.0
      %3186 = vmatpush1.msra.mxu0 0.0
      %3187 = vmatprep.subr.mxu0 0.0
      %3188 = vmatpush1.msra.mxu0 0.0
      %3189 = vmatprep.subr.mxu0 0.0
      %3190 = vmatpush1.msra.mxu0 0.0
      %3191 = vmatprep.subr.mxu0 0.0
      %3192 = vmatpush1.msra.mxu0 0.0
      %3193 = vmatprep.subr.mxu0 0.0
      %3194 = vmatpush1.msra.mxu0 0.0
      %3195 = vmatprep.subr.mxu0 0.0
      %3196 = vmatpush1.msra.mxu0 0.0
      %3197 = vmatprep.subr.mxu0 0.0
      %3198 = vmatpush1.msra.mxu0 0.0
      %3199 = vmatprep.subr.mxu0 0.0
      %3200 = vmatpush1.msra.mxu0 0.0
      %3201 = vmatprep.subr.mxu0 0.0
      %3202 = vmatpush1.msra.mxu0 0.0
      %3203 = vmatprep.subr.mxu0 0.0
      %3204 = vmatpush1.msra.mxu0 0.0
      %3205 = vmatprep.subr.mxu0 0.0
      %3206 = vmatpush1.msra.mxu0 0.0
      %3207 = vmatprep.subr.mxu0 0.0
      %3208 = vmatpush1.msra.mxu0 0.0
      %3209 = vmatprep.subr.mxu0 0.0
      %3210 = vmatpush1.msra.mxu0 0.0
      %3211 = vmatprep.subr.mxu0 0.0
      %3212 = vmatpush1.msra.mxu0 0.0
      %3213 = vmatprep.subr.mxu0 0.0
      %3214 = vmatpush1.msra.mxu0 0.0
      %3215 = vmatprep.subr.mxu0 0.0
      %3216 = vmatpush1.msra.mxu0 0.0
      %3217 = vmatprep.subr.mxu0 0.0
      %3218 = vmatpush1.msra.mxu0 0.0
      %3219 = vmatprep.subr.mxu0 0.0
      %3220 = vmatpush1.msra.mxu0 0.0
      %3221 = vmatprep.subr.mxu0 0.0
      %3222 = vmatpush1.msra.mxu0 0.0
      %3223 = vmatprep.subr.mxu0 0.0
      %3224 = vmatpush1.msra.mxu0 0.0
      %3225 = vmatprep.subr.mxu0 0.0
      %3226 = vmatpush1.msra.mxu0 0.0
      %3227 = vmatprep.subr.mxu0 0.0
      %3228 = vmatpush1.msra.mxu0 0.0
      %3229 = vmatprep.subr.mxu0 0.0
      %3230 = vmatpush1.msra.mxu0 0.0
      %3231 = vmatprep.subr.mxu0 0.0
      %3232 = vmatpush1.msra.mxu0 0.0
      %3233 = vmatprep.subr.mxu0 0.0
      %3234 = vmatpush1.msra.mxu0 0.0
      %3235 = vmatprep.mubr.f32.mxu0 0.0
      %3236 = vmatmul.mubr.f32.gmra.mrb[0].mxu0 %v3145
      %v3237 = vpop.f32.mrb[0].mxu0
      %v3238 = vadd.f32 0.0, %v3237
      %v3239 = vpop.f32.mrb[0].mxu0
      %3240 = vmatprep.mubr.f32.mxu0 0.0
      %3241 = vmatmul.mubr.f32.gmra.mrb[0].mxu0 %v3148
      %v3242 = vpop.f32.mrb[0].mxu0
      %v3243 = vadd.f32 0.0, %v3242
      %v3244 = vpop.f32.mrb[0].mxu0
      %3245 = vmatprep.mubr.f32.mxu0 0.0
      %3246 = vmatmul.mubr.f32.gmra.mrb[0].mxu0 %v3151
      %v3247 = vpop.f32.mrb[0].mxu0
      %v3248 = vadd.f32 0.0, %v3247
      %v3249 = vpop.f32.mrb[0].mxu0
      %3250 = vmatprep.mubr.f32.mxu0 0.0
      %3251 = vmatmul.mubr.f32.gmra.mrb[0].mxu0 %v3154
      %v3252 = vpop.f32.mrb[0].mxu0
      %v3253 = vadd.f32 0.0, %v3252
      %v3254 = vpop.f32.mrb[0].mxu0
      %3255 = vmatprep.mubr.f32.mxu0 0.0
      %3256 = vmatmul.mubr.f32.gmra.mrb[0].mxu0 %v3157
      %v3257 = vpop.f32.mrb[0].mxu0
      %v3258 = vadd.f32 0.0, %v3257
      %v3259 = vpop.f32.mrb[0].mxu0
      %3260 = vmatprep.mubr.f32.mxu0 0.0
      %3261 = vmatmul.mubr.f32.gmra.mrb[0].mxu0 %v3160
      %v3262 = vpop.f32.mrb[0].mxu0
      %v3263 = vadd.f32 0.0, %v3262
      %v3264 = vpop.f32.mrb[0].mxu0
      %3265 = vmatprep.mubr.f32.mxu0 0.0
      %3266 = vmatmul.mubr.f32.gmra.mrb[0].mxu0 %v3163
      %v3267 = vpop.f32.mrb[0].mxu0
      %v3268 = vadd.f32 0.0, %v3267
      %v3269 = vpop.f32.mrb[0].mxu0
      %3270 = vmatprep.mubr.f32.mxu0 0.0
      %3271 = vmatmul.mubr.f32.gmra.mrb[0].mxu0 %v3166
      %v3272 = vpop.f32.mrb[0].mxu0
      %v3273 = vadd.f32 0.0, %v3272
      %v3274 = vpop.f32.mrb[0].mxu0
      %3275 = vmatprep.mubr.f32.mxu0 0.0
      %3276 = vmatmul.mubr.f32.gmra.mrb[0].mxu0 %v3169
      %v3277 = vpop.f32.mrb[0].mxu0
      %v3278 = vadd.f32 0.0, %v3277
      %v3279 = vpop.f32.mrb[0].mxu0
      %3280 = vdwg.mxu0
      %v3281 = vadd.f32 %v2679, %v3238
      %v3282 = vadd.f32 %v2680, %v3243
      %v3283 = vadd.f32 %v2681, %v3248
      %v3284 = vadd.f32 %v2682, %v3253
      %v3285 = vadd.f32 %v2683, %v3258
      %v3286 = vadd.f32 %v2684, %v3263
      %v3287 = vadd.f32 %v2685, %v3268
      %v3288 = vadd.f32 %v2686, %v3273
      %v3289 = vadd.f32 %v2687, %v3278
      %v3290 = vld [vmem:[%s5] sm:$0x1]
      %v3292 = vlaneseq
      %v3293 = vshrl.u32 %v3292, 7
      %v3294 = vsub.s32 0, %v3293
      %v3295 = vrot.slane %v3290, %v3294
      %v3297 = vadd.f32 %v3281, %v3295
      %v3298 = vadd.f32 %v3282, %v3295
      %v3299 = vadd.f32 %v3283, %v3295
      %v3300 = vadd.f32 %v3284, %v3295
      %v3301 = vadd.f32 %v3285, %v3295
      %v3302 = vadd.f32 %v3286, %v3295
      %v3303 = vadd.f32 %v3287, %v3295
      %v3304 = vadd.f32 %v3288, %v3295
      %v3305 = vadd.f32 %v3289, %v3295
      %v3306 = vadd.f32 %v3297, %v603
      %v3307 = vadd.f32 %v3298, %v604
      %v3308 = vadd.f32 %v3299, %v605
      %v3309 = vadd.f32 %v3300, %v606
      %v3310 = vadd.f32 %v3301, %v607
      %v3311 = vadd.f32 %v3302, %v608
      %v3312 = vadd.f32 %v3303, %v609
      %v3313 = vadd.f32 %v3304, %v610
      %v3314 = vadd.f32 %v3305, %v611
      %v3315 = vld [vmem:[%s6] sm:$0xff]
      %v3316 = vld [vmem:[%s6 + $0x8] sm:$0xff]
      %v3317 = vld [vmem:[%s6 + $0x10] sm:$0xff]
      %v3318 = vld [vmem:[%s6 + $0x18] sm:$0xff]
      %vm3328 = vcmask 1046528
      %v3329 = vrot.slane %v3306, 1
      %v3330 = vrot.slane %v3307, 1
      %v3331 = vsel %vm3328, %v3329, %v3330
      %v3332 = vrot.slane %v3308, 1
      %v3333 = vsel %vm3328, %v3330, %v3332
      %v3334 = vrot.slane %v3309, 1
      %v3335 = vsel %vm3328, %v3332, %v3334
      %v3336 = vrot.slane %v3310, 1
      %v3337 = vsel %vm3328, %v3334, %v3336
      %v3338 = vrot.slane %v3311, 1
      %v3339 = vsel %vm3328, %v3336, %v3338
      %v3340 = vrot.slane %v3312, 1
      %v3341 = vsel %vm3328, %v3338, %v3340
      %v3342 = vrot.slane %v3313, 1
      %v3343 = vsel %vm3328, %v3340, %v3342
      %v3344 = vrot.slane %v3314, 1
      %v3345 = vsel %vm3328, %v3342, %v3344
      %v3346 = vsel %vm612, %v3331, 0
      %v3348 = vsel %vm612, %v3333, 0
      %v3350 = vsel %vm612, %v3335, 0
      %v3352 = vsel %vm612, %v3337, 0
      %v3354 = vsel %vm612, %v3339, 0
      %v3356 = vsel %vm612, %v3341, 0
      %v3358 = vsel %vm612, %v3343, 0
      %v3360 = vsel %vm612, %v3345, 0
      %3362 = vmatprep.subr.mxu0 0.0
      %3363 = vmatpush1.msra.mxu0 %v3315
      %3364 = vmatprep.subr.mxu0 0.0
      %3365 = vmatpush1.msra.mxu0 %v3316
      %3366 = vmatprep.subr.mxu0 0.0
      %3367 = vmatpush1.msra.mxu0 %v3317
      %3368 = vmatprep.subr.mxu0 0.0
      %3369 = vmatpush1.msra.mxu0 %v3318
      %3370 = vmatprep.subr.mxu0 0.0
      %3371 = vmatpush1.msra.mxu0 0.0
      %3372 = vmatprep.subr.mxu0 0.0
      %3373 = vmatpush1.msra.mxu0 0.0
      %3374 = vmatprep.subr.mxu0 0.0
      %3375 = vmatpush1.msra.mxu0 0.0
      %3376 = vmatprep.subr.mxu0 0.0
      %3377 = vmatpush1.msra.mxu0 0.0
      %3378 = vmatprep.subr.mxu0 0.0
      %3379 = vmatpush1.msra.mxu0 0.0
      %3380 = vmatprep.subr.mxu0 0.0
      %3381 = vmatpush1.msra.mxu0 0.0
      %3382 = vmatprep.subr.mxu0 0.0
      %3383 = vmatpush1.msra.mxu0 0.0
      %3384 = vmatprep.subr.mxu0 0.0
      %3385 = vmatpush1.msra.mxu0 0.0
      %3386 = vmatprep.subr.mxu0 0.0
      %3387 = vmatpush1.msra.mxu0 0.0
      %3388 = vmatprep.subr.mxu0 0.0
      %3389 = vmatpush1.msra.mxu0 0.0
      %3390 = vmatprep.subr.mxu0 0.0
      %3391 = vmatpush1.msra.mxu0 0.0
      %3392 = vmatprep.subr.mxu0 0.0
      %3393 = vmatpush1.msra.mxu0 0.0
      %3394 = vmatprep.subr.mxu0 0.0
      %3395 = vmatpush1.msra.mxu0 0.0
      %3396 = vmatprep.subr.mxu0 0.0
      %3397 = vmatpush1.msra.mxu0 0.0
      %3398 = vmatprep.subr.mxu0 0.0
      %3399 = vmatpush1.msra.mxu0 0.0
      %3400 = vmatprep.subr.mxu0 0.0
      %3401 = vmatpush1.msra.mxu0 0.0
      %3402 = vmatprep.subr.mxu0 0.0
      %3403 = vmatpush1.msra.mxu0 0.0
      %3404 = vmatprep.subr.mxu0 0.0
      %3405 = vmatpush1.msra.mxu0 0.0
      %3406 = vmatprep.subr.mxu0 0.0
      %3407 = vmatpush1.msra.mxu0 0.0
      %3408 = vmatprep.subr.mxu0 0.0
      %3409 = vmatpush1.msra.mxu0 0.0
      %3410 = vmatprep.subr.mxu0 0.0
      %3411 = vmatpush1.msra.mxu0 0.0
      %3412 = vmatprep.subr.mxu0 0.0
      %3413 = vmatpush1.msra.mxu0 0.0
      %3414 = vmatprep.subr.mxu0 0.0
      %3415 = vmatpush1.msra.mxu0 0.0
      %3416 = vmatprep.subr.mxu0 0.0
      %3417 = vmatpush1.msra.mxu0 0.0
      %3418 = vmatprep.subr.mxu0 0.0
      %3419 = vmatpush1.msra.mxu0 0.0
      %3420 = vmatprep.subr.mxu0 0.0
      %3421 = vmatpush1.msra.mxu0 0.0
      %3422 = vmatprep.subr.mxu0 0.0
      %3423 = vmatpush1.msra.mxu0 0.0
      %3424 = vmatprep.subr.mxu0 0.0
      %3425 = vmatpush1.msra.mxu0 0.0
      %3426 = vmatprep.mubr.f32.mxu0 0.0
      %3427 = vmatmul.mubr.f32.gmra.mrb[0].mxu0 %v3346
      %v3428 = vpop.f32.mrb[0].mxu0
      %v3429 = vadd.f32 0.0, %v3428
      %v3430 = vpop.f32.mrb[0].mxu0
      %3431 = vmatprep.mubr.f32.mxu0 0.0
      %3432 = vmatmul.mubr.f32.gmra.mrb[0].mxu0 %v3348
      %v3433 = vpop.f32.mrb[0].mxu0
      %v3434 = vadd.f32 0.0, %v3433
      %v3435 = vpop.f32.mrb[0].mxu0
      %3436 = vmatprep.mubr.f32.mxu0 0.0
      %3437 = vmatmul.mubr.f32.gmra.mrb[0].mxu0 %v3350
      %v3438 = vpop.f32.mrb[0].mxu0
      %v3439 = vadd.f32 0.0, %v3438
      %v3440 = vpop.f32.mrb[0].mxu0
      %3441 = vmatprep.mubr.f32.mxu0 0.0
      %3442 = vmatmul.mubr.f32.gmra.mrb[0].mxu0 %v3352
      %v3443 = vpop.f32.mrb[0].mxu0
      %v3444 = vadd.f32 0.0, %v3443
      %v3445 = vpop.f32.mrb[0].mxu0
      %3446 = vmatprep.mubr.f32.mxu0 0.0
      %3447 = vmatmul.mubr.f32.gmra.mrb[0].mxu0 %v3354
      %v3448 = vpop.f32.mrb[0].mxu0
      %v3449 = vadd.f32 0.0, %v3448
      %v3450 = vpop.f32.mrb[0].mxu0
      %3451 = vmatprep.mubr.f32.mxu0 0.0
      %3452 = vmatmul.mubr.f32.gmra.mrb[0].mxu0 %v3356
      %v3453 = vpop.f32.mrb[0].mxu0
      %v3454 = vadd.f32 0.0, %v3453
      %v3455 = vpop.f32.mrb[0].mxu0
      %3456 = vmatprep.mubr.f32.mxu0 0.0
      %3457 = vmatmul.mubr.f32.gmra.mrb[0].mxu0 %v3358
      %v3458 = vpop.f32.mrb[0].mxu0
      %v3459 = vadd.f32 0.0, %v3458
      %v3460 = vpop.f32.mrb[0].mxu0
      %3461 = vmatprep.mubr.f32.mxu0 0.0
      %3462 = vmatmul.mubr.f32.gmra.mrb[0].mxu0 %v3360
      %v3463 = vpop.f32.mrb[0].mxu0
      %v3464 = vadd.f32 0.0, %v3463
      %v3465 = vpop.f32.mrb[0].mxu0
      %3466 = vdwg.mxu0
      %v3467 = vld [vmem:[%s7] sm:$0x1]
      %v3469 = vlaneseq
      %v3470 = vshrl.u32 %v3469, 7
      %v3471 = vsub.s32 0, %v3470
      %v3472 = vrot.slane %v3467, %v3471
      %v3474 = vmul.f32 %v3429, %v3472
      %v3475 = vmul.f32 %v3434, %v3472
      %v3476 = vmul.f32 %v3439, %v3472
      %v3477 = vmul.f32 %v3444, %v3472
      %v3478 = vmul.f32 %v3449, %v3472
      %v3479 = vmul.f32 %v3454, %v3472
      %v3480 = vmul.f32 %v3459, %v3472
      %v3481 = vmul.f32 %v3464, %v3472
      %v3482 = vld [vmem:[%s8] sm:$0x1]
      %v3484 = vlaneseq
      %v3485 = vshrl.u32 %v3484, 7
      %v3486 = vsub.s32 0, %v3485
      %v3487 = vrot.slane %v3482, %v3486
      %v3489 = vadd.f32 %v3474, %v3487
      %v3490 = vadd.f32 %v3475, %v3487
      %v3491 = vadd.f32 %v3476, %v3487
      %v3492 = vadd.f32 %v3477, %v3487
      %v3493 = vadd.f32 %v3478, %v3487
      %v3494 = vadd.f32 %v3479, %v3487
      %v3495 = vadd.f32 %v3480, %v3487
      %v3496 = vadd.f32 %v3481, %v3487
      %v3497 = vadd.f32 %v3489, 3.0
      %v3498 = vadd.f32 %v3490, 3.0
      %v3499 = vadd.f32 %v3491, 3.0
      %v3500 = vadd.f32 %v3492, 3.0
      %v3501 = vadd.f32 %v3493, 3.0
      %v3502 = vadd.f32 %v3494, 3.0
      %v3503 = vadd.f32 %v3495, 3.0
      %v3504 = vadd.f32 %v3496, 3.0
      %v3505 = vmax.f32 %v3497, 0.0
      %v3506 = vmax.f32 %v3498, 0.0
      %v3507 = vmax.f32 %v3499, 0.0
      %v3508 = vmax.f32 %v3500, 0.0
      %v3509 = vmax.f32 %v3501, 0.0
      %v3510 = vmax.f32 %v3502, 0.0
      %v3511 = vmax.f32 %v3503, 0.0
      %v3512 = vmax.f32 %v3504, 0.0
      %v3513 = vmin.f32 %v3505, 6.0
      %v3514 = vmin.f32 %v3506, 6.0
      %v3515 = vmin.f32 %v3507, 6.0
      %v3516 = vmin.f32 %v3508, 6.0
      %v3517 = vmin.f32 %v3509, 6.0
      %v3518 = vmin.f32 %v3510, 6.0
      %v3519 = vmin.f32 %v3511, 6.0
      %v3520 = vmin.f32 %v3512, 6.0
      %v3521 = vmul.f32 %v3513, 0.16666667
      %v3522 = vmul.f32 %v3514, 0.16666667
      %v3523 = vmul.f32 %v3515, 0.16666667
      %v3524 = vmul.f32 %v3516, 0.16666667
      %v3525 = vmul.f32 %v3517, 0.16666667
      %v3526 = vmul.f32 %v3518, 0.16666667
      %v3527 = vmul.f32 %v3519, 0.16666667
      %v3528 = vmul.f32 %v3520, 0.16666667
      %v3529 = vmul.f32 %v3489, %v3521
      %v3530 = vmul.f32 %v3490, %v3522
      %v3531 = vmul.f32 %v3491, %v3523
      %v3532 = vmul.f32 %v3492, %v3524
      %v3533 = vmul.f32 %v3493, %v3525
      %v3534 = vmul.f32 %v3494, %v3526
      %v3535 = vmul.f32 %v3495, %v3527
      %v3536 = vmul.f32 %v3496, %v3528
      %v3537 = vld [vmem:[%s9] sm:$0xff]
      %v3538 = vld [vmem:[%s9 + $0x8] sm:$0x1]
      %v3547 = vrot.slane 0.0, 7
      %v3548 = vrot.slane %v3529, 7
      %v3549 = vrot.slane %v3530, 7
      %v3550 = vrot.slane %v3531, 7
      %v3551 = vrot.slane %v3532, 7
      %v3552 = vrot.slane %v3533, 7
      %v3553 = vrot.slane %v3534, 7
      %v3554 = vrot.slane %v3535, 7
      %v3563 = vsel %vm1242, 0.0, %v3547
      %v3564 = vsel %vm1242, 0.0, %v3548
      %v3565 = vsel %vm1242, 0.0, %v3549
      %v3566 = vsel %vm1242, 0.0, %v3550
      %v3567 = vsel %vm1242, 0.0, %v3551
      %v3568 = vsel %vm1242, 0.0, %v3552
      %v3569 = vsel %vm1242, 0.0, %v3553
      %v3570 = vsel %vm1242, 0.0, %v3554
      %v3571 = vlaneseq
      %v3572 = vshrl.u32 %v3571, 7
      %v3573 = vsub.s32 0, %v3572
      %v3574 = vrot.slane %v3537, %v3573
      %v3575 = vmul.f32 %v3563, %v3574
      %v3576 = vmul.f32 %v3564, %v3574
      %v3577 = vmul.f32 %v3565, %v3574
      %v3578 = vmul.f32 %v3566, %v3574
      %v3579 = vmul.f32 %v3567, %v3574
      %v3580 = vmul.f32 %v3568, %v3574
      %v3581 = vmul.f32 %v3569, %v3574
      %v3582 = vmul.f32 %v3570, %v3574
      %v3583 = vadd.f32 %v3575, 0.0
      %v3584 = vadd.f32 %v3576, 0.0
      %v3585 = vadd.f32 %v3577, 0.0
      %v3586 = vadd.f32 %v3578, 0.0
      %v3587 = vadd.f32 %v3579, 0.0
      %v3588 = vadd.f32 %v3580, 0.0
      %v3589 = vadd.f32 %v3581, 0.0
      %v3590 = vadd.f32 %v3582, 0.0
      %v3591 = vlaneseq
      %v3592 = vshrl.u32 %v3591, 7
      %v3593 = vsub.s32 1, %v3592
      %v3594 = vrot.slane %v3537, %v3593
      %v3595 = vmul.f32 %v3594, 0.0
      %v3596 = vmul.f32 %v3529, %v3594
      %v3597 = vmul.f32 %v3530, %v3594
      %v3598 = vmul.f32 %v3531, %v3594
      %v3599 = vmul.f32 %v3532, %v3594
      %v3600 = vmul.f32 %v3533, %v3594
      %v3601 = vmul.f32 %v3534, %v3594
      %v3602 = vmul.f32 %v3535, %v3594
      %v3603 = vadd.f32 %v3583, %v3595
      %v3604 = vadd.f32 %v3584, %v3596
      %v3605 = vadd.f32 %v3585, %v3597
      %v3606 = vadd.f32 %v3586, %v3598
      %v3607 = vadd.f32 %v3587, %v3599
      %v3608 = vadd.f32 %v3588, %v3600
      %v3609 = vadd.f32 %v3589, %v3601
      %v3610 = vadd.f32 %v3590, %v3602
      %v3611 = vrot.slane 0.0, 1
      %v3612 = vrot.slane %v3529, 1
      %v3613 = vrot.slane %v3530, 1
      %v3614 = vrot.slane %v3531, 1
      %v3615 = vrot.slane %v3532, 1
      %v3616 = vrot.slane %v3533, 1
      %v3617 = vrot.slane %v3534, 1
      %v3618 = vrot.slane %v3535, 1
      %v3627 = vsel %vm3328, %v3611, 0.0
      %v3628 = vsel %vm3328, %v3612, 0.0
      %v3629 = vsel %vm3328, %v3613, 0.0
      %v3630 = vsel %vm3328, %v3614, 0.0
      %v3631 = vsel %vm3328, %v3615, 0.0
      %v3632 = vsel %vm3328, %v3616, 0.0
      %v3633 = vsel %vm3328, %v3617, 0.0
      %v3634 = vsel %vm3328, %v3618, 0.0
      %v3635 = vlaneseq
      %v3636 = vshrl.u32 %v3635, 7
      %v3637 = vsub.s32 2, %v3636
      %v3638 = vrot.slane %v3537, %v3637
      %v3639 = vmul.f32 %v3627, %v3638
      %v3640 = vmul.f32 %v3628, %v3638
      %v3641 = vmul.f32 %v3629, %v3638
      %v3642 = vmul.f32 %v3630, %v3638
      %v3643 = vmul.f32 %v3631, %v3638
      %v3644 = vmul.f32 %v3632, %v3638
      %v3645 = vmul.f32 %v3633, %v3638
      %v3646 = vmul.f32 %v3634, %v3638
      %v3647 = vadd.f32 %v3603, %v3639
      %v3648 = vadd.f32 %v3604, %v3640
      %v3649 = vadd.f32 %v3605, %v3641
      %v3650 = vadd.f32 %v3606, %v3642
      %v3651 = vadd.f32 %v3607, %v3643
      %v3652 = vadd.f32 %v3608, %v3644
      %v3653 = vadd.f32 %v3609, %v3645
      %v3654 = vadd.f32 %v3610, %v3646
      %v3656 = vrot.slane %v3536, 7
      %v3658 = vsel %vm1242, 0.0, %v3656
      %v3659 = vlaneseq
      %v3660 = vshrl.u32 %v3659, 7
      %v3661 = vsub.s32 3, %v3660
      %v3662 = vrot.slane %v3537, %v3661
      %v3663 = vmul.f32 %v3564, %v3662
      %v3664 = vmul.f32 %v3565, %v3662
      %v3665 = vmul.f32 %v3566, %v3662
      %v3666 = vmul.f32 %v3567, %v3662
      %v3667 = vmul.f32 %v3568, %v3662
      %v3668 = vmul.f32 %v3569, %v3662
      %v3669 = vmul.f32 %v3570, %v3662
      %v3670 = vmul.f32 %v3658, %v3662
      %v3671 = vadd.f32 %v3647, %v3663
      %v3672 = vadd.f32 %v3648, %v3664
      %v3673 = vadd.f32 %v3649, %v3665
      %v3674 = vadd.f32 %v3650, %v3666
      %v3675 = vadd.f32 %v3651, %v3667
      %v3676 = vadd.f32 %v3652, %v3668
      %v3677 = vadd.f32 %v3653, %v3669
      %v3678 = vadd.f32 %v3654, %v3670
      %v3679 = vlaneseq
      %v3680 = vshrl.u32 %v3679, 7
      %v3681 = vsub.s32 4, %v3680
      %v3682 = vrot.slane %v3537, %v3681
      %v3683 = vmul.f32 %v3529, %v3682
      %v3684 = vmul.f32 %v3530, %v3682
      %v3685 = vmul.f32 %v3531, %v3682
      %v3686 = vmul.f32 %v3532, %v3682
      %v3687 = vmul.f32 %v3533, %v3682
      %v3688 = vmul.f32 %v3534, %v3682
      %v3689 = vmul.f32 %v3535, %v3682
      %v3690 = vmul.f32 %v3536, %v3682
      %v3691 = vadd.f32 %v3671, %v3683
      %v3692 = vadd.f32 %v3672, %v3684
      %v3693 = vadd.f32 %v3673, %v3685
      %v3694 = vadd.f32 %v3674, %v3686
      %v3695 = vadd.f32 %v3675, %v3687
      %v3696 = vadd.f32 %v3676, %v3688
      %v3697 = vadd.f32 %v3677, %v3689
      %v3698 = vadd.f32 %v3678, %v3690
      %v3699 = vrot.slane %v3536, 1
      %v3701 = vsel %vm3328, %v3699, 0.0
      %v3702 = vlaneseq
      %v3703 = vshrl.u32 %v3702, 7
      %v3704 = vsub.s32 5, %v3703
      %v3705 = vrot.slane %v3537, %v3704
      %v3706 = vmul.f32 %v3628, %v3705
      %v3707 = vmul.f32 %v3629, %v3705
      %v3708 = vmul.f32 %v3630, %v3705
      %v3709 = vmul.f32 %v3631, %v3705
      %v3710 = vmul.f32 %v3632, %v3705
      %v3711 = vmul.f32 %v3633, %v3705
      %v3712 = vmul.f32 %v3634, %v3705
      %v3713 = vmul.f32 %v3701, %v3705
      %v3714 = vadd.f32 %v3691, %v3706
      %v3715 = vadd.f32 %v3692, %v3707
      %v3716 = vadd.f32 %v3693, %v3708
      %v3717 = vadd.f32 %v3694, %v3709
      %v3718 = vadd.f32 %v3695, %v3710
      %v3719 = vadd.f32 %v3696, %v3711
      %v3720 = vadd.f32 %v3697, %v3712
      %v3721 = vadd.f32 %v3698, %v3713
      %v3722 = vlaneseq
      %v3723 = vshrl.u32 %v3722, 7
      %v3724 = vsub.s32 6, %v3723
      %v3725 = vrot.slane %v3537, %v3724
      %v3726 = vmul.f32 %v3565, %v3725
      %v3727 = vmul.f32 %v3566, %v3725
      %v3728 = vmul.f32 %v3567, %v3725
      %v3729 = vmul.f32 %v3568, %v3725
      %v3730 = vmul.f32 %v3569, %v3725
      %v3731 = vmul.f32 %v3570, %v3725
      %v3732 = vmul.f32 %v3658, %v3725
      %v3733 = vmul.f32 %v3563, %v3725
      %v3734 = vadd.f32 %v3714, %v3726
      %v3735 = vadd.f32 %v3715, %v3727
      %v3736 = vadd.f32 %v3716, %v3728
      %v3737 = vadd.f32 %v3717, %v3729
      %v3738 = vadd.f32 %v3718, %v3730
      %v3739 = vadd.f32 %v3719, %v3731
      %v3740 = vadd.f32 %v3720, %v3732
      %v3741 = vadd.f32 %v3721, %v3733
      %v3742 = vlaneseq
      %v3743 = vshrl.u32 %v3742, 7
      %v3744 = vsub.s32 7, %v3743
      %v3745 = vrot.slane %v3537, %v3744
      %v3746 = vmul.f32 %v3530, %v3745
      %v3747 = vmul.f32 %v3531, %v3745
      %v3748 = vmul.f32 %v3532, %v3745
      %v3749 = vmul.f32 %v3533, %v3745
      %v3750 = vmul.f32 %v3534, %v3745
      %v3751 = vmul.f32 %v3535, %v3745
      %v3752 = vmul.f32 %v3536, %v3745
      %v3753 = vmul.f32 %v3745, 0.0
      %v3754 = vadd.f32 %v3734, %v3746
      %v3755 = vadd.f32 %v3735, %v3747
      %v3756 = vadd.f32 %v3736, %v3748
      %v3757 = vadd.f32 %v3737, %v3749
      %v3758 = vadd.f32 %v3738, %v3750
      %v3759 = vadd.f32 %v3739, %v3751
      %v3760 = vadd.f32 %v3740, %v3752
      %v3761 = vadd.f32 %v3741, %v3753
      %v3762 = vlaneseq
      %v3763 = vshrl.u32 %v3762, 7
      %v3764 = vsub.s32 0, %v3763
      %v3765 = vrot.slane %v3538, %v3764
      %v3766 = vmul.f32 %v3629, %v3765
      %v3767 = vmul.f32 %v3630, %v3765
      %v3768 = vmul.f32 %v3631, %v3765
      %v3769 = vmul.f32 %v3632, %v3765
      %v3770 = vmul.f32 %v3633, %v3765
      %v3771 = vmul.f32 %v3634, %v3765
      %v3772 = vmul.f32 %v3701, %v3765
      %v3773 = vmul.f32 %v3627, %v3765
      %v3774 = vadd.f32 %v3754, %v3766
      %v3775 = vadd.f32 %v3755, %v3767
      %v3776 = vadd.f32 %v3756, %v3768
      %v3777 = vadd.f32 %v3757, %v3769
      %v3778 = vadd.f32 %v3758, %v3770
      %v3779 = vadd.f32 %v3759, %v3771
      %v3780 = vadd.f32 %v3760, %v3772
      %v3781 = vadd.f32 %v3761, %v3773
      %v3782 = vld [vmem:[%s10] sm:$0x1]
      %v3784 = vlaneseq
      %v3785 = vshrl.u32 %v3784, 7
      %v3786 = vsub.s32 0, %v3785
      %v3787 = vrot.slane %v3782, %v3786
      %v3789 = vmul.f32 %v3774, %v3787
      %v3790 = vmul.f32 %v3775, %v3787
      %v3791 = vmul.f32 %v3776, %v3787
      %v3792 = vmul.f32 %v3777, %v3787
      %v3793 = vmul.f32 %v3778, %v3787
      %v3794 = vmul.f32 %v3779, %v3787
      %v3795 = vmul.f32 %v3780, %v3787
      %v3796 = vmul.f32 %v3781, %v3787
      %v3797 = vld [vmem:[%s11] sm:$0x1]
      %v3799 = vlaneseq
      %v3800 = vshrl.u32 %v3799, 7
      %v3801 = vsub.s32 0, %v3800
      %v3802 = vrot.slane %v3797, %v3801
      %v3804 = vadd.f32 %v3789, %v3802
      %v3805 = vadd.f32 %v3790, %v3802
      %v3806 = vadd.f32 %v3791, %v3802
      %v3807 = vadd.f32 %v3792, %v3802
      %v3808 = vadd.f32 %v3793, %v3802
      %v3809 = vadd.f32 %v3794, %v3802
      %v3810 = vadd.f32 %v3795, %v3802
      %v3811 = vadd.f32 %v3796, %v3802
      %v3812 = vadd.f32 %v3804, 3.0
      %v3813 = vadd.f32 %v3805, 3.0
      %v3814 = vadd.f32 %v3806, 3.0
      %v3815 = vadd.f32 %v3807, 3.0
      %v3816 = vadd.f32 %v3808, 3.0
      %v3817 = vadd.f32 %v3809, 3.0
      %v3818 = vadd.f32 %v3810, 3.0
      %v3819 = vadd.f32 %v3811, 3.0
      %v3820 = vmax.f32 %v3812, 0.0
      %v3821 = vmax.f32 %v3813, 0.0
      %v3822 = vmax.f32 %v3814, 0.0
      %v3823 = vmax.f32 %v3815, 0.0
      %v3824 = vmax.f32 %v3816, 0.0
      %v3825 = vmax.f32 %v3817, 0.0
      %v3826 = vmax.f32 %v3818, 0.0
      %v3827 = vmax.f32 %v3819, 0.0
      %v3828 = vmin.f32 %v3820, 6.0
      %v3829 = vmin.f32 %v3821, 6.0
      %v3830 = vmin.f32 %v3822, 6.0
      %v3831 = vmin.f32 %v3823, 6.0
      %v3832 = vmin.f32 %v3824, 6.0
      %v3833 = vmin.f32 %v3825, 6.0
      %v3834 = vmin.f32 %v3826, 6.0
      %v3835 = vmin.f32 %v3827, 6.0
      %v3836 = vmul.f32 %v3828, 0.16666667
      %v3837 = vmul.f32 %v3829, 0.16666667
      %v3838 = vmul.f32 %v3830, 0.16666667
      %v3839 = vmul.f32 %v3831, 0.16666667
      %v3840 = vmul.f32 %v3832, 0.16666667
      %v3841 = vmul.f32 %v3833, 0.16666667
      %v3842 = vmul.f32 %v3834, 0.16666667
      %v3843 = vmul.f32 %v3835, 0.16666667
      %v3844 = vmul.f32 %v3804, %v3836
      %v3845 = vmul.f32 %v3805, %v3837
      %v3846 = vmul.f32 %v3806, %v3838
      %v3847 = vmul.f32 %v3807, %v3839
      %v3848 = vmul.f32 %v3808, %v3840
      %v3849 = vmul.f32 %v3809, %v3841
      %v3850 = vmul.f32 %v3810, %v3842
      %v3851 = vmul.f32 %v3811, %v3843
      %v3852 = vadd.f32 %v3844, %v3845
      %v3853 = vadd.f32 %v3852, %v3846
      %v3854 = vadd.f32 %v3853, %v3847
      %v3855 = vadd.f32 %v3854, %v3848
      %v3856 = vadd.f32 %v3855, %v3849
      %v3857 = vadd.f32 %v3856, %v3850
      %v3858 = vadd.f32 %v3857, %v3851
      %v3859 = vrot.slane %v3858, 4
      %v3860 = vadd.f32 %v3858, %v3859
      %v3861 = vrot.slane %v3860, 2
      %v3862 = vadd.f32 %v3860, %v3861
      %v3863 = vrot.slane %v3862, 1
      %v3864 = vadd.f32 %v3862, %v3863
      %v3865 = vrcp.pop 64.0
      %v3866 = vmul.f32 %v3864, %v3865
      %v3867 = vld [vmem:[%s12] sm:$0xff]
      %v3868 = vld [vmem:[%s12 + $0x8] sm:$0xff]
      %v3869 = vld [vmem:[%s12 + $0x10] sm:$0xff]
      %v3870 = vld [vmem:[%s12 + $0x18] sm:$0xff]
      %v3871 = vld [vmem:[%s12 + $0x20] sm:$0xff]
      %v3872 = vld [vmem:[%s12 + $0x28] sm:$0xff]
      %v3873 = vld [vmem:[%s12 + $0x30] sm:$0xff]
      %v3874 = vld [vmem:[%s12 + $0x38] sm:$0xff]
      %v3875 = vld [vmem:[%s12 + $0x40] sm:$0xff]
      %v3876 = vld [vmem:[%s12 + $0x48] sm:$0xff]
      %v3877 = vld [vmem:[%s12 + $0x50] sm:$0xff]
      %v3878 = vld [vmem:[%s12 + $0x58] sm:$0xff]
      %v3879 = vld [vmem:[%s12 + $0x60] sm:$0xff]
      %v3880 = vld [vmem:[%s12 + $0x68] sm:$0xff]
      %v3881 = vld [vmem:[%s12 + $0x70] sm:$0xff]
      %v3882 = vld [vmem:[%s12 + $0x78] sm:$0xff]
      %v3883 = vld [vmem:[%s13] sm:$0x1]
      %3884 = vmatprep.subr.mxu0 0.0
      %3885 = vmatpush1.msra.mxu0 %v3867
      %3886 = vmatprep.subr.mxu0 0.0
      %3887 = vmatpush1.msra.mxu0 %v3868
      %3888 = vmatprep.subr.mxu0 0.0
      %3889 = vmatpush1.msra.mxu0 %v3869
      %3890 = vmatprep.subr.mxu0 0.0
      %3891 = vmatpush1.msra.mxu0 %v3870
      %3892 = vmatprep.subr.mxu0 0.0
      %3893 = vmatpush1.msra.mxu0 %v3871
      %3894 = vmatprep.subr.mxu0 0.0
      %3895 = vmatpush1.msra.mxu0 %v3872
      %3896 = vmatprep.subr.mxu0 0.0
      %3897 = vmatpush1.msra.mxu0 %v3873
      %3898 = vmatprep.subr.mxu0 0.0
      %3899 = vmatpush1.msra.mxu0 %v3874
      %3900 = vmatprep.subr.mxu0 0.0
      %3901 = vmatpush1.msra.mxu0 %v3875
      %3902 = vmatprep.subr.mxu0 0.0
      %3903 = vmatpush1.msra.mxu0 %v3876
      %3904 = vmatprep.subr.mxu0 0.0
      %3905 = vmatpush1.msra.mxu0 %v3877
      %3906 = vmatprep.subr.mxu0 0.0
      %3907 = vmatpush1.msra.mxu0 %v3878
      %3908 = vmatprep.subr.mxu0 0.0
      %3909 = vmatpush1.msra.mxu0 %v3879
      %3910 = vmatprep.subr.mxu0 0.0
      %3911 = vmatpush1.msra.mxu0 %v3880
      %3912 = vmatprep.subr.mxu0 0.0
      %3913 = vmatpush1.msra.mxu0 %v3881
      %3914 = vmatprep.subr.mxu0 0.0
      %3915 = vmatpush1.msra.mxu0 %v3882
      %3916 = vmatprep.subr.mxu0 0.0
      %3917 = vmatpush1.msra.mxu0 0.0
      %3918 = vmatprep.subr.mxu0 0.0
      %3919 = vmatpush1.msra.mxu0 0.0
      %3920 = vmatprep.subr.mxu0 0.0
      %3921 = vmatpush1.msra.mxu0 0.0
      %3922 = vmatprep.subr.mxu0 0.0
      %3923 = vmatpush1.msra.mxu0 0.0
      %3924 = vmatprep.subr.mxu0 0.0
      %3925 = vmatpush1.msra.mxu0 0.0
      %3926 = vmatprep.subr.mxu0 0.0
      %3927 = vmatpush1.msra.mxu0 0.0
      %3928 = vmatprep.subr.mxu0 0.0
      %3929 = vmatpush1.msra.mxu0 0.0
      %3930 = vmatprep.subr.mxu0 0.0
      %3931 = vmatpush1.msra.mxu0 0.0
      %3932 = vmatprep.subr.mxu0 0.0
      %3933 = vmatpush1.msra.mxu0 0.0
      %3934 = vmatprep.subr.mxu0 0.0
      %3935 = vmatpush1.msra.mxu0 0.0
      %3936 = vmatprep.subr.mxu0 0.0
      %3937 = vmatpush1.msra.mxu0 0.0
      %3938 = vmatprep.subr.mxu0 0.0
      %3939 = vmatpush1.msra.mxu0 0.0
      %3940 = vmatprep.subr.mxu0 0.0
      %3941 = vmatpush1.msra.mxu0 0.0
      %3942 = vmatprep.subr.mxu0 0.0
      %3943 = vmatpush1.msra.mxu0 0.0
      %3944 = vmatprep.subr.mxu0 0.0
      %3945 = vmatpush1.msra.mxu0 0.0
      %3946 = vmatprep.subr.mxu0 0.0
      %3947 = vmatpush1.msra.mxu0 0.0
      %3948 = vmatprep.mubr.f32.mxu0 0.0
      %3949 = vmatmul.mubr.f32.gmra.mrb[0].mxu0 %v3866
      %v3950 = vpop.f32.mrb[0].mxu0
      %v3951 = vadd.f32 %v3883, %v3950
      %v3952 = vpop.f32.mrb[0].mxu0
      %3953 = vdwg.mxu0
      %v3954 = vmax.f32 %v3951, 0.0
      %v3955 = vld [vmem:[%s14] sm:$0xff]
      %v3956 = vld [vmem:[%s14 + $0x8] sm:$0xff]
      %v3957 = vld [vmem:[%s14 + $0x10] sm:$0xff]
      %v3958 = vld [vmem:[%s14 + $0x18] sm:$0xff]
      %v3959 = vld [vmem:[%s15] sm:$0x1]
      %v3961 = vsel %vm612, %v3954, 0
      %3963 = vmatprep.subr.mxu0 0.0
      %3964 = vmatpush1.msra.mxu0 %v3955
      %3965 = vmatprep.subr.mxu0 0.0
      %3966 = vmatpush1.msra.mxu0 %v3956
      %3967 = vmatprep.subr.mxu0 0.0
      %3968 = vmatpush1.msra.mxu0 %v3957
      %3969 = vmatprep.subr.mxu0 0.0
      %3970 = vmatpush1.msra.mxu0 %v3958
      %3971 = vmatprep.subr.mxu0 0.0
      %3972 = vmatpush1.msra.mxu0 0.0
      %3973 = vmatprep.subr.mxu0 0.0
      %3974 = vmatpush1.msra.mxu0 0.0
      %3975 = vmatprep.subr.mxu0 0.0
      %3976 = vmatpush1.msra.mxu0 0.0
      %3977 = vmatprep.subr.mxu0 0.0
      %3978 = vmatpush1.msra.mxu0 0.0
      %3979 = vmatprep.subr.mxu0 0.0
      %3980 = vmatpush1.msra.mxu0 0.0
      %3981 = vmatprep.subr.mxu0 0.0
      %3982 = vmatpush1.msra.mxu0 0.0
      %3983 = vmatprep.subr.mxu0 0.0
      %3984 = vmatpush1.msra.mxu0 0.0
      %3985 = vmatprep.subr.mxu0 0.0
      %3986 = vmatpush1.msra.mxu0 0.0
      %3987 = vmatprep.subr.mxu0 0.0
      %3988 = vmatpush1.msra.mxu0 0.0
      %3989 = vmatprep.subr.mxu0 0.0
      %3990 = vmatpush1.msra.mxu0 0.0
      %3991 = vmatprep.subr.mxu0 0.0
      %3992 = vmatpush1.msra.mxu0 0.0
      %3993 = vmatprep.subr.mxu0 0.0
      %3994 = vmatpush1.msra.mxu0 0.0
      %3995 = vmatprep.subr.mxu0 0.0
      %3996 = vmatpush1.msra.mxu0 0.0
      %3997 = vmatprep.subr.mxu0 0.0
      %3998 = vmatpush1.msra.mxu0 0.0
      %3999 = vmatprep.subr.mxu0 0.0
      %4000 = vmatpush1.msra.mxu0 0.0
      %4001 = vmatprep.subr.mxu0 0.0
      %4002 = vmatpush1.msra.mxu0 0.0
      %4003 = vmatprep.subr.mxu0 0.0
      %4004 = vmatpush1.msra.mxu0 0.0
      %4005 = vmatprep.subr.mxu0 0.0
      %4006 = vmatpush1.msra.mxu0 0.0
      %4007 = vmatprep.subr.mxu0 0.0
      %4008 = vmatpush1.msra.mxu0 0.0
      %4009 = vmatprep.subr.mxu0 0.0
      %4010 = vmatpush1.msra.mxu0 0.0
      %4011 = vmatprep.subr.mxu0 0.0
      %4012 = vmatpush1.msra.mxu0 0.0
      %4013 = vmatprep.subr.mxu0 0.0
      %4014 = vmatpush1.msra.mxu0 0.0
      %4015 = vmatprep.subr.mxu0 0.0
      %4016 = vmatpush1.msra.mxu0 0.0
      %4017 = vmatprep.subr.mxu0 0.0
      %4018 = vmatpush1.msra.mxu0 0.0
      %4019 = vmatprep.subr.mxu0 0.0
      %4020 = vmatpush1.msra.mxu0 0.0
      %4021 = vmatprep.subr.mxu0 0.0
      %4022 = vmatpush1.msra.mxu0 0.0
      %4023 = vmatprep.subr.mxu0 0.0
      %4024 = vmatpush1.msra.mxu0 0.0
      %4025 = vmatprep.subr.mxu0 0.0
      %4026 = vmatpush1.msra.mxu0 0.0
      %4027 = vmatprep.mubr.f32.mxu0 0.0
      %4028 = vmatmul.mubr.f32.gmra.mrb[0].mxu0 %v3961
      %v4029 = vpop.f32.mrb[0].mxu0
      %v4030 = vadd.f32 %v3959, %v4029
      %v4031 = vpop.f32.mrb[0].mxu0
      %4032 = vdwg.mxu0
      %v4033 = vadd.f32 %v4030, 3.0
      %v4034 = vmax.f32 %v4033, 0.0
      %v4035 = vmin.f32 %v4034, 6.0
      %v4036 = vmul.f32 %v4035, 0.16666667
      %v4037 = vlaneseq
      %v4038 = vshrl.u32 %v4037, 7
      %v4039 = vsub.s32 0, %v4038
      %v4040 = vrot.slane %v4036, %v4039
      %v4041 = vmul.f32 %v3844, %v4040
      %v4042 = vmul.f32 %v3845, %v4040
      %v4043 = vmul.f32 %v3846, %v4040
      %v4044 = vmul.f32 %v3847, %v4040
      %v4045 = vmul.f32 %v3848, %v4040
      %v4046 = vmul.f32 %v3849, %v4040
      %v4047 = vmul.f32 %v3850, %v4040
      %v4048 = vmul.f32 %v3851, %v4040
      %v4049 = vld [vmem:[%s16] sm:$0xff]
      %v4050 = vld [vmem:[%s16 + $0x8] sm:$0xff]
      %v4051 = vld [vmem:[%s16 + $0x10] sm:$0xff]
      %v4052 = vld [vmem:[%s16 + $0x18] sm:$0xff]
      %v4053 = vld [vmem:[%s16 + $0x20] sm:$0xff]
      %v4054 = vld [vmem:[%s16 + $0x28] sm:$0xff]
      %v4055 = vld [vmem:[%s16 + $0x30] sm:$0xff]
      %v4056 = vld [vmem:[%s16 + $0x38] sm:$0xff]
      %v4057 = vld [vmem:[%s16 + $0x40] sm:$0xff]
      %v4058 = vld [vmem:[%s16 + $0x48] sm:$0xff]
      %v4059 = vld [vmem:[%s16 + $0x50] sm:$0xff]
      %v4060 = vld [vmem:[%s16 + $0x58] sm:$0xff]
      %v4061 = vld [vmem:[%s16 + $0x60] sm:$0xff]
      %v4062 = vld [vmem:[%s16 + $0x68] sm:$0xff]
      %v4063 = vld [vmem:[%s16 + $0x70] sm:$0xff]
      %v4064 = vld [vmem:[%s16 + $0x78] sm:$0xff]
      %4065 = vmatprep.subr.mxu0 0.0
      %4066 = vmatpush1.msra.mxu0 %v4049
      %4067 = vmatprep.subr.mxu0 0.0
      %4068 = vmatpush1.msra.mxu0 %v4050
      %4069 = vmatprep.subr.mxu0 0.0
      %4070 = vmatpush1.msra.mxu0 %v4051
      %4071 = vmatprep.subr.mxu0 0.0
      %4072 = vmatpush1.msra.mxu0 %v4052
      %4073 = vmatprep.subr.mxu0 0.0
      %4074 = vmatpush1.msra.mxu0 %v4053
      %4075 = vmatprep.subr.mxu0 0.0
      %4076 = vmatpush1.msra.mxu0 %v4054
      %4077 = vmatprep.subr.mxu0 0.0
      %4078 = vmatpush1.msra.mxu0 %v4055
      %4079 = vmatprep.subr.mxu0 0.0
      %4080 = vmatpush1.msra.mxu0 %v4056
      %4081 = vmatprep.subr.mxu0 0.0
      %4082 = vmatpush1.msra.mxu0 %v4057
      %4083 = vmatprep.subr.mxu0 0.0
      %4084 = vmatpush1.msra.mxu0 %v4058
      %4085 = vmatprep.subr.mxu0 0.0
      %4086 = vmatpush1.msra.mxu0 %v4059
      %4087 = vmatprep.subr.mxu0 0.0
      %4088 = vmatpush1.msra.mxu0 %v4060
      %4089 = vmatprep.subr.mxu0 0.0
      %4090 = vmatpush1.msra.mxu0 %v4061
      %4091 = vmatprep.subr.mxu0 0.0
      %4092 = vmatpush1.msra.mxu0 %v4062
      %4093 = vmatprep.subr.mxu0 0.0
      %4094 = vmatpush1.msra.mxu0 %v4063
      %4095 = vmatprep.subr.mxu0 0.0
      %4096 = vmatpush1.msra.mxu0 %v4064
      %4097 = vmatprep.subr.mxu0 0.0
      %4098 = vmatpush1.msra.mxu0 0.0
      %4099 = vmatprep.subr.mxu0 0.0
      %4100 = vmatpush1.msra.mxu0 0.0
      %4101 = vmatprep.subr.mxu0 0.0
      %4102 = vmatpush1.msra.mxu0 0.0
      %4103 = vmatprep.subr.mxu0 0.0
      %4104 = vmatpush1.msra.mxu0 0.0
      %4105 = vmatprep.subr.mxu0 0.0
      %4106 = vmatpush1.msra.mxu0 0.0
      %4107 = vmatprep.subr.mxu0 0.0
      %4108 = vmatpush1.msra.mxu0 0.0
      %4109 = vmatprep.subr.mxu0 0.0
      %4110 = vmatpush1.msra.mxu0 0.0
      %4111 = vmatprep.subr.mxu0 0.0
      %4112 = vmatpush1.msra.mxu0 0.0
      %4113 = vmatprep.subr.mxu0 0.0
      %4114 = vmatpush1.msra.mxu0 0.0
      %4115 = vmatprep.subr.mxu0 0.0
      %4116 = vmatpush1.msra.mxu0 0.0
      %4117 = vmatprep.subr.mxu0 0.0
      %4118 = vmatpush1.msra.mxu0 0.0
      %4119 = vmatprep.subr.mxu0 0.0
      %4120 = vmatpush1.msra.mxu0 0.0
      %4121 = vmatprep.subr.mxu0 0.0
      %4122 = vmatpush1.msra.mxu0 0.0
      %4123 = vmatprep.subr.mxu0 0.0
      %4124 = vmatpush1.msra.mxu0 0.0
      %4125 = vmatprep.subr.mxu0 0.0
      %4126 = vmatpush1.msra.mxu0 0.0
      %4127 = vmatprep.subr.mxu0 0.0
      %4128 = vmatpush1.msra.mxu0 0.0
      %4129 = vmatprep.mubr.f32.mxu0 0.0
      %4130 = vmatmul.mubr.f32.gmra.mrb[0].mxu0 %v4041
      %v4131 = vpop.f32.mrb[0].mxu0
      %v4132 = vadd.f32 0.0, %v4131
      %v4133 = vpop.f32.mrb[0].mxu0
      %4134 = vmatprep.mubr.f32.mxu0 0.0
      %4135 = vmatmul.mubr.f32.gmra.mrb[0].mxu0 %v4042
      %v4136 = vpop.f32.mrb[0].mxu0
      %v4137 = vadd.f32 0.0, %v4136
      %v4138 = vpop.f32.mrb[0].mxu0
      %4139 = vmatprep.mubr.f32.mxu0 0.0
      %4140 = vmatmul.mubr.f32.gmra.mrb[0].mxu0 %v4043
      %v4141 = vpop.f32.mrb[0].mxu0
      %v4142 = vadd.f32 0.0, %v4141
      %v4143 = vpop.f32.mrb[0].mxu0
      %4144 = vmatprep.mubr.f32.mxu0 0.0
      %4145 = vmatmul.mubr.f32.gmra.mrb[0].mxu0 %v4044
      %v4146 = vpop.f32.mrb[0].mxu0
      %v4147 = vadd.f32 0.0, %v4146
      %v4148 = vpop.f32.mrb[0].mxu0
      %4149 = vmatprep.mubr.f32.mxu0 0.0
      %4150 = vmatmul.mubr.f32.gmra.mrb[0].mxu0 %v4045
      %v4151 = vpop.f32.mrb[0].mxu0
      %v4152 = vadd.f32 0.0, %v4151
      %v4153 = vpop.f32.mrb[0].mxu0
      %4154 = vmatprep.mubr.f32.mxu0 0.0
      %4155 = vmatmul.mubr.f32.gmra.mrb[0].mxu0 %v4046
      %v4156 = vpop.f32.mrb[0].mxu0
      %v4157 = vadd.f32 0.0, %v4156
      %v4158 = vpop.f32.mrb[0].mxu0
      %4159 = vmatprep.mubr.f32.mxu0 0.0
      %4160 = vmatmul.mubr.f32.gmra.mrb[0].mxu0 %v4047
      %v4161 = vpop.f32.mrb[0].mxu0
      %v4162 = vadd.f32 0.0, %v4161
      %v4163 = vpop.f32.mrb[0].mxu0
      %4164 = vmatprep.mubr.f32.mxu0 0.0
      %4165 = vmatmul.mubr.f32.gmra.mrb[0].mxu0 %v4048
      %v4166 = vpop.f32.mrb[0].mxu0
      %v4167 = vadd.f32 0.0, %v4166
      %v4168 = vpop.f32.mrb[0].mxu0
      %4169 = vdwg.mxu0
      %v4170 = vld [vmem:[%s17] sm:$0x1]
      %v4172 = vlaneseq
      %v4173 = vshrl.u32 %v4172, 7
      %v4174 = vsub.s32 0, %v4173
      %v4175 = vrot.slane %v4170, %v4174
      %v4177 = vmul.f32 %v4132, %v4175
      %v4178 = vmul.f32 %v4137, %v4175
      %v4179 = vmul.f32 %v4142, %v4175
      %v4180 = vmul.f32 %v4147, %v4175
      %v4181 = vmul.f32 %v4152, %v4175
      %v4182 = vmul.f32 %v4157, %v4175
      %v4183 = vmul.f32 %v4162, %v4175
      %v4184 = vmul.f32 %v4167, %v4175
      %v4185 = vld [vmem:[%s18] sm:$0x1]
      %v4187 = vlaneseq
      %v4188 = vshrl.u32 %v4187, 7
      %v4189 = vsub.s32 0, %v4188
      %v4190 = vrot.slane %v4185, %v4189
      %v4192 = vadd.f32 %v4177, %v4190
      %v4193 = vadd.f32 %v4178, %v4190
      %v4194 = vadd.f32 %v4179, %v4190
      %v4195 = vadd.f32 %v4180, %v4190
      %v4196 = vadd.f32 %v4181, %v4190
      %v4197 = vadd.f32 %v4182, %v4190
      %v4198 = vadd.f32 %v4183, %v4190
      %v4199 = vadd.f32 %v4184, %v4190
      %v4208 = vadd.f32 %v4192, %v3331
      %v4209 = vadd.f32 %v4193, %v3333
      %v4210 = vadd.f32 %v4194, %v3335
      %v4211 = vadd.f32 %v4195, %v3337
      %v4212 = vadd.f32 %v4196, %v3339
      %v4213 = vadd.f32 %v4197, %v3341
      %v4214 = vadd.f32 %v4198, %v3343
      %v4215 = vadd.f32 %v4199, %v3345
      %4216 = vst.msk [vmem:[%s602] sm:$0x1] %vm637, %v3306
      %4217 = vst.msk [vmem:[%s602 + $0x1] sm:$0xff] %vm612, %v4208
      %4218 = vst.msk [vmem:[%s602 + $0x9] sm:$0xff] %vm612, %v4209
      %4219 = vst.msk [vmem:[%s602 + $0x11] sm:$0xff] %vm612, %v4210
      %4220 = vst.msk [vmem:[%s602 + $0x19] sm:$0xff] %vm612, %v4211
      %4221 = vst.msk [vmem:[%s602 + $0x21] sm:$0xff] %vm612, %v4212
      %4222 = vst.msk [vmem:[%s602 + $0x29] sm:$0xff] %vm612, %v4213
      %4223 = vst.msk [vmem:[%s602 + $0x31] sm:$0xff] %vm612, %v4214
      %4224 = vst.msk [vmem:[%s602 + $0x39] sm:$0xff] %vm612, %v4215
      %p4225 = scmp.lt.s32.totalorder %s30, 1
      %s4226 = scalar_select %p4225, %s30, 1
      %s4227 = smul.addr %s4226, 9
      %s4228 = smul.addr %s4227, 8
      %s4229 = scalar_lea.vmem %s19, %s4228
      // Predicated region
      $region97: #{block_with_cnn.1} parent=95 // pred_check
        %p4230 = pneg %p452
      $region98: #{block_with_cnn.1} parent=95 // pred_check_branch
        %4232 = sbr.rel (%p4230) target = $region100
      $region99: #{block_with_cnn.1} parent=95 // pred_region
        _
      $region100: #{block_with_cnn.1} parent=95 // pred_fallthru
        _
    $region96: #{block_with_cnn.1} parent=5 // pred_fallthru
      _
    %p4233 = scmp.le.s32.totalorder 2, %s25
    // Predicated region
    $region101: #{block_with_cnn.1} parent=5 // pred_check
      %p4234 = pneg %p4233
    $region102: #{block_with_cnn.1} parent=5 // pred_check_branch
      %4236 = sbr.rel (%p4234) target = $region104
    $region103: #{block_with_cnn.1} parent=5 // pred_region
      %s4237 = ssub.s32 %s25, 2
      // Predicated region
      $region105: #{block_with_cnn.1} parent=103 // pred_check
        %p4238 = pneg %p458
      $region106: #{block_with_cnn.1} parent=103 // pred_check_branch
        %4240 = sbr.rel (%p4238) target = $region108
      $region107: #{block_with_cnn.1} parent=103 // pred_region
        %p4241 = scmp.lt.s32.totalorder %s31, 1
        %s4242 = scalar_select %p4241, %s31, 1
        %s4243 = smul.addr %s4242, 9
        %s4244 = smul.addr %s4243, 8
        %s4245 = scalar_lea.vmem %s19, %s4244
      $region108: #{block_with_cnn.1} parent=103 // pred_fallthru
        _
    $region104: #{block_with_cnn.1} parent=5 // pred_fallthru
      _
  $region6: #{block_with_cnn.1} parent=0 // loop_footer
    %s29 = sadd.s32 1, %s25
  $region7: #{block_with_cnn.1} parent=0 // loop_footer_branch
    %24 = sbr.rel target = $region3
  $region8: #{block_with_cnn.1} parent=0 // loop_exit
    _

</llo_original>
